<compile_context>
chip_gen: v7x
topology: tpu7x:2x2x1
jax: 0.10.0
libtpu: 0.0.40
codegen_flags: <defaults>
</compile_context>

<pallas_src>
import functools

import jax
import jax.numpy as jnp
from jax.experimental import pallas as pl
from jax.experimental.pallas import tpu as pltpu


def _layernorm(x, gamma, beta, eps=1e-5):
    mean = jnp.mean(x, axis=-1, keepdims=True)
    var = jnp.mean((x - mean) ** 2, axis=-1, keepdims=True)
    return (x - mean) * jax.lax.rsqrt(var + eps) * gamma + beta


def cross_attn_kernel(q_ref, k_ref, v_ref,
                      g_ref, beta_ref,
                      wq_ref, wk_ref, wv_ref,
                      bq_ref, bk_ref, bv_ref,
                      wo_ref, bo_ref,
                      o_ref, *, num_heads, matmul_dtype):
    Bt, Lq, E = q_ref.shape
    _, Lk, _ = k_ref.shape
    hd = E // num_heads

    def cast(x):
        return x if matmul_dtype is None else x.astype(matmul_dtype)

    g = g_ref[...]        # (1, E)
    beta = beta_ref[...]  # (1, E)

    # Flatten (Bt, L, E) -> (Bt*L, E) so LN + projections run on MXU-dense tiles.
    q2 = q_ref[...].reshape(Bt * Lq, E)
    k2 = k_ref[...].reshape(Bt * Lk, E)
    v2 = v_ref[...].reshape(Bt * Lk, E)

    qn = _layernorm(q2, g, beta)
    kn = _layernorm(k2, g, beta)
    vn = _layernorm(v2, g, beta)

    # in_proj (weights already transposed wrapper-side: x @ w).
    qp = jnp.dot(cast(qn), cast(wq_ref[...]), preferred_element_type=jnp.float32) + bq_ref[...]
    kp = jnp.dot(cast(kn), cast(wk_ref[...]), preferred_element_type=jnp.float32) + bk_ref[...]
    vp = jnp.dot(cast(vn), cast(wv_ref[...]), preferred_element_type=jnp.float32) + bv_ref[...]

    # Split the leading dim back out for per-batch attention.
    q3 = qp.reshape(Bt, Lq, E)
    k3 = kp.reshape(Bt, Lk, E)
    v3 = vp.reshape(Bt, Lk, E)

    wo = wo_ref[...]  # (E, E), already out_w.T
    scale = 1.0 / (hd ** 0.5)

    # Per-head attention (static loop, small H), fused directly into the output
    # projection -> no concatenate, single (Bt*Lq, E) f32 accumulator.
    acc = jnp.zeros((Bt * Lq, E), jnp.float32)
    for h in range(num_heads):
        sl = slice(h * hd, (h + 1) * hd)
        qh = q3[:, :, sl] * scale          # (Bt, Lq, hd)
        kh = k3[:, :, sl]                  # (Bt, Lk, hd)
        vh = v3[:, :, sl]                  # (Bt, Lk, hd)
        s = jnp.einsum("bqd,bkd->bqk", cast(qh), cast(kh),
                       preferred_element_type=jnp.float32)          # (Bt, Lq, Lk)
        s = s - jnp.max(s, axis=-1, keepdims=True)
        p = jnp.exp(s)
        p = p * pl.reciprocal(jnp.sum(p, axis=-1, keepdims=True), approx=True)
        ctx = jnp.einsum("bqk,bkd->bqd", cast(p), cast(vh),
                         preferred_element_type=jnp.float32)        # (Bt, Lq, hd)
        acc = acc + jnp.dot(cast(ctx.reshape(Bt * Lq, hd)), cast(wo[sl, :]),
                            preferred_element_type=jnp.float32)     # (Bt*Lq, E)

    o = acc + bo_ref[...]
    o_ref[...] = o.reshape(Bt, Lq, E).astype(o_ref.dtype)


def cross_attention_block(q, k, v, params, *, num_heads, batch_tile=None,
                          matmul_dtype=None):
    B, Lq, E = q.shape
    _, Lk, _ = k.shape
    hd = E // num_heads
    assert hd * num_heads == E

    # --- wrapper-side weight layout plumbing (one-time, not per grid step) ---
    in_w = params["in_w"]          # (3E, E)
    in_b = params["in_b"]          # (3E,)
    wq_t = jnp.transpose(in_w[0:E, :])
    wk_t = jnp.transpose(in_w[E:2 * E, :])
    wv_t = jnp.transpose(in_w[2 * E:3 * E, :])
    bq = in_b[0:E].reshape(1, E)
    bk = in_b[E:2 * E].reshape(1, E)
    bv = in_b[2 * E:3 * E].reshape(1, E)
    wo_t = jnp.transpose(params["out_w"])   # (E, E)
    bo = params["out_b"].reshape(1, E)
    g = params["ln_g"].reshape(1, E)
    be = params["ln_b"].reshape(1, E)

    # --- batch tiling: merge batches per grid step so Bt*Lq feeds the MXU M dim ---
    if batch_tile is None:
        batch_tile = max(1, min(B, 256 // max(Lq, 1)))
    Bt = int(batch_tile)
    num_steps = pl.cdiv(B, Bt)
    Bp = num_steps * Bt
    if Bp != B:
        pad = ((0, Bp - B), (0, 0), (0, 0))
        q = jnp.pad(q, pad)
        k = jnp.pad(k, pad)
        v = jnp.pad(v, pad)

    kernel = functools.partial(cross_attn_kernel, num_heads=num_heads,
                               matmul_dtype=matmul_dtype)

    flops = 2 * Bp * (Lq * E * E + 2 * Lk * E * E
                      + 2 * num_heads * Lq * Lk * hd + Lq * E * E)
    transcendentals = Bp * num_heads * Lq * (Lk + 1)
    bytes_accessed = 4 * (Bp * (2 * Lq * E + 2 * Lk * E) + 4 * E * E + 8 * E)

    def full(shape):
        return pl.BlockSpec(shape, lambda i, _s=shape: (0,) * len(_s))

    out = pl.pallas_call(
        kernel,
        out_shape=jax.ShapeDtypeStruct((Bp, Lq, E), q.dtype),
        grid_spec=pltpu.PrefetchScalarGridSpec(
            num_scalar_prefetch=0,
            grid=(num_steps,),
            in_specs=[
                pl.BlockSpec((Bt, Lq, E), lambda i: (i, 0, 0)),   # q
                pl.BlockSpec((Bt, Lk, E), lambda i: (i, 0, 0)),   # k
                pl.BlockSpec((Bt, Lk, E), lambda i: (i, 0, 0)),   # v
                full((1, E)),        # ln gamma
                full((1, E)),        # ln beta
                full((E, E)),        # wq_t
                full((E, E)),        # wk_t
                full((E, E)),        # wv_t
                full((1, E)),        # bq
                full((1, E)),        # bk
                full((1, E)),        # bv
                full((E, E)),        # out_proj weight (transposed)
                full((1, E)),        # out_proj bias
            ],
            out_specs=pl.BlockSpec((Bt, Lq, E), lambda i: (i, 0, 0)),
        ),
        compiler_params=pltpu.CompilerParams(
            dimension_semantics=("parallel",),     # batch axis independent -> v7x 2 TCs
            vmem_limit_bytes=32 * 1024 * 1024,
        ),
        cost_estimate=pl.CostEstimate(flops=int(flops),
                                      transcendentals=int(transcendentals),
                                      bytes_accessed=int(bytes_accessed)),
    )(q, k, v, g, be, wq_t, wk_t, wv_t, bq, bk, bv, wo_t, bo)

    return out[:B] if Bp != B else out


def reference(q, k, v, params, *, num_heads):
    """Pure-JAX reference matching PyTorch CrossAttentionBlock (eval mode)."""
    B, Lq, E = q.shape
    hd = E // num_heads

    def ln(x):
        mean = jnp.mean(x, axis=-1, keepdims=True)
        var = jnp.mean((x - mean) ** 2, axis=-1, keepdims=True)
        return (x - mean) * jax.lax.rsqrt(var + 1e-5) * params["ln_g"] + params["ln_b"]

    qn, kn, vn = ln(q), ln(k), ln(v)
    in_w, in_b = params["in_w"], params["in_b"]
    qp = qn @ in_w[0:E].T + in_b[0:E]
    kp = kn @ in_w[E:2 * E].T + in_b[E:2 * E]
    vp = vn @ in_w[2 * E:].T + in_b[2 * E:]
    split = lambda x: x.reshape(x.shape[0], x.shape[1], num_heads, hd).transpose(0, 2, 1, 3)
    qh, kh, vh = split(qp), split(kp), split(vp)
    s = jnp.einsum("bhqd,bhkd->bhqk", qh / (hd ** 0.5), kh)
    p = jax.nn.softmax(s, axis=-1)
    o = jnp.einsum("bhqk,bhkd->bhqd", p, vh).transpose(0, 2, 1, 3).reshape(B, Lq, E)
    return o @ params["out_w"].T + params["out_b"]


if __name__ == "__main__":
    B, Lq, Lk, E, H = 6, 8, 16, 32, 4

    key = jax.random.PRNGKey(0)
    ks = jax.random.split(key, 9)
    q = jax.random.normal(ks[0], (B, Lq, E), jnp.float32)
    k = jax.random.normal(ks[1], (B, Lk, E), jnp.float32)
    v = jax.random.normal(ks[2], (B, Lk, E), jnp.float32)

    params = {
        "ln_g": 1.0 + 0.1 * jax.random.normal(ks[3], (E,), jnp.float32),
        "ln_b": 0.1 * jax.random.normal(ks[4], (E,), jnp.float32),
        "in_w": jax.random.normal(ks[5], (3 * E, E), jnp.float32) / jnp.sqrt(E),
        "in_b": 0.05 * jax.random.normal(ks[6], (3 * E,), jnp.float32),
        "out_w": jax.random.normal(ks[7], (E, E), jnp.float32) / jnp.sqrt(E),
        "out_b": 0.05 * jax.random.normal(ks[8], (E,), jnp.float32),
    }

    # batch_tile=4 exercises both batch-merging (Bt>1) and the multi-step grid +
    # batch-padding path (B=6 -> padded to 8, two grid steps of 4).
    out = cross_attention_block(q, k, v, params, num_heads=H, batch_tile=4)
    out = jax.block_until_ready(out)

    ref = reference(q, k, v, params, num_heads=H)
    assert out.shape == (B, Lq, E)
    # Tolerance loosened vs. a pure-f32 check because the softmax denominator uses the
    # EUP approximate reciprocal (pl.reciprocal(approx=True)); values are O(1).
    err = float(jnp.max(jnp.abs(out - ref)))
    assert jnp.allclose(out, ref, atol=1e-2, rtol=1e-2), err

    print("KERNEL_OK")
</pallas_src>

<mosaic_0001>
module attributes {stable_mosaic.version = 11 : i64} {
  func.func @cross_attn_kernel(%arg0: i32, %arg1: memref<4x8x32xf32, #tpu.memory_space<vmem>>, %arg2: memref<4x16x32xf32, #tpu.memory_space<vmem>>, %arg3: memref<4x16x32xf32, #tpu.memory_space<vmem>>, %arg4: memref<1x32xf32, #tpu.memory_space<vmem>>, %arg5: memref<1x32xf32, #tpu.memory_space<vmem>>, %arg6: memref<32x32xf32, #tpu.memory_space<vmem>>, %arg7: memref<32x32xf32, #tpu.memory_space<vmem>>, %arg8: memref<32x32xf32, #tpu.memory_space<vmem>>, %arg9: memref<1x32xf32, #tpu.memory_space<vmem>>, %arg10: memref<1x32xf32, #tpu.memory_space<vmem>>, %arg11: memref<1x32xf32, #tpu.memory_space<vmem>>, %arg12: memref<32x32xf32, #tpu.memory_space<vmem>>, %arg13: memref<1x32xf32, #tpu.memory_space<vmem>>, %arg14: memref<4x8x32xf32, #tpu.memory_space<vmem>>) attributes {dimension_semantics = [#tpu.dimension_semantics<parallel>], iteration_bounds = array<i64: 2>, scalar_prefetch = 0 : i64, scratch_operands = 0 : i64, tpu.core_type = #tpu.core_type<tc>, window_params = [{transform_indices = @transform_0, window_bounds = array<i64: 4, 8, 32>}, {transform_indices = @transform_1, window_bounds = array<i64: 4, 16, 32>}, {transform_indices = @transform_2, window_bounds = array<i64: 4, 16, 32>}, {pipeline_mode = #tpu.pipeline_mode<synchronous>, transform_indices = @transform_3, window_bounds = array<i64: 1, 32>}, {pipeline_mode = #tpu.pipeline_mode<synchronous>, transform_indices = @transform_4, window_bounds = array<i64: 1, 32>}, {pipeline_mode = #tpu.pipeline_mode<synchronous>, transform_indices = @transform_5, window_bounds = array<i64: 32, 32>}, {pipeline_mode = #tpu.pipeline_mode<synchronous>, transform_indices = @transform_6, window_bounds = array<i64: 32, 32>}, {pipeline_mode = #tpu.pipeline_mode<synchronous>, transform_indices = @transform_7, window_bounds = array<i64: 32, 32>}, {pipeline_mode = #tpu.pipeline_mode<synchronous>, transform_indices = @transform_8, window_bounds = array<i64: 1, 32>}, {pipeline_mode = #tpu.pipeline_mode<synchronous>, transform_indices = @transform_9, window_bounds = array<i64: 1, 32>}, {pipeline_mode = #tpu.pipeline_mode<synchronous>, transform_indices = @transform_10, window_bounds = array<i64: 1, 32>}, {pipeline_mode = #tpu.pipeline_mode<synchronous>, transform_indices = @transform_11, window_bounds = array<i64: 32, 32>}, {pipeline_mode = #tpu.pipeline_mode<synchronous>, transform_indices = @transform_12, window_bounds = array<i64: 1, 32>}, {transform_indices = @transform_13, window_bounds = array<i64: 4, 8, 32>}]} {
    %c0 = arith.constant 0 : index
    %c0_0 = arith.constant 0 : index
    %0 = vector.load %arg4[%c0, %c0_0] : memref<1x32xf32, #tpu.memory_space<vmem>>, vector<1x32xf32>
    %c0_1 = arith.constant 0 : index
    %c0_2 = arith.constant 0 : index
    %1 = vector.load %arg5[%c0_1, %c0_2] : memref<1x32xf32, #tpu.memory_space<vmem>>, vector<1x32xf32>
    %c0_3 = arith.constant 0 : index
    %c0_4 = arith.constant 0 : index
    %c0_5 = arith.constant 0 : index
    %2 = vector.load %arg1[%c0_3, %c0_4, %c0_5] : memref<4x8x32xf32, #tpu.memory_space<vmem>>, vector<4x8x32xf32>
    %3 = vector.shape_cast %2 : vector<4x8x32xf32> to vector<32x32xf32>
    %c0_6 = arith.constant 0 : index
    %c0_7 = arith.constant 0 : index
    %c0_8 = arith.constant 0 : index
    %4 = vector.load %arg2[%c0_6, %c0_7, %c0_8] : memref<4x16x32xf32, #tpu.memory_space<vmem>>, vector<4x16x32xf32>
    %5 = vector.shape_cast %4 : vector<4x16x32xf32> to vector<64x32xf32>
    %c0_9 = arith.constant 0 : index
    %c0_10 = arith.constant 0 : index
    %c0_11 = arith.constant 0 : index
    %6 = vector.load %arg3[%c0_9, %c0_10, %c0_11] : memref<4x16x32xf32, #tpu.memory_space<vmem>>, vector<4x16x32xf32>
    %7 = vector.shape_cast %6 : vector<4x16x32xf32> to vector<64x32xf32>
    %cst = arith.constant dense<0.000000e+00> : vector<32xf32>
    %8 = vector.multi_reduction <add>, %3, %cst [1] : vector<32x32xf32> to vector<32xf32>
    %9 = vector.shape_cast %8 : vector<32xf32> to vector<32x1xf32>
    %cst_12 = arith.constant 3.200000e+01 : f32
    %10 = vector.broadcast %cst_12 : f32 to vector<32x1xf32>
    %11 = arith.divf %9, %10 : vector<32x1xf32>
    %12 = vector.broadcast %11 : vector<32x1xf32> to vector<32x32xf32>
    %13 = arith.subf %3, %12 : vector<32x32xf32>
    %14 = arith.mulf %13, %13 : vector<32x32xf32>
    %cst_13 = arith.constant dense<0.000000e+00> : vector<32xf32>
    %15 = vector.multi_reduction <add>, %14, %cst_13 [1] : vector<32x32xf32> to vector<32xf32>
    %16 = vector.shape_cast %15 : vector<32xf32> to vector<32x1xf32>
    %cst_14 = arith.constant 3.200000e+01 : f32
    %17 = vector.broadcast %cst_14 : f32 to vector<32x1xf32>
    %18 = arith.divf %16, %17 : vector<32x1xf32>
    %19 = vector.broadcast %11 : vector<32x1xf32> to vector<32x32xf32>
    %20 = arith.subf %3, %19 : vector<32x32xf32>
    %cst_15 = arith.constant 9.99999974E-6 : f32
    %21 = vector.broadcast %cst_15 : f32 to vector<32x1xf32>
    %22 = arith.addf %18, %21 : vector<32x1xf32>
    %23 = math.rsqrt %22 : vector<32x1xf32>
    %24 = vector.broadcast %23 : vector<32x1xf32> to vector<32x32xf32>
    %25 = arith.mulf %20, %24 : vector<32x32xf32>
    %26 = vector.broadcast %0 : vector<1x32xf32> to vector<32x32xf32>
    %27 = arith.mulf %25, %26 : vector<32x32xf32>
    %28 = vector.broadcast %1 : vector<1x32xf32> to vector<32x32xf32>
    %29 = arith.addf %27, %28 : vector<32x32xf32>
    %cst_16 = arith.constant dense<0.000000e+00> : vector<64xf32>
    %30 = vector.multi_reduction <add>, %5, %cst_16 [1] : vector<64x32xf32> to vector<64xf32>
    %31 = vector.shape_cast %30 : vector<64xf32> to vector<64x1xf32>
    %cst_17 = arith.constant 3.200000e+01 : f32
    %32 = vector.broadcast %cst_17 : f32 to vector<64x1xf32>
    %33 = arith.divf %31, %32 : vector<64x1xf32>
    %34 = vector.broadcast %33 : vector<64x1xf32> to vector<64x32xf32>
    %35 = arith.subf %5, %34 : vector<64x32xf32>
    %36 = arith.mulf %35, %35 : vector<64x32xf32>
    %cst_18 = arith.constant dense<0.000000e+00> : vector<64xf32>
    %37 = vector.multi_reduction <add>, %36, %cst_18 [1] : vector<64x32xf32> to vector<64xf32>
    %38 = vector.shape_cast %37 : vector<64xf32> to vector<64x1xf32>
    %cst_19 = arith.constant 3.200000e+01 : f32
    %39 = vector.broadcast %cst_19 : f32 to vector<64x1xf32>
    %40 = arith.divf %38, %39 : vector<64x1xf32>
    %41 = vector.broadcast %33 : vector<64x1xf32> to vector<64x32xf32>
    %42 = arith.subf %5, %41 : vector<64x32xf32>
    %cst_20 = arith.constant 9.99999974E-6 : f32
    %43 = vector.broadcast %cst_20 : f32 to vector<64x1xf32>
    %44 = arith.addf %40, %43 : vector<64x1xf32>
    %45 = math.rsqrt %44 : vector<64x1xf32>
    %46 = vector.broadcast %45 : vector<64x1xf32> to vector<64x32xf32>
    %47 = arith.mulf %42, %46 : vector<64x32xf32>
    %48 = vector.broadcast %0 : vector<1x32xf32> to vector<64x32xf32>
    %49 = arith.mulf %47, %48 : vector<64x32xf32>
    %50 = vector.broadcast %1 : vector<1x32xf32> to vector<64x32xf32>
    %51 = arith.addf %49, %50 : vector<64x32xf32>
    %cst_21 = arith.constant dense<0.000000e+00> : vector<64xf32>
    %52 = vector.multi_reduction <add>, %7, %cst_21 [1] : vector<64x32xf32> to vector<64xf32>
    %53 = vector.shape_cast %52 : vector<64xf32> to vector<64x1xf32>
    %cst_22 = arith.constant 3.200000e+01 : f32
    %54 = vector.broadcast %cst_22 : f32 to vector<64x1xf32>
    %55 = arith.divf %53, %54 : vector<64x1xf32>
    %56 = vector.broadcast %55 : vector<64x1xf32> to vector<64x32xf32>
    %57 = arith.subf %7, %56 : vector<64x32xf32>
    %58 = arith.mulf %57, %57 : vector<64x32xf32>
    %cst_23 = arith.constant dense<0.000000e+00> : vector<64xf32>
    %59 = vector.multi_reduction <add>, %58, %cst_23 [1] : vector<64x32xf32> to vector<64xf32>
    %60 = vector.shape_cast %59 : vector<64xf32> to vector<64x1xf32>
    %cst_24 = arith.constant 3.200000e+01 : f32
    %61 = vector.broadcast %cst_24 : f32 to vector<64x1xf32>
    %62 = arith.divf %60, %61 : vector<64x1xf32>
    %63 = vector.broadcast %55 : vector<64x1xf32> to vector<64x32xf32>
    %64 = arith.subf %7, %63 : vector<64x32xf32>
    %cst_25 = arith.constant 9.99999974E-6 : f32
    %65 = vector.broadcast %cst_25 : f32 to vector<64x1xf32>
    %66 = arith.addf %62, %65 : vector<64x1xf32>
    %67 = math.rsqrt %66 : vector<64x1xf32>
    %68 = vector.broadcast %67 : vector<64x1xf32> to vector<64x32xf32>
    %69 = arith.mulf %64, %68 : vector<64x32xf32>
    %70 = vector.broadcast %0 : vector<1x32xf32> to vector<64x32xf32>
    %71 = arith.mulf %69, %70 : vector<64x32xf32>
    %72 = vector.broadcast %1 : vector<1x32xf32> to vector<64x32xf32>
    %73 = arith.addf %71, %72 : vector<64x32xf32>
    %c0_26 = arith.constant 0 : index
    %c0_27 = arith.constant 0 : index
    %74 = vector.load %arg6[%c0_26, %c0_27] : memref<32x32xf32, #tpu.memory_space<vmem>>, vector<32x32xf32>
    %cst_28 = arith.constant dense<0.000000e+00> : vector<32x32xf32>
    %75 = tpu.matmul %29, %74, %cst_28 {dimension_numbers = #tpu.dot_dimension_numbers<[1], [0], [0], [1], [0, 0, 1, 1], [], []>} : vector<32x32xf32>, vector<32x32xf32>, vector<32x32xf32> -> vector<32x32xf32>
    %c0_29 = arith.constant 0 : index
    %c0_30 = arith.constant 0 : index
    %76 = vector.load %arg9[%c0_29, %c0_30] : memref<1x32xf32, #tpu.memory_space<vmem>>, vector<1x32xf32>
    %77 = vector.broadcast %76 : vector<1x32xf32> to vector<32x32xf32>
    %78 = arith.addf %75, %77 : vector<32x32xf32>
    %c0_31 = arith.constant 0 : index
    %c0_32 = arith.constant 0 : index
    %79 = vector.load %arg7[%c0_31, %c0_32] : memref<32x32xf32, #tpu.memory_space<vmem>>, vector<32x32xf32>
    %cst_33 = arith.constant dense<0.000000e+00> : vector<64x32xf32>
    %80 = tpu.matmul %51, %79, %cst_33 {dimension_numbers = #tpu.dot_dimension_numbers<[1], [0], [0], [1], [0, 0, 1, 1], [], []>} : vector<64x32xf32>, vector<32x32xf32>, vector<64x32xf32> -> vector<64x32xf32>
    %c0_34 = arith.constant 0 : index
    %c0_35 = arith.constant 0 : index
    %81 = vector.load %arg10[%c0_34, %c0_35] : memref<1x32xf32, #tpu.memory_space<vmem>>, vector<1x32xf32>
    %82 = vector.broadcast %81 : vector<1x32xf32> to vector<64x32xf32>
    %83 = arith.addf %80, %82 : vector<64x32xf32>
    %c0_36 = arith.constant 0 : index
    %c0_37 = arith.constant 0 : index
    %84 = vector.load %arg8[%c0_36, %c0_37] : memref<32x32xf32, #tpu.memory_space<vmem>>, vector<32x32xf32>
    %cst_38 = arith.constant dense<0.000000e+00> : vector<64x32xf32>
    %85 = tpu.matmul %73, %84, %cst_38 {dimension_numbers = #tpu.dot_dimension_numbers<[1], [0], [0], [1], [0, 0, 1, 1], [], []>} : vector<64x32xf32>, vector<32x32xf32>, vector<64x32xf32> -> vector<64x32xf32>
    %c0_39 = arith.constant 0 : index
    %c0_40 = arith.constant 0 : index
    %86 = vector.load %arg11[%c0_39, %c0_40] : memref<1x32xf32, #tpu.memory_space<vmem>>, vector<1x32xf32>
    %87 = vector.broadcast %86 : vector<1x32xf32> to vector<64x32xf32>
    %88 = arith.addf %85, %87 : vector<64x32xf32>
    %89 = vector.shape_cast %78 : vector<32x32xf32> to vector<4x8x32xf32>
    %90 = vector.shape_cast %83 : vector<64x32xf32> to vector<4x16x32xf32>
    %91 = vector.shape_cast %88 : vector<64x32xf32> to vector<4x16x32xf32>
    %c0_41 = arith.constant 0 : index
    %c0_42 = arith.constant 0 : index
    %92 = vector.load %arg12[%c0_41, %c0_42] : memref<32x32xf32, #tpu.memory_space<vmem>>, vector<32x32xf32>
    %cst_43 = arith.constant 0.000000e+00 : f32
    %93 = vector.broadcast %cst_43 : f32 to vector<32x32xf32>
    %94 = vector.extract_strided_slice %89 {offsets = [0, 0, 0], sizes = [4, 8, 8], strides = [1, 1, 1]} : vector<4x8x32xf32> to vector<4x8x8xf32>
    %cst_44 = arith.constant 0.353553385 : f32
    %95 = vector.broadcast %cst_44 : f32 to vector<4x8x8xf32>
    %96 = arith.mulf %94, %95 : vector<4x8x8xf32>
    %97 = vector.extract_strided_slice %90 {offsets = [0, 0, 0], sizes = [4, 16, 8], strides = [1, 1, 1]} : vector<4x16x32xf32> to vector<4x16x8xf32>
    %98 = vector.extract_strided_slice %91 {offsets = [0, 0, 0], sizes = [4, 16, 8], strides = [1, 1, 1]} : vector<4x16x32xf32> to vector<4x16x8xf32>
    "tpu.trace_start"() <{level = 10 : i32, message = "bqd,bkd->bqk"}> : () -> ()
    %cst_45 = arith.constant dense<0.000000e+00> : vector<4x8x16xf32>
    %99 = tpu.matmul %96, %97, %cst_45 {dimension_numbers = #tpu.dot_dimension_numbers<[2], [2], [1], [1], [0, 0, 0, 1, 1, 1], [0], [0]>} : vector<4x8x8xf32>, vector<4x16x8xf32>, vector<4x8x16xf32> -> vector<4x8x16xf32>
    "tpu.trace_stop"() : () -> ()
    %cst_46 = arith.constant dense<0xFF800000> : vector<4x8xf32>
    %100 = vector.multi_reduction <maximumf>, %99, %cst_46 [2] : vector<4x8x16xf32> to vector<4x8xf32>
    %101 = vector.shape_cast %100 : vector<4x8xf32> to vector<4x8x1xf32>
    %102 = vector.broadcast %101 : vector<4x8x1xf32> to vector<4x8x16xf32>
    %103 = arith.subf %99, %102 : vector<4x8x16xf32>
    %104 = math.exp %103 : vector<4x8x16xf32>
    %cst_47 = arith.constant dense<0.000000e+00> : vector<4x8xf32>
    %105 = vector.multi_reduction <add>, %104, %cst_47 [2] : vector<4x8x16xf32> to vector<4x8xf32>
    %106 = vector.shape_cast %105 : vector<4x8xf32> to vector<4x8x1xf32>
    %107 = tpu.reciprocal %106 {approx = true} : vector<4x8x1xf32> -> vector<4x8x1xf32>
    %108 = vector.broadcast %107 : vector<4x8x1xf32> to vector<4x8x16xf32>
    %109 = arith.mulf %104, %108 : vector<4x8x16xf32>
    "tpu.trace_start"() <{level = 10 : i32, message = "bqk,bkd->bqd"}> : () -> ()
    %cst_48 = arith.constant dense<0.000000e+00> : vector<4x8x8xf32>
    %110 = tpu.matmul %109, %98, %cst_48 {dimension_numbers = #tpu.dot_dimension_numbers<[2], [1], [1], [2], [0, 0, 0, 1, 1, 2], [0], [0]>} : vector<4x8x16xf32>, vector<4x16x8xf32>, vector<4x8x8xf32> -> vector<4x8x8xf32>
    "tpu.trace_stop"() : () -> ()
    %111 = vector.shape_cast %110 : vector<4x8x8xf32> to vector<32x8xf32>
    %112 = vector.extract_strided_slice %92 {offsets = [0, 0], sizes = [8, 32], strides = [1, 1]} : vector<32x32xf32> to vector<8x32xf32>
    %cst_49 = arith.constant dense<0.000000e+00> : vector<32x32xf32>
    %113 = tpu.matmul %111, %112, %cst_49 {dimension_numbers = #tpu.dot_dimension_numbers<[1], [0], [0], [1], [0, 0, 1, 1], [], []>} : vector<32x8xf32>, vector<8x32xf32>, vector<32x32xf32> -> vector<32x32xf32>
    %114 = arith.addf %93, %113 : vector<32x32xf32>
    %115 = vector.extract_strided_slice %89 {offsets = [0, 0, 8], sizes = [4, 8, 8], strides = [1, 1, 1]} : vector<4x8x32xf32> to vector<4x8x8xf32>
    %cst_50 = arith.constant 0.353553385 : f32
    %116 = vector.broadcast %cst_50 : f32 to vector<4x8x8xf32>
    %117 = arith.mulf %115, %116 : vector<4x8x8xf32>
    %118 = vector.extract_strided_slice %90 {offsets = [0, 0, 8], sizes = [4, 16, 8], strides = [1, 1, 1]} : vector<4x16x32xf32> to vector<4x16x8xf32>
    %119 = vector.extract_strided_slice %91 {offsets = [0, 0, 8], sizes = [4, 16, 8], strides = [1, 1, 1]} : vector<4x16x32xf32> to vector<4x16x8xf32>
    "tpu.trace_start"() <{level = 10 : i32, message = "bqd,bkd->bqk"}> : () -> ()
    %cst_51 = arith.constant dense<0.000000e+00> : vector<4x8x16xf32>
    %120 = tpu.matmul %117, %118, %cst_51 {dimension_numbers = #tpu.dot_dimension_numbers<[2], [2], [1], [1], [0, 0, 0, 1, 1, 1], [0], [0]>} : vector<4x8x8xf32>, vector<4x16x8xf32>, vector<4x8x16xf32> -> vector<4x8x16xf32>
    "tpu.trace_stop"() : () -> ()
    %cst_52 = arith.constant dense<0xFF800000> : vector<4x8xf32>
    %121 = vector.multi_reduction <maximumf>, %120, %cst_52 [2] : vector<4x8x16xf32> to vector<4x8xf32>
    %122 = vector.shape_cast %121 : vector<4x8xf32> to vector<4x8x1xf32>
    %123 = vector.broadcast %122 : vector<4x8x1xf32> to vector<4x8x16xf32>
    %124 = arith.subf %120, %123 : vector<4x8x16xf32>
    %125 = math.exp %124 : vector<4x8x16xf32>
    %cst_53 = arith.constant dense<0.000000e+00> : vector<4x8xf32>
    %126 = vector.multi_reduction <add>, %125, %cst_53 [2] : vector<4x8x16xf32> to vector<4x8xf32>
    %127 = vector.shape_cast %126 : vector<4x8xf32> to vector<4x8x1xf32>
    %128 = tpu.reciprocal %127 {approx = true} : vector<4x8x1xf32> -> vector<4x8x1xf32>
    %129 = vector.broadcast %128 : vector<4x8x1xf32> to vector<4x8x16xf32>
    %130 = arith.mulf %125, %129 : vector<4x8x16xf32>
    "tpu.trace_start"() <{level = 10 : i32, message = "bqk,bkd->bqd"}> : () -> ()
    %cst_54 = arith.constant dense<0.000000e+00> : vector<4x8x8xf32>
    %131 = tpu.matmul %130, %119, %cst_54 {dimension_numbers = #tpu.dot_dimension_numbers<[2], [1], [1], [2], [0, 0, 0, 1, 1, 2], [0], [0]>} : vector<4x8x16xf32>, vector<4x16x8xf32>, vector<4x8x8xf32> -> vector<4x8x8xf32>
    "tpu.trace_stop"() : () -> ()
    %132 = vector.shape_cast %131 : vector<4x8x8xf32> to vector<32x8xf32>
    %133 = vector.extract_strided_slice %92 {offsets = [8, 0], sizes = [8, 32], strides = [1, 1]} : vector<32x32xf32> to vector<8x32xf32>
    %cst_55 = arith.constant dense<0.000000e+00> : vector<32x32xf32>
    %134 = tpu.matmul %132, %133, %cst_55 {dimension_numbers = #tpu.dot_dimension_numbers<[1], [0], [0], [1], [0, 0, 1, 1], [], []>} : vector<32x8xf32>, vector<8x32xf32>, vector<32x32xf32> -> vector<32x32xf32>
    %135 = arith.addf %114, %134 : vector<32x32xf32>
    %136 = vector.extract_strided_slice %89 {offsets = [0, 0, 16], sizes = [4, 8, 8], strides = [1, 1, 1]} : vector<4x8x32xf32> to vector<4x8x8xf32>
    %cst_56 = arith.constant 0.353553385 : f32
    %137 = vector.broadcast %cst_56 : f32 to vector<4x8x8xf32>
    %138 = arith.mulf %136, %137 : vector<4x8x8xf32>
    %139 = vector.extract_strided_slice %90 {offsets = [0, 0, 16], sizes = [4, 16, 8], strides = [1, 1, 1]} : vector<4x16x32xf32> to vector<4x16x8xf32>
    %140 = vector.extract_strided_slice %91 {offsets = [0, 0, 16], sizes = [4, 16, 8], strides = [1, 1, 1]} : vector<4x16x32xf32> to vector<4x16x8xf32>
    "tpu.trace_start"() <{level = 10 : i32, message = "bqd,bkd->bqk"}> : () -> ()
    %cst_57 = arith.constant dense<0.000000e+00> : vector<4x8x16xf32>
    %141 = tpu.matmul %138, %139, %cst_57 {dimension_numbers = #tpu.dot_dimension_numbers<[2], [2], [1], [1], [0, 0, 0, 1, 1, 1], [0], [0]>} : vector<4x8x8xf32>, vector<4x16x8xf32>, vector<4x8x16xf32> -> vector<4x8x16xf32>
    "tpu.trace_stop"() : () -> ()
    %cst_58 = arith.constant dense<0xFF800000> : vector<4x8xf32>
    %142 = vector.multi_reduction <maximumf>, %141, %cst_58 [2] : vector<4x8x16xf32> to vector<4x8xf32>
    %143 = vector.shape_cast %142 : vector<4x8xf32> to vector<4x8x1xf32>
    %144 = vector.broadcast %143 : vector<4x8x1xf32> to vector<4x8x16xf32>
    %145 = arith.subf %141, %144 : vector<4x8x16xf32>
    %146 = math.exp %145 : vector<4x8x16xf32>
    %cst_59 = arith.constant dense<0.000000e+00> : vector<4x8xf32>
    %147 = vector.multi_reduction <add>, %146, %cst_59 [2] : vector<4x8x16xf32> to vector<4x8xf32>
    %148 = vector.shape_cast %147 : vector<4x8xf32> to vector<4x8x1xf32>
    %149 = tpu.reciprocal %148 {approx = true} : vector<4x8x1xf32> -> vector<4x8x1xf32>
    %150 = vector.broadcast %149 : vector<4x8x1xf32> to vector<4x8x16xf32>
    %151 = arith.mulf %146, %150 : vector<4x8x16xf32>
    "tpu.trace_start"() <{level = 10 : i32, message = "bqk,bkd->bqd"}> : () -> ()
    %cst_60 = arith.constant dense<0.000000e+00> : vector<4x8x8xf32>
    %152 = tpu.matmul %151, %140, %cst_60 {dimension_numbers = #tpu.dot_dimension_numbers<[2], [1], [1], [2], [0, 0, 0, 1, 1, 2], [0], [0]>} : vector<4x8x16xf32>, vector<4x16x8xf32>, vector<4x8x8xf32> -> vector<4x8x8xf32>
    "tpu.trace_stop"() : () -> ()
    %153 = vector.shape_cast %152 : vector<4x8x8xf32> to vector<32x8xf32>
    %154 = vector.extract_strided_slice %92 {offsets = [16, 0], sizes = [8, 32], strides = [1, 1]} : vector<32x32xf32> to vector<8x32xf32>
    %cst_61 = arith.constant dense<0.000000e+00> : vector<32x32xf32>
    %155 = tpu.matmul %153, %154, %cst_61 {dimension_numbers = #tpu.dot_dimension_numbers<[1], [0], [0], [1], [0, 0, 1, 1], [], []>} : vector<32x8xf32>, vector<8x32xf32>, vector<32x32xf32> -> vector<32x32xf32>
    %156 = arith.addf %135, %155 : vector<32x32xf32>
    %157 = vector.extract_strided_slice %89 {offsets = [0, 0, 24], sizes = [4, 8, 8], strides = [1, 1, 1]} : vector<4x8x32xf32> to vector<4x8x8xf32>
    %cst_62 = arith.constant 0.353553385 : f32
    %158 = vector.broadcast %cst_62 : f32 to vector<4x8x8xf32>
    %159 = arith.mulf %157, %158 : vector<4x8x8xf32>
    %160 = vector.extract_strided_slice %90 {offsets = [0, 0, 24], sizes = [4, 16, 8], strides = [1, 1, 1]} : vector<4x16x32xf32> to vector<4x16x8xf32>
    %161 = vector.extract_strided_slice %91 {offsets = [0, 0, 24], sizes = [4, 16, 8], strides = [1, 1, 1]} : vector<4x16x32xf32> to vector<4x16x8xf32>
    "tpu.trace_start"() <{level = 10 : i32, message = "bqd,bkd->bqk"}> : () -> ()
    %cst_63 = arith.constant dense<0.000000e+00> : vector<4x8x16xf32>
    %162 = tpu.matmul %159, %160, %cst_63 {dimension_numbers = #tpu.dot_dimension_numbers<[2], [2], [1], [1], [0, 0, 0, 1, 1, 1], [0], [0]>} : vector<4x8x8xf32>, vector<4x16x8xf32>, vector<4x8x16xf32> -> vector<4x8x16xf32>
    "tpu.trace_stop"() : () -> ()
    %cst_64 = arith.constant dense<0xFF800000> : vector<4x8xf32>
    %163 = vector.multi_reduction <maximumf>, %162, %cst_64 [2] : vector<4x8x16xf32> to vector<4x8xf32>
    %164 = vector.shape_cast %163 : vector<4x8xf32> to vector<4x8x1xf32>
    %165 = vector.broadcast %164 : vector<4x8x1xf32> to vector<4x8x16xf32>
    %166 = arith.subf %162, %165 : vector<4x8x16xf32>
    %167 = math.exp %166 : vector<4x8x16xf32>
    %cst_65 = arith.constant dense<0.000000e+00> : vector<4x8xf32>
    %168 = vector.multi_reduction <add>, %167, %cst_65 [2] : vector<4x8x16xf32> to vector<4x8xf32>
    %169 = vector.shape_cast %168 : vector<4x8xf32> to vector<4x8x1xf32>
    %170 = tpu.reciprocal %169 {approx = true} : vector<4x8x1xf32> -> vector<4x8x1xf32>
    %171 = vector.broadcast %170 : vector<4x8x1xf32> to vector<4x8x16xf32>
    %172 = arith.mulf %167, %171 : vector<4x8x16xf32>
    "tpu.trace_start"() <{level = 10 : i32, message = "bqk,bkd->bqd"}> : () -> ()
    %cst_66 = arith.constant dense<0.000000e+00> : vector<4x8x8xf32>
    %173 = tpu.matmul %172, %161, %cst_66 {dimension_numbers = #tpu.dot_dimension_numbers<[2], [1], [1], [2], [0, 0, 0, 1, 1, 2], [0], [0]>} : vector<4x8x16xf32>, vector<4x16x8xf32>, vector<4x8x8xf32> -> vector<4x8x8xf32>
    "tpu.trace_stop"() : () -> ()
    %174 = vector.shape_cast %173 : vector<4x8x8xf32> to vector<32x8xf32>
    %175 = vector.extract_strided_slice %92 {offsets = [24, 0], sizes = [8, 32], strides = [1, 1]} : vector<32x32xf32> to vector<8x32xf32>
    %cst_67 = arith.constant dense<0.000000e+00> : vector<32x32xf32>
    %176 = tpu.matmul %174, %175, %cst_67 {dimension_numbers = #tpu.dot_dimension_numbers<[1], [0], [0], [1], [0, 0, 1, 1], [], []>} : vector<32x8xf32>, vector<8x32xf32>, vector<32x32xf32> -> vector<32x32xf32>
    %177 = arith.addf %156, %176 : vector<32x32xf32>
    %c0_68 = arith.constant 0 : index
    %c0_69 = arith.constant 0 : index
    %178 = vector.load %arg13[%c0_68, %c0_69] : memref<1x32xf32, #tpu.memory_space<vmem>>, vector<1x32xf32>
    %179 = vector.broadcast %178 : vector<1x32xf32> to vector<32x32xf32>
    %180 = arith.addf %177, %179 : vector<32x32xf32>
    %181 = vector.shape_cast %180 : vector<32x32xf32> to vector<4x8x32xf32>
    %c0_70 = arith.constant 0 : index
    %c0_71 = arith.constant 0 : index
    %c0_72 = arith.constant 0 : index
    %182 = vector.load %arg14[%c0_70, %c0_71, %c0_72] : memref<4x8x32xf32, #tpu.memory_space<vmem>>, vector<4x8x32xf32>
    tpu.vector_store %arg14[%c0_70, %c0_71, %c0_72], %181 {strides = array<i32>} : memref<4x8x32xf32, #tpu.memory_space<vmem>>, vector<4x8x32xf32>,
    return
  }
  func.func @transform_0(%arg0: i32) -> (i32, i32, i32) {
    %c0_i32 = arith.constant 0 : i32
    %c0_i32_0 = arith.constant 0 : i32
    %c0_i32_1 = arith.constant 0 : i32
    return %arg0, %c0_i32, %c0_i32_0 : i32, i32, i32
  }
  func.func @transform_1(%arg0: i32) -> (i32, i32, i32) {
    %c0_i32 = arith.constant 0 : i32
    %c0_i32_0 = arith.constant 0 : i32
    %c0_i32_1 = arith.constant 0 : i32
    return %arg0, %c0_i32, %c0_i32_0 : i32, i32, i32
  }
  func.func @transform_2(%arg0: i32) -> (i32, i32, i32) {
    %c0_i32 = arith.constant 0 : i32
    %c0_i32_0 = arith.constant 0 : i32
    %c0_i32_1 = arith.constant 0 : i32
    return %arg0, %c0_i32, %c0_i32_0 : i32, i32, i32
  }
  func.func @transform_3(%arg0: i32) -> (i32, i32) {
    %c0_i32 = arith.constant 0 : i32
    %c0_i32_0 = arith.constant 0 : i32
    %c0_i32_1 = arith.constant 0 : i32
    return %c0_i32, %c0_i32_0 : i32, i32
  }
  func.func @transform_4(%arg0: i32) -> (i32, i32) {
    %c0_i32 = arith.constant 0 : i32
    %c0_i32_0 = arith.constant 0 : i32
    %c0_i32_1 = arith.constant 0 : i32
    return %c0_i32, %c0_i32_0 : i32, i32
  }
  func.func @transform_5(%arg0: i32) -> (i32, i32) {
    %c0_i32 = arith.constant 0 : i32
    %c0_i32_0 = arith.constant 0 : i32
    %c0_i32_1 = arith.constant 0 : i32
    return %c0_i32, %c0_i32_0 : i32, i32
  }
  func.func @transform_6(%arg0: i32) -> (i32, i32) {
    %c0_i32 = arith.constant 0 : i32
    %c0_i32_0 = arith.constant 0 : i32
    %c0_i32_1 = arith.constant 0 : i32
    return %c0_i32, %c0_i32_0 : i32, i32
  }
  func.func @transform_7(%arg0: i32) -> (i32, i32) {
    %c0_i32 = arith.constant 0 : i32
    %c0_i32_0 = arith.constant 0 : i32
    %c0_i32_1 = arith.constant 0 : i32
    return %c0_i32, %c0_i32_0 : i32, i32
  }
  func.func @transform_8(%arg0: i32) -> (i32, i32) {
    %c0_i32 = arith.constant 0 : i32
    %c0_i32_0 = arith.constant 0 : i32
    %c0_i32_1 = arith.constant 0 : i32
    return %c0_i32, %c0_i32_0 : i32, i32
  }
  func.func @transform_9(%arg0: i32) -> (i32, i32) {
    %c0_i32 = arith.constant 0 : i32
    %c0_i32_0 = arith.constant 0 : i32
    %c0_i32_1 = arith.constant 0 : i32
    return %c0_i32, %c0_i32_0 : i32, i32
  }
  func.func @transform_10(%arg0: i32) -> (i32, i32) {
    %c0_i32 = arith.constant 0 : i32
    %c0_i32_0 = arith.constant 0 : i32
    %c0_i32_1 = arith.constant 0 : i32
    return %c0_i32, %c0_i32_0 : i32, i32
  }
  func.func @transform_11(%arg0: i32) -> (i32, i32) {
    %c0_i32 = arith.constant 0 : i32
    %c0_i32_0 = arith.constant 0 : i32
    %c0_i32_1 = arith.constant 0 : i32
    return %c0_i32, %c0_i32_0 : i32, i32
  }
  func.func @transform_12(%arg0: i32) -> (i32, i32) {
    %c0_i32 = arith.constant 0 : i32
    %c0_i32_0 = arith.constant 0 : i32
    %c0_i32_1 = arith.constant 0 : i32
    return %c0_i32, %c0_i32_0 : i32, i32
  }
  func.func @transform_13(%arg0: i32) -> (i32, i32, i32) {
    %c0_i32 = arith.constant 0 : i32
    %c0_i32_0 = arith.constant 0 : i32
    %c0_i32_1 = arith.constant 0 : i32
    return %arg0, %c0_i32, %c0_i32_0 : i32, i32, i32
  }
}

</mosaic_0001>

<llo_original>
// kernel: tpu_custom_call.1
$region0: #{tpu_custom_call.1}
  #allocation0 [shape = 'u32[]', space=smem, size = 0x4, offset = 0x4, fixed_abs, tag = 'smem constant byte address 0x4 - core index']
  #allocation1 [shape = 'u32[144,128]{1,0:T(1,128)}', space=vmem, size = 0x12000, scoped, tag = 'internal scratch']
  %s0 = inlined_call_operand.hbm [shape: f32[8,8,32], index: 0, kind: input, shape index: {}]
  %s1 = inlined_call_operand.hbm [shape: f32[8,16,32], index: 1, kind: input, shape index: {}]
  %s2 = inlined_call_operand.hbm [shape: f32[8,16,32], index: 2, kind: input, shape index: {}]
  %s3 = inlined_call_operand.vmem [shape: f32[1,32], index: 3, kind: input, shape index: {}]
  %s4 = inlined_call_operand.vmem [shape: f32[1,32], index: 4, kind: input, shape index: {}]
  %s5 = inlined_call_operand.hbm [shape: f32[32,32], index: 5, kind: input, shape index: {}]
  %s6 = inlined_call_operand.hbm [shape: f32[32,32], index: 6, kind: input, shape index: {}]
  %s7 = inlined_call_operand.hbm [shape: f32[32,32], index: 7, kind: input, shape index: {}]
  %s8 = inlined_call_operand.vmem [shape: f32[1,32], index: 8, kind: input, shape index: {}]
  %s9 = inlined_call_operand.vmem [shape: f32[1,32], index: 9, kind: input, shape index: {}]
  %s10 = inlined_call_operand.vmem [shape: f32[1,32], index: 10, kind: input, shape index: {}]
  %s11 = inlined_call_operand.vmem [shape: f32[32,32], index: 11, kind: input, shape index: {}]
  %s12 = inlined_call_operand.vmem [shape: f32[1,32], index: 12, kind: input, shape index: {}]
  %s13 = inlined_call_operand.hbm [shape: f32[8,8,32], index: 13, kind: output, shape index: {}]
  %s14 = sld [smem:[#allocation0]]
  $region109: #{tpu_custom_call.1} parent=0
    _
  %s16 = ssub.s32 1, %s14
  %s17 = scalar_select 0, %s16, %s14
  $region1: #{tpu_custom_call.1} parent=0
    #allocation2 [shape = 'u8[32768]{0}', space=vmem, size = 0x8000, scoped, tag = 'input window, operand 0']
    #allocation3 [shape = 's32[2]{0}', space=sflag, size = 0x8, scoped, tag = 'scoped memory for tpu_custom_call.1']
    #allocation4 [shape = 's32[2]{0}', space=sflag, size = 0x8, scoped, tag = 'scoped memory for tpu_custom_call.1']
    #allocation5 [shape = 'u8[65536]{0}', space=vmem, size = 0x10000, scoped, tag = 'input window, operand 1']
    #allocation6 [shape = 's32[2]{0}', space=sflag, size = 0x8, scoped, tag = 'scoped memory for tpu_custom_call.1']
    #allocation7 [shape = 'u8[65536]{0}', space=vmem, size = 0x10000, scoped, tag = 'input window, operand 2']
    #allocation8 [shape = 'u8[16384]{0}', space=vmem, size = 0x4000, scoped, tag = 'input window, operand 5, single buffered']
    #allocation9 [shape = 's32[1]{0}', space=sflag, size = 0x4, scoped, tag = 'scoped memory for tpu_custom_call.1']
    #allocation10 [shape = 'u8[16384]{0}', space=vmem, size = 0x4000, scoped, tag = 'input window, operand 6, single buffered']
    #allocation11 [shape = 'u8[16384]{0}', space=vmem, size = 0x4000, scoped, tag = 'input window, operand 7, single buffered']
    #allocation12 [shape = 's32[1]{0}', space=sflag, size = 0x4, scoped, tag = 'scoped memory for tpu_custom_call.1']
    #allocation13 [shape = 'u8[32768]{0}', space=vmem, size = 0x8000, scoped, tag = 'output window, operand 0']
    %18 = vsyncpa [#allocation3], 0
    %s19 = scalar_lea.sflag [#allocation3], 1
    %20 = vsyncpa %s19, 0
    %21 = vsyncpa [#allocation6], 0
    %s22 = scalar_lea.sflag [#allocation6], 1
    %23 = vsyncpa %s22, 0
    %24 = vsyncpa [#allocation9], 0
    %25 = vsyncpa [#allocation12], 0
    %26 = vsyncpa [#allocation4], 0
    %s27 = scalar_lea.sflag [#allocation4], 1
    %28 = vsyncpa %s27, 0
    loop: start=0, step=1, limit=4
    $region2: #{tpu_custom_call.1} parent=1 // loop_pre_header
      _
    $region3: #{tpu_custom_call.1} parent=1 // loop_header
      %s30 = sphi 0, %s34
      %p31 = scmp.ge.s32.totalorder %s30, 4
      %s40 = sphi 0, %s42
      %s43 = sphi 0, %s40
      %s44 = sphi 0, %s43
      %s60 = sphi 0, %s44
      %s66 = sphi 0, %s68
      %s69 = sphi 0, %s66
      %s70 = sphi 0, %s69
      %s86 = sphi 0, %s70
      %s92 = sphi 0, %s94
      %s95 = sphi 0, %s92
      %s96 = sphi 0, %s95
      %s112 = sphi 0, %s96
      %s116 = sphi 0, %s116
      %s118 = sphi 0, %s116
      %s119 = sphi 0, %s118
      %s133 = sphi 0, %s119
      %s137 = sphi 0, %s137
      %s139 = sphi 0, %s137
      %s140 = sphi 0, %s139
      %s154 = sphi 0, %s140
      %s158 = sphi 0, %s158
      %s160 = sphi 0, %s158
      %s161 = sphi 0, %s160
      %s175 = sphi 0, %s161
      %s179 = sphi 0, %s179
      %s181 = sphi 0, %s179
      %s182 = sphi 0, %s181
      %s196 = sphi 0, %s182
      %s200 = sphi 0, %s200
      %s202 = sphi 0, %s200
      %s203 = sphi 0, %s202
      %s217 = sphi 0, %s203
      %s221 = sphi 0, %s221
      %s223 = sphi 0, %s221
      %s224 = sphi 0, %s223
      %s238 = sphi 0, %s224
      %s242 = sphi 0, %s242
      %s244 = sphi 0, %s242
      %s245 = sphi 0, %s244
      %s259 = sphi 0, %s245
      %s263 = sphi 0, %s263
      %s265 = sphi 0, %s263
      %s266 = sphi 0, %s265
      %s280 = sphi 0, %s266
      %s284 = sphi 0, %s284
      %s286 = sphi 0, %s284
      %s287 = sphi 0, %s286
      %s301 = sphi 0, %s287
      %s305 = sphi 0, %s305
      %s307 = sphi 0, %s305
      %s308 = sphi 0, %s307
      %s322 = sphi 0, %s308
      %s328 = sphi 0, %s330
      %s331 = sphi 0, %s328
      %s332 = sphi 0, %s331
      %s348 = sphi 0, %s332
    $region4: #{tpu_custom_call.1} parent=1 // loop_header_branch
      %33 = sbr.rel (%p31) target = $region8
    $region5: #{tpu_custom_call.1} parent=1 // loop_body
      %s35 = ssub.s32 %s30, 1
      %s36 = ssub.s32 %s30, 2
      %s37 = sadd.s32 %s30, 1
      %s38 = ssub.s32 %s30, %s37
      %p39 = scmp.eq.s32.totalorder %s38, 0
      %s41 = sadd.s32 %s40, 1
      %s42 = scalar_select %p39, %s40, %s41
      %p45 = pneg %p39
      %p46 = scmp.eq.s32.totalorder %s30, 1
      %p47 = por %p45, %p46
      %p48 = scmp.ne.s32.totalorder %s40, %s43
      %p49 = scmp.eq.s32.totalorder %s30, 0
      %p50 = por %p48, %p49
      %p51 = scmp.ne.s32.totalorder %s40, %s43
      %p52 = scmp.eq.s32.totalorder %s35, 1
      %p53 = por %p51, %p52
      %p54 = scmp.ne.s32.totalorder %s43, %s44
      %p55 = scmp.eq.s32.totalorder %s35, 0
      %p56 = por %p54, %p55
      %p57 = scmp.ne.s32.totalorder %s43, %s44
      %p58 = scmp.eq.s32.totalorder %s36, 1
      %p59 = por %p57, %p58
      %p61 = scmp.ne.s32.totalorder %s44, %s60
      %p62 = scmp.eq.s32.totalorder %s36, 0
      %p63 = por %p61, %p62
      %s64 = ssub.s32 %s30, %s37
      %p65 = scmp.eq.s32.totalorder %s64, 0
      %s67 = sadd.s32 %s66, 1
      %s68 = scalar_select %p65, %s66, %s67
      %p71 = pneg %p65
      %p72 = scmp.eq.s32.totalorder %s30, 1
      %p73 = por %p71, %p72
      %p74 = scmp.ne.s32.totalorder %s66, %s69
      %p75 = scmp.eq.s32.totalorder %s30, 0
      %p76 = por %p74, %p75
      %p77 = scmp.ne.s32.totalorder %s66, %s69
      %p78 = scmp.eq.s32.totalorder %s35, 1
      %p79 = por %p77, %p78
      %p80 = scmp.ne.s32.totalorder %s69, %s70
      %p81 = scmp.eq.s32.totalorder %s35, 0
      %p82 = por %p80, %p81
      %p83 = scmp.ne.s32.totalorder %s69, %s70
      %p84 = scmp.eq.s32.totalorder %s36, 1
      %p85 = por %p83, %p84
      %p87 = scmp.ne.s32.totalorder %s70, %s86
      %p88 = scmp.eq.s32.totalorder %s36, 0
      %p89 = por %p87, %p88
      %s90 = ssub.s32 %s30, %s37
      %p91 = scmp.eq.s32.totalorder %s90, 0
      %s93 = sadd.s32 %s92, 1
      %s94 = scalar_select %p91, %s92, %s93
      %p97 = pneg %p91
      %p98 = scmp.eq.s32.totalorder %s30, 1
      %p99 = por %p97, %p98
      %p100 = scmp.ne.s32.totalorder %s92, %s95
      %p101 = scmp.eq.s32.totalorder %s30, 0
      %p102 = por %p100, %p101
      %p103 = scmp.ne.s32.totalorder %s92, %s95
      %p104 = scmp.eq.s32.totalorder %s35, 1
      %p105 = por %p103, %p104
      %p106 = scmp.ne.s32.totalorder %s95, %s96
      %p107 = scmp.eq.s32.totalorder %s35, 0
      %p108 = por %p106, %p107
      %p109 = scmp.ne.s32.totalorder %s95, %s96
      %p110 = scmp.eq.s32.totalorder %s36, 1
      %p111 = por %p109, %p110
      %p113 = scmp.ne.s32.totalorder %s96, %s112
      %p114 = scmp.eq.s32.totalorder %s36, 0
      %p115 = por %p113, %p114
      %s117 = sadd.s32 %s116, 1
      %p120 = scmp.eq.s32.totalorder %s30, 1
      %p121 = scmp.ne.s32.totalorder %s116, %s118
      %p122 = scmp.eq.s32.totalorder %s30, 0
      %p123 = por %p121, %p122
      %p124 = scmp.ne.s32.totalorder %s116, %s118
      %p125 = scmp.eq.s32.totalorder %s35, 1
      %p126 = por %p124, %p125
      %p127 = scmp.ne.s32.totalorder %s118, %s119
      %p128 = scmp.eq.s32.totalorder %s35, 0
      %p129 = por %p127, %p128
      %p130 = scmp.ne.s32.totalorder %s118, %s119
      %p131 = scmp.eq.s32.totalorder %s36, 1
      %p132 = por %p130, %p131
      %p134 = scmp.ne.s32.totalorder %s119, %s133
      %p135 = scmp.eq.s32.totalorder %s36, 0
      %p136 = por %p134, %p135
      %s138 = sadd.s32 %s137, 1
      %p141 = scmp.eq.s32.totalorder %s30, 1
      %p142 = scmp.ne.s32.totalorder %s137, %s139
      %p143 = scmp.eq.s32.totalorder %s30, 0
      %p144 = por %p142, %p143
      %p145 = scmp.ne.s32.totalorder %s137, %s139
      %p146 = scmp.eq.s32.totalorder %s35, 1
      %p147 = por %p145, %p146
      %p148 = scmp.ne.s32.totalorder %s139, %s140
      %p149 = scmp.eq.s32.totalorder %s35, 0
      %p150 = por %p148, %p149
      %p151 = scmp.ne.s32.totalorder %s139, %s140
      %p152 = scmp.eq.s32.totalorder %s36, 1
      %p153 = por %p151, %p152
      %p155 = scmp.ne.s32.totalorder %s140, %s154
      %p156 = scmp.eq.s32.totalorder %s36, 0
      %p157 = por %p155, %p156
      %s159 = sadd.s32 %s158, 1
      %p162 = scmp.eq.s32.totalorder %s30, 1
      %p163 = scmp.ne.s32.totalorder %s158, %s160
      %p164 = scmp.eq.s32.totalorder %s30, 0
      %p165 = por %p163, %p164
      %p166 = scmp.ne.s32.totalorder %s158, %s160
      %p167 = scmp.eq.s32.totalorder %s35, 1
      %p168 = por %p166, %p167
      %p169 = scmp.ne.s32.totalorder %s160, %s161
      %p170 = scmp.eq.s32.totalorder %s35, 0
      %p171 = por %p169, %p170
      %p172 = scmp.ne.s32.totalorder %s160, %s161
      %p173 = scmp.eq.s32.totalorder %s36, 1
      %p174 = por %p172, %p173
      %p176 = scmp.ne.s32.totalorder %s161, %s175
      %p177 = scmp.eq.s32.totalorder %s36, 0
      %p178 = por %p176, %p177
      %s180 = sadd.s32 %s179, 1
      %p183 = scmp.eq.s32.totalorder %s30, 1
      %p184 = scmp.ne.s32.totalorder %s179, %s181
      %p185 = scmp.eq.s32.totalorder %s30, 0
      %p186 = por %p184, %p185
      %p187 = scmp.ne.s32.totalorder %s179, %s181
      %p188 = scmp.eq.s32.totalorder %s35, 1
      %p189 = por %p187, %p188
      %p190 = scmp.ne.s32.totalorder %s181, %s182
      %p191 = scmp.eq.s32.totalorder %s35, 0
      %p192 = por %p190, %p191
      %p193 = scmp.ne.s32.totalorder %s181, %s182
      %p194 = scmp.eq.s32.totalorder %s36, 1
      %p195 = por %p193, %p194
      %p197 = scmp.ne.s32.totalorder %s182, %s196
      %p198 = scmp.eq.s32.totalorder %s36, 0
      %p199 = por %p197, %p198
      %s201 = sadd.s32 %s200, 1
      %p204 = scmp.eq.s32.totalorder %s30, 1
      %p205 = scmp.ne.s32.totalorder %s200, %s202
      %p206 = scmp.eq.s32.totalorder %s30, 0
      %p207 = por %p205, %p206
      %p208 = scmp.ne.s32.totalorder %s200, %s202
      %p209 = scmp.eq.s32.totalorder %s35, 1
      %p210 = por %p208, %p209
      %p211 = scmp.ne.s32.totalorder %s202, %s203
      %p212 = scmp.eq.s32.totalorder %s35, 0
      %p213 = por %p211, %p212
      %p214 = scmp.ne.s32.totalorder %s202, %s203
      %p215 = scmp.eq.s32.totalorder %s36, 1
      %p216 = por %p214, %p215
      %p218 = scmp.ne.s32.totalorder %s203, %s217
      %p219 = scmp.eq.s32.totalorder %s36, 0
      %p220 = por %p218, %p219
      %s222 = sadd.s32 %s221, 1
      %p225 = scmp.eq.s32.totalorder %s30, 1
      %p226 = scmp.ne.s32.totalorder %s221, %s223
      %p227 = scmp.eq.s32.totalorder %s30, 0
      %p228 = por %p226, %p227
      %p229 = scmp.ne.s32.totalorder %s221, %s223
      %p230 = scmp.eq.s32.totalorder %s35, 1
      %p231 = por %p229, %p230
      %p232 = scmp.ne.s32.totalorder %s223, %s224
      %p233 = scmp.eq.s32.totalorder %s35, 0
      %p234 = por %p232, %p233
      %p235 = scmp.ne.s32.totalorder %s223, %s224
      %p236 = scmp.eq.s32.totalorder %s36, 1
      %p237 = por %p235, %p236
      %p239 = scmp.ne.s32.totalorder %s224, %s238
      %p240 = scmp.eq.s32.totalorder %s36, 0
      %p241 = por %p239, %p240
      %s243 = sadd.s32 %s242, 1
      %p246 = scmp.eq.s32.totalorder %s30, 1
      %p247 = scmp.ne.s32.totalorder %s242, %s244
      %p248 = scmp.eq.s32.totalorder %s30, 0
      %p249 = por %p247, %p248
      %p250 = scmp.ne.s32.totalorder %s242, %s244
      %p251 = scmp.eq.s32.totalorder %s35, 1
      %p252 = por %p250, %p251
      %p253 = scmp.ne.s32.totalorder %s244, %s245
      %p254 = scmp.eq.s32.totalorder %s35, 0
      %p255 = por %p253, %p254
      %p256 = scmp.ne.s32.totalorder %s244, %s245
      %p257 = scmp.eq.s32.totalorder %s36, 1
      %p258 = por %p256, %p257
      %p260 = scmp.ne.s32.totalorder %s245, %s259
      %p261 = scmp.eq.s32.totalorder %s36, 0
      %p262 = por %p260, %p261
      %s264 = sadd.s32 %s263, 1
      %p267 = scmp.eq.s32.totalorder %s30, 1
      %p268 = scmp.ne.s32.totalorder %s263, %s265
      %p269 = scmp.eq.s32.totalorder %s30, 0
      %p270 = por %p268, %p269
      %p271 = scmp.ne.s32.totalorder %s263, %s265
      %p272 = scmp.eq.s32.totalorder %s35, 1
      %p273 = por %p271, %p272
      %p274 = scmp.ne.s32.totalorder %s265, %s266
      %p275 = scmp.eq.s32.totalorder %s35, 0
      %p276 = por %p274, %p275
      %p277 = scmp.ne.s32.totalorder %s265, %s266
      %p278 = scmp.eq.s32.totalorder %s36, 1
      %p279 = por %p277, %p278
      %p281 = scmp.ne.s32.totalorder %s266, %s280
      %p282 = scmp.eq.s32.totalorder %s36, 0
      %p283 = por %p281, %p282
      %s285 = sadd.s32 %s284, 1
      %p288 = scmp.eq.s32.totalorder %s30, 1
      %p289 = scmp.ne.s32.totalorder %s284, %s286
      %p290 = scmp.eq.s32.totalorder %s30, 0
      %p291 = por %p289, %p290
      %p292 = scmp.ne.s32.totalorder %s284, %s286
      %p293 = scmp.eq.s32.totalorder %s35, 1
      %p294 = por %p292, %p293
      %p295 = scmp.ne.s32.totalorder %s286, %s287
      %p296 = scmp.eq.s32.totalorder %s35, 0
      %p297 = por %p295, %p296
      %p298 = scmp.ne.s32.totalorder %s286, %s287
      %p299 = scmp.eq.s32.totalorder %s36, 1
      %p300 = por %p298, %p299
      %p302 = scmp.ne.s32.totalorder %s287, %s301
      %p303 = scmp.eq.s32.totalorder %s36, 0
      %p304 = por %p302, %p303
      %s306 = sadd.s32 %s305, 1
      %p309 = scmp.eq.s32.totalorder %s30, 1
      %p310 = scmp.ne.s32.totalorder %s305, %s307
      %p311 = scmp.eq.s32.totalorder %s30, 0
      %p312 = por %p310, %p311
      %p313 = scmp.ne.s32.totalorder %s305, %s307
      %p314 = scmp.eq.s32.totalorder %s35, 1
      %p315 = por %p313, %p314
      %p316 = scmp.ne.s32.totalorder %s307, %s308
      %p317 = scmp.eq.s32.totalorder %s35, 0
      %p318 = por %p316, %p317
      %p319 = scmp.ne.s32.totalorder %s307, %s308
      %p320 = scmp.eq.s32.totalorder %s36, 1
      %p321 = por %p319, %p320
      %p323 = scmp.ne.s32.totalorder %s308, %s322
      %p324 = scmp.eq.s32.totalorder %s36, 0
      %p325 = por %p323, %p324
      %s326 = ssub.s32 %s30, %s37
      %p327 = scmp.eq.s32.totalorder %s326, 0
      %s329 = sadd.s32 %s328, 1
      %s330 = scalar_select %p327, %s328, %s329
      %p333 = pneg %p327
      %p334 = scmp.eq.s32.totalorder %s30, 1
      %p335 = por %p333, %p334
      %p336 = scmp.ne.s32.totalorder %s328, %s331
      %p337 = scmp.eq.s32.totalorder %s30, 0
      %p338 = por %p336, %p337
      %p339 = scmp.ne.s32.totalorder %s328, %s331
      %p340 = scmp.eq.s32.totalorder %s35, 1
      %p341 = por %p339, %p340
      %p342 = scmp.ne.s32.totalorder %s331, %s332
      %p343 = scmp.eq.s32.totalorder %s35, 0
      %p344 = por %p342, %p343
      %p345 = scmp.ne.s32.totalorder %s331, %s332
      %p346 = scmp.eq.s32.totalorder %s36, 1
      %p347 = por %p345, %p346
      %p349 = scmp.ne.s32.totalorder %s332, %s348
      %p350 = scmp.eq.s32.totalorder %s36, 0
      %p351 = por %p349, %p350
      %p352 = scmp.le.s32.totalorder 1, %s30
      %p353 = scmp.lt.s32.totalorder %s30, 3
      %p354 = pnand %p352, %p353
      %p355 = pneg %p354
      // Predicated region
      $region9: #{tpu_custom_call.1} parent=5 // pred_check
        _
      $region10: #{tpu_custom_call.1} parent=5 // pred_check_branch
        %357 = sbr.rel (%p354) target = $region12
      $region11: #{tpu_custom_call.1} parent=5 // pred_region
        %s358 = ssub.s32 %s30, 1
        // Predicated region
        $region13: #{tpu_custom_call.1} parent=11 // pred_check
          %p359 = pneg %p129
        $region14: #{tpu_custom_call.1} parent=11 // pred_check_branch
          %361 = sbr.rel (%p359) target = $region16
        $region15: #{tpu_custom_call.1} parent=11 // pred_region
          _
        $region16: #{tpu_custom_call.1} parent=11 // pred_fallthru
          _
        // Predicated region
        $region17: #{tpu_custom_call.1} parent=11 // pred_check
          %p362 = pneg %p150
        $region18: #{tpu_custom_call.1} parent=11 // pred_check_branch
          %364 = sbr.rel (%p362) target = $region20
        $region19: #{tpu_custom_call.1} parent=11 // pred_region
          _
        $region20: #{tpu_custom_call.1} parent=11 // pred_fallthru
          _
        // Predicated region
        $region21: #{tpu_custom_call.1} parent=11 // pred_check
          %p365 = pneg %p171
        $region22: #{tpu_custom_call.1} parent=11 // pred_check_branch
          %367 = sbr.rel (%p365) target = $region24
        $region23: #{tpu_custom_call.1} parent=11 // pred_region
          %s369 = ssub.s32 512, 512
          %370 = vsyncadd [#allocation9], %s369
          %s371 = sshll.u32 [#allocation8], 4
          %s372 = int_to_ptr.vmem [resolvable:$true] %s371
          %377 = dma.hbm_to_vmem [thread:$0]  %s5, 512, %s372, [#allocation9], 128, 128, 8
        $region24: #{tpu_custom_call.1} parent=11 // pred_fallthru
          _
        // Predicated region
        $region25: #{tpu_custom_call.1} parent=11 // pred_check
          %p378 = pneg %p192
        $region26: #{tpu_custom_call.1} parent=11 // pred_check_branch
          %380 = sbr.rel (%p378) target = $region28
        $region27: #{tpu_custom_call.1} parent=11 // pred_region
          %s382 = ssub.s32 512, 512
          %383 = vsyncadd [#allocation9], %s382
          %s384 = sshll.u32 [#allocation10], 4
          %s385 = int_to_ptr.vmem [resolvable:$true] %s384
          %390 = dma.hbm_to_vmem [thread:$0]  %s6, 512, %s385, [#allocation9], 128, 128, 8
        $region28: #{tpu_custom_call.1} parent=11 // pred_fallthru
          _
        // Predicated region
        $region29: #{tpu_custom_call.1} parent=11 // pred_check
          %p391 = pneg %p213
        $region30: #{tpu_custom_call.1} parent=11 // pred_check_branch
          %393 = sbr.rel (%p391) target = $region32
        $region31: #{tpu_custom_call.1} parent=11 // pred_region
          %s395 = ssub.s32 512, 512
          %396 = vsyncadd [#allocation12], %s395
          %s397 = sshll.u32 [#allocation11], 4
          %s398 = int_to_ptr.vmem [resolvable:$true] %s397
          %403 = dma.hbm_to_vmem [thread:$0]  %s7, 512, %s398, [#allocation12], 128, 128, 8
        $region32: #{tpu_custom_call.1} parent=11 // pred_fallthru
          _
        // Predicated region
        $region33: #{tpu_custom_call.1} parent=11 // pred_check
          %p404 = pneg %p234
        $region34: #{tpu_custom_call.1} parent=11 // pred_check_branch
          %406 = sbr.rel (%p404) target = $region36
        $region35: #{tpu_custom_call.1} parent=11 // pred_region
          _
        $region36: #{tpu_custom_call.1} parent=11 // pred_fallthru
          _
        // Predicated region
        $region37: #{tpu_custom_call.1} parent=11 // pred_check
          %p407 = pneg %p255
        $region38: #{tpu_custom_call.1} parent=11 // pred_check_branch
          %409 = sbr.rel (%p407) target = $region40
        $region39: #{tpu_custom_call.1} parent=11 // pred_region
          _
        $region40: #{tpu_custom_call.1} parent=11 // pred_fallthru
          _
        // Predicated region
        $region41: #{tpu_custom_call.1} parent=11 // pred_check
          %p410 = pneg %p276
        $region42: #{tpu_custom_call.1} parent=11 // pred_check_branch
          %412 = sbr.rel (%p410) target = $region44
        $region43: #{tpu_custom_call.1} parent=11 // pred_region
          _
        $region44: #{tpu_custom_call.1} parent=11 // pred_fallthru
          _
        // Predicated region
        $region45: #{tpu_custom_call.1} parent=11 // pred_check
          %p413 = pneg %p297
        $region46: #{tpu_custom_call.1} parent=11 // pred_check_branch
          %415 = sbr.rel (%p413) target = $region48
        $region47: #{tpu_custom_call.1} parent=11 // pred_region
          _
        $region48: #{tpu_custom_call.1} parent=11 // pred_fallthru
          _
        // Predicated region
        $region49: #{tpu_custom_call.1} parent=11 // pred_check
          %p416 = pneg %p318
        $region50: #{tpu_custom_call.1} parent=11 // pred_check_branch
          %418 = sbr.rel (%p416) target = $region52
        $region51: #{tpu_custom_call.1} parent=11 // pred_region
          _
        $region52: #{tpu_custom_call.1} parent=11 // pred_fallthru
          _
      $region12: #{tpu_custom_call.1} parent=5 // pred_fallthru
        _
      %p419 = scmp.lt.s32.totalorder %s30, 2
      // Predicated region
      $region53: #{tpu_custom_call.1} parent=5 // pred_check
        %p420 = pneg %p419
      $region54: #{tpu_custom_call.1} parent=5 // pred_check_branch
        %422 = sbr.rel (%p420) target = $region56
      $region55: #{tpu_custom_call.1} parent=5 // pred_region
        // Predicated region
        $region57: #{tpu_custom_call.1} parent=55 // pred_check
          %p423 = pneg %p50
        $region58: #{tpu_custom_call.1} parent=55 // pred_check_branch
          %425 = sbr.rel (%p423) target = $region60
        $region59: #{tpu_custom_call.1} parent=55 // pred_region
          %s426 = sand.u32 %s40, 1
          %s427 = scalar_lea.sflag [#allocation3], %s426
          %s428 = sand.u32 %s40, 1
          %s429 = smul.addr %s428, 32
          %s430 = scalar_lea.vmem [#allocation2], %s429
          %s431 = smul.u32 4, %s30
          %s433 = ssub.s32 512, 512
          %434 = vsyncadd %s427, %s433
          %s435 = smul.addr %s431, 128
          %s436 = scalar_lea.hbm %s0, %s435
          %s437 = sshll.u32 %s430, 4
          %s438 = int_to_ptr.vmem [resolvable:$true] %s437
          %443 = dma.hbm_to_vmem [thread:$0]  %s436, 512, %s438, %s427, 128, 128, 8
        $region60: #{tpu_custom_call.1} parent=55 // pred_fallthru
          _
        // Predicated region
        $region61: #{tpu_custom_call.1} parent=55 // pred_check
          %p444 = pneg %p76
        $region62: #{tpu_custom_call.1} parent=55 // pred_check_branch
          %446 = sbr.rel (%p444) target = $region64
        $region63: #{tpu_custom_call.1} parent=55 // pred_region
          %s447 = sand.u32 %s30, 1
          %s448 = scalar_lea.sflag [#allocation6], %s447
          %s449 = sand.u32 %s66, 1
          %s450 = smul.addr %s449, 64
          %s451 = scalar_lea.vmem [#allocation5], %s450
          %s452 = smul.u32 4, %s30
          %s454 = ssub.s32 1024, 1024
          %455 = vsyncadd %s448, %s454
          %s456 = smul.addr %s452, 2
          %s457 = smul.addr %s456, 128
          %s458 = scalar_lea.hbm %s1, %s457
          %s459 = sshll.u32 %s451, 4
          %s460 = int_to_ptr.vmem [resolvable:$true] %s459
          %465 = dma.hbm_to_vmem [thread:$0]  %s458, 1024, %s460, %s448, 128, 128, 8
        $region64: #{tpu_custom_call.1} parent=55 // pred_fallthru
          _
        // Predicated region
        $region65: #{tpu_custom_call.1} parent=55 // pred_check
          %p466 = pneg %p102
        $region66: #{tpu_custom_call.1} parent=55 // pred_check_branch
          %468 = sbr.rel (%p466) target = $region68
        $region67: #{tpu_custom_call.1} parent=55 // pred_region
          %s469 = sand.u32 %s30, 1
          %s470 = scalar_lea.sflag [#allocation6], %s469
          %s471 = sand.u32 %s92, 1
          %s472 = smul.addr %s471, 64
          %s473 = scalar_lea.vmem [#allocation7], %s472
          %s474 = smul.u32 4, %s30
          %s476 = ssub.s32 1024, 1024
          %477 = vsyncadd %s470, %s476
          %s478 = smul.addr %s474, 2
          %s479 = smul.addr %s478, 128
          %s480 = scalar_lea.hbm %s2, %s479
          %s481 = sshll.u32 %s473, 4
          %s482 = int_to_ptr.vmem [resolvable:$true] %s481
          %487 = dma.hbm_to_vmem [thread:$0]  %s480, 1024, %s482, %s470, 128, 128, 8
        $region68: #{tpu_custom_call.1} parent=55 // pred_fallthru
          _
      $region56: #{tpu_custom_call.1} parent=5 // pred_fallthru
        _
      %p488 = scmp.le.s32.totalorder 1, %s30
      %p489 = scmp.lt.s32.totalorder %s30, 3
      %p490 = pnand %p488, %p489
      %p491 = pneg %p490
      // Predicated region
      $region69: #{tpu_custom_call.1} parent=5 // pred_check
        _
      $region70: #{tpu_custom_call.1} parent=5 // pred_check_branch
        %493 = sbr.rel (%p490) target = $region72
      $region71: #{tpu_custom_call.1} parent=5 // pred_region
        %s494 = ssub.s32 %s30, 1
        %s495 = sand.u32 %s43, 1
        %s496 = scalar_lea.sflag [#allocation3], %s495
        %s497 = sand.u32 %s43, 1
        %s498 = smul.addr %s497, 32
        %s499 = scalar_lea.vmem [#allocation2], %s498
        // Predicated region
        $region73: #{tpu_custom_call.1} parent=71 // pred_check
          %p500 = pneg %p56
        $region74: #{tpu_custom_call.1} parent=71 // pred_check_branch
          %502 = sbr.rel (%p500) target = $region76
        $region75: #{tpu_custom_call.1} parent=71 // pred_region
          %503 = dma.done %s496, 512
        $region76: #{tpu_custom_call.1} parent=71 // pred_fallthru
          _
        %s504 = sand.u32 %s35, 1
        %s505 = scalar_lea.sflag [#allocation6], %s504
        %s506 = sand.u32 %s69, 1
        %s507 = smul.addr %s506, 64
        %s508 = scalar_lea.vmem [#allocation5], %s507
        // Predicated region
        $region77: #{tpu_custom_call.1} parent=71 // pred_check
          %p509 = pneg %p82
        $region78: #{tpu_custom_call.1} parent=71 // pred_check_branch
          %511 = sbr.rel (%p509) target = $region80
        $region79: #{tpu_custom_call.1} parent=71 // pred_region
          %512 = dma.done %s505, 1024
        $region80: #{tpu_custom_call.1} parent=71 // pred_fallthru
          _
        %s513 = sand.u32 %s35, 1
        %s514 = scalar_lea.sflag [#allocation6], %s513
        %s515 = sand.u32 %s95, 1
        %s516 = smul.addr %s515, 64
        %s517 = scalar_lea.vmem [#allocation7], %s516
        // Predicated region
        $region81: #{tpu_custom_call.1} parent=71 // pred_check
          %p518 = pneg %p108
        $region82: #{tpu_custom_call.1} parent=71 // pred_check_branch
          %520 = sbr.rel (%p518) target = $region84
        $region83: #{tpu_custom_call.1} parent=71 // pred_region
          %521 = dma.done %s514, 1024
        $region84: #{tpu_custom_call.1} parent=71 // pred_fallthru
          _
        // Predicated region
        $region85: #{tpu_custom_call.1} parent=71 // pred_check
          %p522 = pneg %p171
        $region86: #{tpu_custom_call.1} parent=71 // pred_check_branch
          %524 = sbr.rel (%p522) target = $region88
        $region87: #{tpu_custom_call.1} parent=71 // pred_region
          %525 = dma.done [#allocation9], 512
        $region88: #{tpu_custom_call.1} parent=71 // pred_fallthru
          _
        // Predicated region
        $region89: #{tpu_custom_call.1} parent=71 // pred_check
          %p526 = pneg %p192
        $region90: #{tpu_custom_call.1} parent=71 // pred_check_branch
          %528 = sbr.rel (%p526) target = $region92
        $region91: #{tpu_custom_call.1} parent=71 // pred_region
          %529 = dma.done [#allocation9], 512
        $region92: #{tpu_custom_call.1} parent=71 // pred_fallthru
          _
        // Predicated region
        $region93: #{tpu_custom_call.1} parent=71 // pred_check
          %p530 = pneg %p213
        $region94: #{tpu_custom_call.1} parent=71 // pred_check_branch
          %532 = sbr.rel (%p530) target = $region96
        $region95: #{tpu_custom_call.1} parent=71 // pred_region
          %533 = dma.done [#allocation12], 512
        $region96: #{tpu_custom_call.1} parent=71 // pred_fallthru
          _
        %s534 = sand.u32 %s43, 1
        %s535 = scalar_lea.sflag [#allocation3], %s534
        %s536 = sand.u32 %s43, 1
        %s537 = smul.addr %s536, 32
        %s538 = scalar_lea.vmem [#allocation2], %s537
        %p539 = pneg %p56
        %p540 = pneg %p53
        %s541 = sand.u32 %s35, 1
        %s542 = scalar_lea.sflag [#allocation6], %s541
        %s543 = sand.u32 %s69, 1
        %s544 = smul.addr %s543, 64
        %s545 = scalar_lea.vmem [#allocation5], %s544
        %p546 = pneg %p82
        %p547 = pneg %p79
        %s548 = sand.u32 %s35, 1
        %s549 = scalar_lea.sflag [#allocation6], %s548
        %s550 = sand.u32 %s95, 1
        %s551 = smul.addr %s550, 64
        %s552 = scalar_lea.vmem [#allocation7], %s551
        %p553 = pneg %p108
        %p554 = pneg %p105
        %p555 = pneg %p129
        %p556 = pneg %p126
        %p557 = pneg %p150
        %p558 = pneg %p147
        %p559 = pneg %p171
        %p560 = pneg %p168
        %p561 = pneg %p192
        %p562 = pneg %p189
        %p563 = pneg %p213
        %p564 = pneg %p210
        %p565 = pneg %p234
        %p566 = pneg %p231
        %p567 = pneg %p255
        %p568 = pneg %p252
        %p569 = pneg %p276
        %p570 = pneg %p273
        %p571 = pneg %p297
        %p572 = pneg %p294
        %p573 = pneg %p318
        %p574 = pneg %p315
        %p575 = pneg %p344
        %p576 = pneg %p341
        %s577 = sand.u32 %s331, 1
        %s578 = scalar_lea.sflag [#allocation4], %s577
        %s579 = sand.u32 %s331, 1
        %s580 = smul.addr %s579, 32
        %s581 = scalar_lea.vmem [#allocation13], %s580
        %s582 = smul.u32 4, %s35
        %s583 = smul.u32 4, %s35
        %s584 = smul.u32 4, %s35
        %s585 = smul.u32 4, %s35
        %v586 = vld [vmem:[%s3] sm:$0x1]
        %v587 = vld [vmem:[%s4] sm:$0x1]
        %v588 = vld [vmem:[%s499] sm:$0xff]
        %v589 = vld [vmem:[%s499 + $0x8] sm:$0xff]
        %v590 = vld [vmem:[%s499 + $0x10] sm:$0xff]
        %v591 = vld [vmem:[%s499 + $0x18] sm:$0xff]
        %v592 = vld [vmem:[%s508] sm:$0xff]
        %v593 = vld [vmem:[%s508 + $0x8] sm:$0xff]
        %v594 = vld [vmem:[%s508 + $0x10] sm:$0xff]
        %v595 = vld [vmem:[%s508 + $0x18] sm:$0xff]
        %v596 = vld [vmem:[%s508 + $0x20] sm:$0xff]
        %v597 = vld [vmem:[%s508 + $0x28] sm:$0xff]
        %v598 = vld [vmem:[%s508 + $0x30] sm:$0xff]
        %v599 = vld [vmem:[%s508 + $0x38] sm:$0xff]
        %v600 = vld [vmem:[%s517] sm:$0xff]
        %v601 = vld [vmem:[%s517 + $0x8] sm:$0xff]
        %v602 = vld [vmem:[%s517 + $0x10] sm:$0xff]
        %v603 = vld [vmem:[%s517 + $0x18] sm:$0xff]
        %v604 = vld [vmem:[%s517 + $0x20] sm:$0xff]
        %v605 = vld [vmem:[%s517 + $0x28] sm:$0xff]
        %v606 = vld [vmem:[%s517 + $0x30] sm:$0xff]
        %v607 = vld [vmem:[%s517 + $0x38] sm:$0xff]
        %vm608 = vcmask 261120
        %v609 = vsel %vm608, %v588, 0.0
        %610 = vadd.xlane.f32.xlu0 %v609
        %v611 = vpop.xlane.xlu0 %610
        %v612 = vsel %vm608, %v589, 0.0
        %613 = vadd.xlane.f32.xlu0 %v612
        %v614 = vpop.xlane.xlu0 %613
        %v615 = vsel %vm608, %v590, 0.0
        %616 = vadd.xlane.f32.xlu0 %v615
        %v617 = vpop.xlane.xlu0 %616
        %v618 = vsel %vm608, %v591, 0.0
        %619 = vadd.xlane.f32.xlu0 %v618
        %v620 = vpop.xlane.xlu0 %619
        %v621 = vrcp.pop 32.0
        %v622 = vmul.f32 %v611, %v621
        %v623 = vmul.f32 %v614, %v621
        %v624 = vmul.f32 %v617, %v621
        %v625 = vmul.f32 %v620, %v621
        %v626 = vsub.f32 %v588, %v622
        %v627 = vsub.f32 %v589, %v623
        %v628 = vsub.f32 %v590, %v624
        %v629 = vsub.f32 %v591, %v625
        %v630 = vmul.f32 %v626, %v626
        %v631 = vmul.f32 %v627, %v627
        %v632 = vmul.f32 %v628, %v628
        %v633 = vmul.f32 %v629, %v629
        %v634 = vsel %vm608, %v630, 0.0
        %635 = vadd.xlane.f32.xlu0 %v634
        %v636 = vpop.xlane.xlu0 %635
        %v637 = vsel %vm608, %v631, 0.0
        %638 = vadd.xlane.f32.xlu0 %v637
        %v639 = vpop.xlane.xlu0 %638
        %v640 = vsel %vm608, %v632, 0.0
        %641 = vadd.xlane.f32.xlu0 %v640
        %v642 = vpop.xlane.xlu0 %641
        %v643 = vsel %vm608, %v633, 0.0
        %644 = vadd.xlane.f32.xlu0 %v643
        %v645 = vpop.xlane.xlu0 %644
        %v646 = vmul.f32 %v636, %v621
        %v647 = vmul.f32 %v639, %v621
        %v648 = vmul.f32 %v642, %v621
        %v649 = vmul.f32 %v645, %v621
        %v650 = vadd.f32 %v646, 1e-05
        %v651 = vadd.f32 %v647, 1e-05
        %v652 = vadd.f32 %v648, 1e-05
        %v653 = vadd.f32 %v649, 1e-05
        %v654 = vrsqrt.pop %v650
        %v655 = vrsqrt.pop %v651
        %v656 = vrsqrt.pop %v652
        %v657 = vrsqrt.pop %v653
        %v658 = vmul.f32 %v626, %v654
        %v659 = vmul.f32 %v627, %v655
        %v660 = vmul.f32 %v628, %v656
        %v661 = vmul.f32 %v629, %v657
        %v663 = vlaneseq
        %v664 = vshrl.u32 %v663, 7
        %v665 = vsub.s32 0, %v664
        %v666 = vrot.slane %v586, %v665
        %v668 = vmul.f32 %v658, %v666
        %v669 = vmul.f32 %v659, %v666
        %v670 = vmul.f32 %v660, %v666
        %v671 = vmul.f32 %v661, %v666
        %v673 = vlaneseq
        %v674 = vshrl.u32 %v673, 7
        %v675 = vsub.s32 0, %v674
        %v676 = vrot.slane %v587, %v675
        %v678 = vadd.f32 %v668, %v676
        %v679 = vadd.f32 %v669, %v676
        %v680 = vadd.f32 %v670, %v676
        %v681 = vadd.f32 %v671, %v676
        %v682 = vsel %vm608, %v592, 0.0
        %683 = vadd.xlane.f32.xlu0 %v682
        %v684 = vpop.xlane.xlu0 %683
        %v685 = vsel %vm608, %v593, 0.0
        %686 = vadd.xlane.f32.xlu0 %v685
        %v687 = vpop.xlane.xlu0 %686
        %v688 = vsel %vm608, %v594, 0.0
        %689 = vadd.xlane.f32.xlu0 %v688
        %v690 = vpop.xlane.xlu0 %689
        %v691 = vsel %vm608, %v595, 0.0
        %692 = vadd.xlane.f32.xlu0 %v691
        %v693 = vpop.xlane.xlu0 %692
        %v694 = vsel %vm608, %v596, 0.0
        %695 = vadd.xlane.f32.xlu0 %v694
        %v696 = vpop.xlane.xlu0 %695
        %v697 = vsel %vm608, %v597, 0.0
        %698 = vadd.xlane.f32.xlu0 %v697
        %v699 = vpop.xlane.xlu0 %698
        %v700 = vsel %vm608, %v598, 0.0
        %701 = vadd.xlane.f32.xlu0 %v700
        %v702 = vpop.xlane.xlu0 %701
        %v703 = vsel %vm608, %v599, 0.0
        %704 = vadd.xlane.f32.xlu0 %v703
        %v705 = vpop.xlane.xlu0 %704
        %v706 = vmul.f32 %v684, %v621
        %v707 = vmul.f32 %v687, %v621
        %v708 = vmul.f32 %v690, %v621
        %v709 = vmul.f32 %v693, %v621
        %v710 = vmul.f32 %v696, %v621
        %v711 = vmul.f32 %v699, %v621
        %v712 = vmul.f32 %v702, %v621
        %v713 = vmul.f32 %v705, %v621
        %v714 = vsub.f32 %v592, %v706
        %v715 = vsub.f32 %v593, %v707
        %v716 = vsub.f32 %v594, %v708
        %v717 = vsub.f32 %v595, %v709
        %v718 = vsub.f32 %v596, %v710
        %v719 = vsub.f32 %v597, %v711
        %v720 = vsub.f32 %v598, %v712
        %v721 = vsub.f32 %v599, %v713
        %v722 = vmul.f32 %v714, %v714
        %v723 = vmul.f32 %v715, %v715
        %v724 = vmul.f32 %v716, %v716
        %v725 = vmul.f32 %v717, %v717
        %v726 = vmul.f32 %v718, %v718
        %v727 = vmul.f32 %v719, %v719
        %v728 = vmul.f32 %v720, %v720
        %v729 = vmul.f32 %v721, %v721
        %v730 = vsel %vm608, %v722, 0.0
        %731 = vadd.xlane.f32.xlu0 %v730
        %v732 = vpop.xlane.xlu0 %731
        %v733 = vsel %vm608, %v723, 0.0
        %734 = vadd.xlane.f32.xlu0 %v733
        %v735 = vpop.xlane.xlu0 %734
        %v736 = vsel %vm608, %v724, 0.0
        %737 = vadd.xlane.f32.xlu0 %v736
        %v738 = vpop.xlane.xlu0 %737
        %v739 = vsel %vm608, %v725, 0.0
        %740 = vadd.xlane.f32.xlu0 %v739
        %v741 = vpop.xlane.xlu0 %740
        %v742 = vsel %vm608, %v726, 0.0
        %743 = vadd.xlane.f32.xlu0 %v742
        %v744 = vpop.xlane.xlu0 %743
        %v745 = vsel %vm608, %v727, 0.0
        %746 = vadd.xlane.f32.xlu0 %v745
        %v747 = vpop.xlane.xlu0 %746
        %v748 = vsel %vm608, %v728, 0.0
        %749 = vadd.xlane.f32.xlu0 %v748
        %v750 = vpop.xlane.xlu0 %749
        %v751 = vsel %vm608, %v729, 0.0
        %752 = vadd.xlane.f32.xlu0 %v751
        %v753 = vpop.xlane.xlu0 %752
        %v754 = vmul.f32 %v732, %v621
        %v755 = vmul.f32 %v735, %v621
        %v756 = vmul.f32 %v738, %v621
        %v757 = vmul.f32 %v741, %v621
        %v758 = vmul.f32 %v744, %v621
        %v759 = vmul.f32 %v747, %v621
        %v760 = vmul.f32 %v750, %v621
        %v761 = vmul.f32 %v753, %v621
        %v762 = vadd.f32 %v754, 1e-05
        %v763 = vadd.f32 %v755, 1e-05
        %v764 = vadd.f32 %v756, 1e-05
        %v765 = vadd.f32 %v757, 1e-05
        %v766 = vadd.f32 %v758, 1e-05
        %v767 = vadd.f32 %v759, 1e-05
        %v768 = vadd.f32 %v760, 1e-05
        %v769 = vadd.f32 %v761, 1e-05
        %v770 = vrsqrt.pop %v762
        %v771 = vrsqrt.pop %v763
        %v772 = vrsqrt.pop %v764
        %v773 = vrsqrt.pop %v765
        %v774 = vrsqrt.pop %v766
        %v775 = vrsqrt.pop %v767
        %v776 = vrsqrt.pop %v768
        %v777 = vrsqrt.pop %v769
        %v778 = vmul.f32 %v714, %v770
        %v779 = vmul.f32 %v715, %v771
        %v780 = vmul.f32 %v716, %v772
        %v781 = vmul.f32 %v717, %v773
        %v782 = vmul.f32 %v718, %v774
        %v783 = vmul.f32 %v719, %v775
        %v784 = vmul.f32 %v720, %v776
        %v785 = vmul.f32 %v721, %v777
        %v786 = vmul.f32 %v778, %v666
        %v787 = vmul.f32 %v779, %v666
        %v788 = vmul.f32 %v780, %v666
        %v789 = vmul.f32 %v781, %v666
        %v790 = vmul.f32 %v782, %v666
        %v791 = vmul.f32 %v783, %v666
        %v792 = vmul.f32 %v784, %v666
        %v793 = vmul.f32 %v785, %v666
        %v794 = vadd.f32 %v786, %v676
        %v795 = vadd.f32 %v787, %v676
        %v796 = vadd.f32 %v788, %v676
        %v797 = vadd.f32 %v789, %v676
        %v798 = vadd.f32 %v790, %v676
        %v799 = vadd.f32 %v791, %v676
        %v800 = vadd.f32 %v792, %v676
        %v801 = vadd.f32 %v793, %v676
        %v802 = vsel %vm608, %v600, 0.0
        %803 = vadd.xlane.f32.xlu0 %v802
        %v804 = vpop.xlane.xlu0 %803
        %v805 = vsel %vm608, %v601, 0.0
        %806 = vadd.xlane.f32.xlu0 %v805
        %v807 = vpop.xlane.xlu0 %806
        %v808 = vsel %vm608, %v602, 0.0
        %809 = vadd.xlane.f32.xlu0 %v808
        %v810 = vpop.xlane.xlu0 %809
        %v811 = vsel %vm608, %v603, 0.0
        %812 = vadd.xlane.f32.xlu0 %v811
        %v813 = vpop.xlane.xlu0 %812
        %v814 = vsel %vm608, %v604, 0.0
        %815 = vadd.xlane.f32.xlu0 %v814
        %v816 = vpop.xlane.xlu0 %815
        %v817 = vsel %vm608, %v605, 0.0
        %818 = vadd.xlane.f32.xlu0 %v817
        %v819 = vpop.xlane.xlu0 %818
        %v820 = vsel %vm608, %v606, 0.0
        %821 = vadd.xlane.f32.xlu0 %v820
        %v822 = vpop.xlane.xlu0 %821
        %v823 = vsel %vm608, %v607, 0.0
        %824 = vadd.xlane.f32.xlu0 %v823
        %v825 = vpop.xlane.xlu0 %824
        %v826 = vmul.f32 %v804, %v621
        %v827 = vmul.f32 %v807, %v621
        %v828 = vmul.f32 %v810, %v621
        %v829 = vmul.f32 %v813, %v621
        %v830 = vmul.f32 %v816, %v621
        %v831 = vmul.f32 %v819, %v621
        %v832 = vmul.f32 %v822, %v621
        %v833 = vmul.f32 %v825, %v621
        %v834 = vsub.f32 %v600, %v826
        %v835 = vsub.f32 %v601, %v827
        %v836 = vsub.f32 %v602, %v828
        %v837 = vsub.f32 %v603, %v829
        %v838 = vsub.f32 %v604, %v830
        %v839 = vsub.f32 %v605, %v831
        %v840 = vsub.f32 %v606, %v832
        %v841 = vsub.f32 %v607, %v833
        %v842 = vmul.f32 %v834, %v834
        %v843 = vmul.f32 %v835, %v835
        %v844 = vmul.f32 %v836, %v836
        %v845 = vmul.f32 %v837, %v837
        %v846 = vmul.f32 %v838, %v838
        %v847 = vmul.f32 %v839, %v839
        %v848 = vmul.f32 %v840, %v840
        %v849 = vmul.f32 %v841, %v841
        %v850 = vsel %vm608, %v842, 0.0
        %851 = vadd.xlane.f32.xlu0 %v850
        %v852 = vpop.xlane.xlu0 %851
        %v853 = vsel %vm608, %v843, 0.0
        %854 = vadd.xlane.f32.xlu0 %v853
        %v855 = vpop.xlane.xlu0 %854
        %v856 = vsel %vm608, %v844, 0.0
        %857 = vadd.xlane.f32.xlu0 %v856
        %v858 = vpop.xlane.xlu0 %857
        %v859 = vsel %vm608, %v845, 0.0
        %860 = vadd.xlane.f32.xlu0 %v859
        %v861 = vpop.xlane.xlu0 %860
        %v862 = vsel %vm608, %v846, 0.0
        %863 = vadd.xlane.f32.xlu0 %v862
        %v864 = vpop.xlane.xlu0 %863
        %v865 = vsel %vm608, %v847, 0.0
        %866 = vadd.xlane.f32.xlu0 %v865
        %v867 = vpop.xlane.xlu0 %866
        %v868 = vsel %vm608, %v848, 0.0
        %869 = vadd.xlane.f32.xlu0 %v868
        %v870 = vpop.xlane.xlu0 %869
        %v871 = vsel %vm608, %v849, 0.0
        %872 = vadd.xlane.f32.xlu0 %v871
        %v873 = vpop.xlane.xlu0 %872
        %v874 = vmul.f32 %v852, %v621
        %v875 = vmul.f32 %v855, %v621
        %v876 = vmul.f32 %v858, %v621
        %v877 = vmul.f32 %v861, %v621
        %v878 = vmul.f32 %v864, %v621
        %v879 = vmul.f32 %v867, %v621
        %v880 = vmul.f32 %v870, %v621
        %v881 = vmul.f32 %v873, %v621
        %v882 = vadd.f32 %v874, 1e-05
        %v883 = vadd.f32 %v875, 1e-05
        %v884 = vadd.f32 %v876, 1e-05
        %v885 = vadd.f32 %v877, 1e-05
        %v886 = vadd.f32 %v878, 1e-05
        %v887 = vadd.f32 %v879, 1e-05
        %v888 = vadd.f32 %v880, 1e-05
        %v889 = vadd.f32 %v881, 1e-05
        %v890 = vrsqrt.pop %v882
        %v891 = vrsqrt.pop %v883
        %v892 = vrsqrt.pop %v884
        %v893 = vrsqrt.pop %v885
        %v894 = vrsqrt.pop %v886
        %v895 = vrsqrt.pop %v887
        %v896 = vrsqrt.pop %v888
        %v897 = vrsqrt.pop %v889
        %v898 = vmul.f32 %v834, %v890
        %v899 = vmul.f32 %v835, %v891
        %v900 = vmul.f32 %v836, %v892
        %v901 = vmul.f32 %v837, %v893
        %v902 = vmul.f32 %v838, %v894
        %v903 = vmul.f32 %v839, %v895
        %v904 = vmul.f32 %v840, %v896
        %v905 = vmul.f32 %v841, %v897
        %v906 = vmul.f32 %v898, %v666
        %v907 = vmul.f32 %v899, %v666
        %v908 = vmul.f32 %v900, %v666
        %v909 = vmul.f32 %v901, %v666
        %v910 = vmul.f32 %v902, %v666
        %v911 = vmul.f32 %v903, %v666
        %v912 = vmul.f32 %v904, %v666
        %v913 = vmul.f32 %v905, %v666
        %v914 = vadd.f32 %v906, %v676
        %v915 = vadd.f32 %v907, %v676
        %v916 = vadd.f32 %v908, %v676
        %v917 = vadd.f32 %v909, %v676
        %v918 = vadd.f32 %v910, %v676
        %v919 = vadd.f32 %v911, %v676
        %v920 = vadd.f32 %v912, %v676
        %v921 = vadd.f32 %v913, %v676
        %v922 = vld [vmem:[#allocation8] sm:$0xff]
        %v923 = vld [vmem:[#allocation8 + $0x8] sm:$0xff]
        %v924 = vld [vmem:[#allocation8 + $0x10] sm:$0xff]
        %v925 = vld [vmem:[#allocation8 + $0x18] sm:$0xff]
        %v926 = vld [vmem:[%s8] sm:$0x1]
        %v928 = vlaneseq
        %v929 = vshrl.u32 %v928, 7
        %v930 = vsub.s32 0, %v929
        %v931 = vrot.slane %v926, %v930
        %v934 = vsel %vm608, %v678, 0
        %v937 = vsel %vm608, %v679, 0
        %v940 = vsel %vm608, %v680, 0
        %v943 = vsel %vm608, %v681, 0
        %945 = vmatprep.subr.mxu0 0.0
        %946 = vmatpush1.msra.mxu0 %v922
        %947 = vmatprep.subr.mxu0 0.0
        %948 = vmatpush1.msra.mxu0 %v923
        %949 = vmatprep.subr.mxu0 0.0
        %950 = vmatpush1.msra.mxu0 %v924
        %951 = vmatprep.subr.mxu0 0.0
        %952 = vmatpush1.msra.mxu0 %v925
        %953 = vmatprep.subr.mxu0 0.0
        %954 = vmatpush1.msra.mxu0 0.0
        %955 = vmatprep.subr.mxu0 0.0
        %956 = vmatpush1.msra.mxu0 0.0
        %957 = vmatprep.subr.mxu0 0.0
        %958 = vmatpush1.msra.mxu0 0.0
        %959 = vmatprep.subr.mxu0 0.0
        %960 = vmatpush1.msra.mxu0 0.0
        %961 = vmatprep.subr.mxu0 0.0
        %962 = vmatpush1.msra.mxu0 0.0
        %963 = vmatprep.subr.mxu0 0.0
        %964 = vmatpush1.msra.mxu0 0.0
        %965 = vmatprep.subr.mxu0 0.0
        %966 = vmatpush1.msra.mxu0 0.0
        %967 = vmatprep.subr.mxu0 0.0
        %968 = vmatpush1.msra.mxu0 0.0
        %969 = vmatprep.subr.mxu0 0.0
        %970 = vmatpush1.msra.mxu0 0.0
        %971 = vmatprep.subr.mxu0 0.0
        %972 = vmatpush1.msra.mxu0 0.0
        %973 = vmatprep.subr.mxu0 0.0
        %974 = vmatpush1.msra.mxu0 0.0
        %975 = vmatprep.subr.mxu0 0.0
        %976 = vmatpush1.msra.mxu0 0.0
        %977 = vmatprep.subr.mxu0 0.0
        %978 = vmatpush1.msra.mxu0 0.0
        %979 = vmatprep.subr.mxu0 0.0
        %980 = vmatpush1.msra.mxu0 0.0
        %981 = vmatprep.subr.mxu0 0.0
        %982 = vmatpush1.msra.mxu0 0.0
        %983 = vmatprep.subr.mxu0 0.0
        %984 = vmatpush1.msra.mxu0 0.0
        %985 = vmatprep.subr.mxu0 0.0
        %986 = vmatpush1.msra.mxu0 0.0
        %987 = vmatprep.subr.mxu0 0.0
        %988 = vmatpush1.msra.mxu0 0.0
        %989 = vmatprep.subr.mxu0 0.0
        %990 = vmatpush1.msra.mxu0 0.0
        %991 = vmatprep.subr.mxu0 0.0
        %992 = vmatpush1.msra.mxu0 0.0
        %993 = vmatprep.subr.mxu0 0.0
        %994 = vmatpush1.msra.mxu0 0.0
        %995 = vmatprep.subr.mxu0 0.0
        %996 = vmatpush1.msra.mxu0 0.0
        %997 = vmatprep.subr.mxu0 0.0
        %998 = vmatpush1.msra.mxu0 0.0
        %999 = vmatprep.subr.mxu0 0.0
        %1000 = vmatpush1.msra.mxu0 0.0
        %1001 = vmatprep.subr.mxu0 0.0
        %1002 = vmatpush1.msra.mxu0 0.0
        %1003 = vmatprep.subr.mxu0 0.0
        %1004 = vmatpush1.msra.mxu0 0.0
        %1005 = vmatprep.subr.mxu0 0.0
        %1006 = vmatpush1.msra.mxu0 0.0
        %1007 = vmatprep.subr.mxu0 0.0
        %1008 = vmatpush1.msra.mxu0 0.0
        %1009 = vmatprep.mubr.f32.mxu0 0.0
        %1010 = vmatmul.mubr.f32.gmra.mrb[0].mxu0 %v934
        %v1011 = vpop.f32.mrb[0].mxu0
        %v1012 = vadd.f32 %v931, %v1011
        %v1013 = vpop.f32.mrb[0].mxu0
        %1014 = vmatprep.mubr.f32.mxu0 0.0
        %1015 = vmatmul.mubr.f32.gmra.mrb[0].mxu0 %v937
        %v1016 = vpop.f32.mrb[0].mxu0
        %v1017 = vadd.f32 %v931, %v1016
        %v1018 = vpop.f32.mrb[0].mxu0
        %1019 = vmatprep.mubr.f32.mxu0 0.0
        %1020 = vmatmul.mubr.f32.gmra.mrb[0].mxu0 %v940
        %v1021 = vpop.f32.mrb[0].mxu0
        %v1022 = vadd.f32 %v931, %v1021
        %v1023 = vpop.f32.mrb[0].mxu0
        %1024 = vmatprep.mubr.f32.mxu0 0.0
        %1025 = vmatmul.mubr.f32.gmra.mrb[0].mxu0 %v943
        %v1026 = vpop.f32.mrb[0].mxu0
        %v1027 = vadd.f32 %v931, %v1026
        %v1028 = vpop.f32.mrb[0].mxu0
        %1029 = vdwg.mxu0
        %v1030 = vld [vmem:[#allocation10] sm:$0xff]
        %v1031 = vld [vmem:[#allocation10 + $0x8] sm:$0xff]
        %v1032 = vld [vmem:[#allocation10 + $0x10] sm:$0xff]
        %v1033 = vld [vmem:[#allocation10 + $0x18] sm:$0xff]
        %v1034 = vld [vmem:[%s9] sm:$0x1]
        %v1036 = vlaneseq
        %v1037 = vshrl.u32 %v1036, 7
        %v1038 = vsub.s32 0, %v1037
        %v1039 = vrot.slane %v1034, %v1038
        %v1042 = vsel %vm608, %v794, 0
        %v1045 = vsel %vm608, %v795, 0
        %v1048 = vsel %vm608, %v796, 0
        %v1051 = vsel %vm608, %v797, 0
        %v1054 = vsel %vm608, %v798, 0
        %v1057 = vsel %vm608, %v799, 0
        %v1060 = vsel %vm608, %v800, 0
        %v1063 = vsel %vm608, %v801, 0
        %1065 = vmatprep.subr.mxu0 0.0
        %1066 = vmatpush1.msra.mxu0 %v1030
        %1067 = vmatprep.subr.mxu0 0.0
        %1068 = vmatpush1.msra.mxu0 %v1031
        %1069 = vmatprep.subr.mxu0 0.0
        %1070 = vmatpush1.msra.mxu0 %v1032
        %1071 = vmatprep.subr.mxu0 0.0
        %1072 = vmatpush1.msra.mxu0 %v1033
        %1073 = vmatprep.subr.mxu0 0.0
        %1074 = vmatpush1.msra.mxu0 0.0
        %1075 = vmatprep.subr.mxu0 0.0
        %1076 = vmatpush1.msra.mxu0 0.0
        %1077 = vmatprep.subr.mxu0 0.0
        %1078 = vmatpush1.msra.mxu0 0.0
        %1079 = vmatprep.subr.mxu0 0.0
        %1080 = vmatpush1.msra.mxu0 0.0
        %1081 = vmatprep.subr.mxu0 0.0
        %1082 = vmatpush1.msra.mxu0 0.0
        %1083 = vmatprep.subr.mxu0 0.0
        %1084 = vmatpush1.msra.mxu0 0.0
        %1085 = vmatprep.subr.mxu0 0.0
        %1086 = vmatpush1.msra.mxu0 0.0
        %1087 = vmatprep.subr.mxu0 0.0
        %1088 = vmatpush1.msra.mxu0 0.0
        %1089 = vmatprep.subr.mxu0 0.0
        %1090 = vmatpush1.msra.mxu0 0.0
        %1091 = vmatprep.subr.mxu0 0.0
        %1092 = vmatpush1.msra.mxu0 0.0
        %1093 = vmatprep.subr.mxu0 0.0
        %1094 = vmatpush1.msra.mxu0 0.0
        %1095 = vmatprep.subr.mxu0 0.0
        %1096 = vmatpush1.msra.mxu0 0.0
        %1097 = vmatprep.subr.mxu0 0.0
        %1098 = vmatpush1.msra.mxu0 0.0
        %1099 = vmatprep.subr.mxu0 0.0
        %1100 = vmatpush1.msra.mxu0 0.0
        %1101 = vmatprep.subr.mxu0 0.0
        %1102 = vmatpush1.msra.mxu0 0.0
        %1103 = vmatprep.subr.mxu0 0.0
        %1104 = vmatpush1.msra.mxu0 0.0
        %1105 = vmatprep.subr.mxu0 0.0
        %1106 = vmatpush1.msra.mxu0 0.0
        %1107 = vmatprep.subr.mxu0 0.0
        %1108 = vmatpush1.msra.mxu0 0.0
        %1109 = vmatprep.subr.mxu0 0.0
        %1110 = vmatpush1.msra.mxu0 0.0
        %1111 = vmatprep.subr.mxu0 0.0
        %1112 = vmatpush1.msra.mxu0 0.0
        %1113 = vmatprep.subr.mxu0 0.0
        %1114 = vmatpush1.msra.mxu0 0.0
        %1115 = vmatprep.subr.mxu0 0.0
        %1116 = vmatpush1.msra.mxu0 0.0
        %1117 = vmatprep.subr.mxu0 0.0
        %1118 = vmatpush1.msra.mxu0 0.0
        %1119 = vmatprep.subr.mxu0 0.0
        %1120 = vmatpush1.msra.mxu0 0.0
        %1121 = vmatprep.subr.mxu0 0.0
        %1122 = vmatpush1.msra.mxu0 0.0
        %1123 = vmatprep.subr.mxu0 0.0
        %1124 = vmatpush1.msra.mxu0 0.0
        %1125 = vmatprep.subr.mxu0 0.0
        %1126 = vmatpush1.msra.mxu0 0.0
        %1127 = vmatprep.subr.mxu0 0.0
        %1128 = vmatpush1.msra.mxu0 0.0
        %1129 = vmatprep.mubr.f32.mxu0 0.0
        %1130 = vmatmul.mubr.f32.gmra.mrb[0].mxu0 %v1042
        %v1131 = vpop.f32.mrb[0].mxu0
        %v1132 = vadd.f32 %v1039, %v1131
        %v1133 = vpop.f32.mrb[0].mxu0
        %1134 = vmatprep.mubr.f32.mxu0 0.0
        %1135 = vmatmul.mubr.f32.gmra.mrb[0].mxu0 %v1045
        %v1136 = vpop.f32.mrb[0].mxu0
        %v1137 = vadd.f32 %v1039, %v1136
        %v1138 = vpop.f32.mrb[0].mxu0
        %1139 = vmatprep.mubr.f32.mxu0 0.0
        %1140 = vmatmul.mubr.f32.gmra.mrb[0].mxu0 %v1048
        %v1141 = vpop.f32.mrb[0].mxu0
        %v1142 = vadd.f32 %v1039, %v1141
        %v1143 = vpop.f32.mrb[0].mxu0
        %1144 = vmatprep.mubr.f32.mxu0 0.0
        %1145 = vmatmul.mubr.f32.gmra.mrb[0].mxu0 %v1051
        %v1146 = vpop.f32.mrb[0].mxu0
        %v1147 = vadd.f32 %v1039, %v1146
        %v1148 = vpop.f32.mrb[0].mxu0
        %1149 = vmatprep.mubr.f32.mxu0 0.0
        %1150 = vmatmul.mubr.f32.gmra.mrb[0].mxu0 %v1054
        %v1151 = vpop.f32.mrb[0].mxu0
        %v1152 = vadd.f32 %v1039, %v1151
        %v1153 = vpop.f32.mrb[0].mxu0
        %1154 = vmatprep.mubr.f32.mxu0 0.0
        %1155 = vmatmul.mubr.f32.gmra.mrb[0].mxu0 %v1057
        %v1156 = vpop.f32.mrb[0].mxu0
        %v1157 = vadd.f32 %v1039, %v1156
        %v1158 = vpop.f32.mrb[0].mxu0
        %1159 = vmatprep.mubr.f32.mxu0 0.0
        %1160 = vmatmul.mubr.f32.gmra.mrb[0].mxu0 %v1060
        %v1161 = vpop.f32.mrb[0].mxu0
        %v1162 = vadd.f32 %v1039, %v1161
        %v1163 = vpop.f32.mrb[0].mxu0
        %1164 = vmatprep.mubr.f32.mxu0 0.0
        %1165 = vmatmul.mubr.f32.gmra.mrb[0].mxu0 %v1063
        %v1166 = vpop.f32.mrb[0].mxu0
        %v1167 = vadd.f32 %v1039, %v1166
        %v1168 = vpop.f32.mrb[0].mxu0
        %1169 = vdwg.mxu0
        %v1170 = vld [vmem:[#allocation11] sm:$0xff]
        %v1171 = vld [vmem:[#allocation11 + $0x8] sm:$0xff]
        %v1172 = vld [vmem:[#allocation11 + $0x10] sm:$0xff]
        %v1173 = vld [vmem:[#allocation11 + $0x18] sm:$0xff]
        %v1174 = vld [vmem:[%s10] sm:$0x1]
        %v1176 = vlaneseq
        %v1177 = vshrl.u32 %v1176, 7
        %v1178 = vsub.s32 0, %v1177
        %v1179 = vrot.slane %v1174, %v1178
        %v1182 = vsel %vm608, %v914, 0
        %v1185 = vsel %vm608, %v915, 0
        %v1188 = vsel %vm608, %v916, 0
        %v1191 = vsel %vm608, %v917, 0
        %v1194 = vsel %vm608, %v918, 0
        %v1197 = vsel %vm608, %v919, 0
        %v1200 = vsel %vm608, %v920, 0
        %v1203 = vsel %vm608, %v921, 0
        %1205 = vmatprep.subr.mxu0 0.0
        %1206 = vmatpush1.msra.mxu0 %v1170
        %1207 = vmatprep.subr.mxu0 0.0
        %1208 = vmatpush1.msra.mxu0 %v1171
        %1209 = vmatprep.subr.mxu0 0.0
        %1210 = vmatpush1.msra.mxu0 %v1172
        %1211 = vmatprep.subr.mxu0 0.0
        %1212 = vmatpush1.msra.mxu0 %v1173
        %1213 = vmatprep.subr.mxu0 0.0
        %1214 = vmatpush1.msra.mxu0 0.0
        %1215 = vmatprep.subr.mxu0 0.0
        %1216 = vmatpush1.msra.mxu0 0.0
        %1217 = vmatprep.subr.mxu0 0.0
        %1218 = vmatpush1.msra.mxu0 0.0
        %1219 = vmatprep.subr.mxu0 0.0
        %1220 = vmatpush1.msra.mxu0 0.0
        %1221 = vmatprep.subr.mxu0 0.0
        %1222 = vmatpush1.msra.mxu0 0.0
        %1223 = vmatprep.subr.mxu0 0.0
        %1224 = vmatpush1.msra.mxu0 0.0
        %1225 = vmatprep.subr.mxu0 0.0
        %1226 = vmatpush1.msra.mxu0 0.0
        %1227 = vmatprep.subr.mxu0 0.0
        %1228 = vmatpush1.msra.mxu0 0.0
        %1229 = vmatprep.subr.mxu0 0.0
        %1230 = vmatpush1.msra.mxu0 0.0
        %1231 = vmatprep.subr.mxu0 0.0
        %1232 = vmatpush1.msra.mxu0 0.0
        %1233 = vmatprep.subr.mxu0 0.0
        %1234 = vmatpush1.msra.mxu0 0.0
        %1235 = vmatprep.subr.mxu0 0.0
        %1236 = vmatpush1.msra.mxu0 0.0
        %1237 = vmatprep.subr.mxu0 0.0
        %1238 = vmatpush1.msra.mxu0 0.0
        %1239 = vmatprep.subr.mxu0 0.0
        %1240 = vmatpush1.msra.mxu0 0.0
        %1241 = vmatprep.subr.mxu0 0.0
        %1242 = vmatpush1.msra.mxu0 0.0
        %1243 = vmatprep.subr.mxu0 0.0
        %1244 = vmatpush1.msra.mxu0 0.0
        %1245 = vmatprep.subr.mxu0 0.0
        %1246 = vmatpush1.msra.mxu0 0.0
        %1247 = vmatprep.subr.mxu0 0.0
        %1248 = vmatpush1.msra.mxu0 0.0
        %1249 = vmatprep.subr.mxu0 0.0
        %1250 = vmatpush1.msra.mxu0 0.0
        %1251 = vmatprep.subr.mxu0 0.0
        %1252 = vmatpush1.msra.mxu0 0.0
        %1253 = vmatprep.subr.mxu0 0.0
        %1254 = vmatpush1.msra.mxu0 0.0
        %1255 = vmatprep.subr.mxu0 0.0
        %1256 = vmatpush1.msra.mxu0 0.0
        %1257 = vmatprep.subr.mxu0 0.0
        %1258 = vmatpush1.msra.mxu0 0.0
        %1259 = vmatprep.subr.mxu0 0.0
        %1260 = vmatpush1.msra.mxu0 0.0
        %1261 = vmatprep.subr.mxu0 0.0
        %1262 = vmatpush1.msra.mxu0 0.0
        %1263 = vmatprep.subr.mxu0 0.0
        %1264 = vmatpush1.msra.mxu0 0.0
        %1265 = vmatprep.subr.mxu0 0.0
        %1266 = vmatpush1.msra.mxu0 0.0
        %1267 = vmatprep.subr.mxu0 0.0
        %1268 = vmatpush1.msra.mxu0 0.0
        %1269 = vmatprep.mubr.f32.mxu0 0.0
        %1270 = vmatmul.mubr.f32.gmra.mrb[0].mxu0 %v1182
        %v1271 = vpop.f32.mrb[0].mxu0
        %v1272 = vadd.f32 %v1179, %v1271
        %v1273 = vpop.f32.mrb[0].mxu0
        %1274 = vmatprep.mubr.f32.mxu0 0.0
        %1275 = vmatmul.mubr.f32.gmra.mrb[0].mxu0 %v1185
        %v1276 = vpop.f32.mrb[0].mxu0
        %v1277 = vadd.f32 %v1179, %v1276
        %v1278 = vpop.f32.mrb[0].mxu0
        %1279 = vmatprep.mubr.f32.mxu0 0.0
        %1280 = vmatmul.mubr.f32.gmra.mrb[0].mxu0 %v1188
        %v1281 = vpop.f32.mrb[0].mxu0
        %v1282 = vadd.f32 %v1179, %v1281
        %v1283 = vpop.f32.mrb[0].mxu0
        %1284 = vmatprep.mubr.f32.mxu0 0.0
        %1285 = vmatmul.mubr.f32.gmra.mrb[0].mxu0 %v1191
        %v1286 = vpop.f32.mrb[0].mxu0
        %v1287 = vadd.f32 %v1179, %v1286
        %v1288 = vpop.f32.mrb[0].mxu0
        %1289 = vmatprep.mubr.f32.mxu0 0.0
        %1290 = vmatmul.mubr.f32.gmra.mrb[0].mxu0 %v1194
        %v1291 = vpop.f32.mrb[0].mxu0
        %v1292 = vadd.f32 %v1179, %v1291
        %v1293 = vpop.f32.mrb[0].mxu0
        %1294 = vmatprep.mubr.f32.mxu0 0.0
        %1295 = vmatmul.mubr.f32.gmra.mrb[0].mxu0 %v1197
        %v1296 = vpop.f32.mrb[0].mxu0
        %v1297 = vadd.f32 %v1179, %v1296
        %v1298 = vpop.f32.mrb[0].mxu0
        %1299 = vmatprep.mubr.f32.mxu0 0.0
        %1300 = vmatmul.mubr.f32.gmra.mrb[0].mxu0 %v1200
        %v1301 = vpop.f32.mrb[0].mxu0
        %v1302 = vadd.f32 %v1179, %v1301
        %v1303 = vpop.f32.mrb[0].mxu0
        %1304 = vmatprep.mubr.f32.mxu0 0.0
        %1305 = vmatmul.mubr.f32.gmra.mrb[0].mxu0 %v1203
        %v1306 = vpop.f32.mrb[0].mxu0
        %v1307 = vadd.f32 %v1179, %v1306
        %v1308 = vpop.f32.mrb[0].mxu0
        %1309 = vdwg.mxu0
        %v1310 = vld [vmem:[%s11] sm:$0xff]
        %v1311 = vld [vmem:[%s11 + $0x8] sm:$0xff]
        %v1312 = vld [vmem:[%s11 + $0x10] sm:$0xff]
        %v1313 = vld [vmem:[%s11 + $0x18] sm:$0xff]
        %v1314 = vmul.f32 %v1012, 0.35355338
        %v1315 = vmul.f32 %v1017, 0.35355338
        %v1316 = vmul.f32 %v1022, 0.35355338
        %v1317 = vmul.f32 %v1027, 0.35355338
        %vm1318 = vcmask 64512
        %v1320 = vsel %vm1318, %v1314, 0
        %v1323 = vsel %vm1318, %v1132, 0
        %v1326 = vsel %vm1318, %v1137, 0
        %1328 = vmatprep.subr.mxu0 0.0
        %1329 = vmatpush1.xpose.msra.mxu0 %v1323
        %1330 = vmatprep.subr.mxu0 0.0
        %1331 = vmatpush1.xpose.msra.mxu0 %v1326
        %1332 = vmatprep.subr.mxu0 0.0
        %1333 = vmatpush1.xpose.msra.mxu0 0.0
        %1334 = vmatprep.subr.mxu0 0.0
        %1335 = vmatpush1.xpose.msra.mxu0 0.0
        %1336 = vmatprep.subr.mxu0 0.0
        %1337 = vmatpush1.xpose.msra.mxu0 0.0
        %1338 = vmatprep.subr.mxu0 0.0
        %1339 = vmatpush1.xpose.msra.mxu0 0.0
        %1340 = vmatprep.subr.mxu0 0.0
        %1341 = vmatpush1.xpose.msra.mxu0 0.0
        %1342 = vmatprep.subr.mxu0 0.0
        %1343 = vmatpush1.xpose.msra.mxu0 0.0
        %1344 = vmatprep.subr.mxu0 0.0
        %1345 = vmatpush1.xpose.msra.mxu0 0.0
        %1346 = vmatprep.subr.mxu0 0.0
        %1347 = vmatpush1.xpose.msra.mxu0 0.0
        %1348 = vmatprep.subr.mxu0 0.0
        %1349 = vmatpush1.xpose.msra.mxu0 0.0
        %1350 = vmatprep.subr.mxu0 0.0
        %1351 = vmatpush1.xpose.msra.mxu0 0.0
        %1352 = vmatprep.subr.mxu0 0.0
        %1353 = vmatpush1.xpose.msra.mxu0 0.0
        %1354 = vmatprep.subr.mxu0 0.0
        %1355 = vmatpush1.xpose.msra.mxu0 0.0
        %1356 = vmatprep.subr.mxu0 0.0
        %1357 = vmatpush1.xpose.msra.mxu0 0.0
        %1358 = vmatprep.subr.mxu0 0.0
        %1359 = vmatpush1.xpose.msra.mxu0 0.0
        %1360 = vmatprep.subr.mxu0 0.0
        %1361 = vmatpush1.xpose.msra.mxu0 0.0
        %1362 = vmatprep.subr.mxu0 0.0
        %1363 = vmatpush1.xpose.msra.mxu0 0.0
        %1364 = vmatprep.subr.mxu0 0.0
        %1365 = vmatpush1.xpose.msra.mxu0 0.0
        %1366 = vmatprep.subr.mxu0 0.0
        %1367 = vmatpush1.xpose.msra.mxu0 0.0
        %1368 = vmatprep.subr.mxu0 0.0
        %1369 = vmatpush1.xpose.msra.mxu0 0.0
        %1370 = vmatprep.subr.mxu0 0.0
        %1371 = vmatpush1.xpose.msra.mxu0 0.0
        %1372 = vmatprep.subr.mxu0 0.0
        %1373 = vmatpush1.xpose.msra.mxu0 0.0
        %1374 = vmatprep.subr.mxu0 0.0
        %1375 = vmatpush1.xpose.msra.mxu0 0.0
        %1376 = vmatprep.subr.mxu0 0.0
        %1377 = vmatpush1.xpose.msra.mxu0 0.0
        %1378 = vmatprep.subr.mxu0 0.0
        %1379 = vmatpush1.xpose.msra.mxu0 0.0
        %1380 = vmatprep.subr.mxu0 0.0
        %1381 = vmatpush1.xpose.msra.mxu0 0.0
        %1382 = vmatprep.subr.mxu0 0.0
        %1383 = vmatpush1.xpose.msra.mxu0 0.0
        %1384 = vmatprep.subr.mxu0 0.0
        %1385 = vmatpush1.xpose.msra.mxu0 0.0
        %1386 = vmatprep.subr.mxu0 0.0
        %1387 = vmatpush1.xpose.msra.mxu0 0.0
        %1388 = vmatprep.subr.mxu0 0.0
        %1389 = vmatpush1.xpose.msra.mxu0 0.0
        %1390 = vmatprep.subr.mxu0 0.0
        %1391 = vmatpush1.xpose.msra.mxu0 0.0
        %1392 = vmatprep.mubr.f32.mxu0 0.0
        %1393 = vmatmul.mubr.f32.gmra.mrb[0].mxu0 %v1320
        %v1394 = vpop.f32.mrb[0].mxu0
        %v1395 = vadd.f32 0.0, %v1394
        %v1396 = vpop.f32.mrb[0].mxu0
        %1397 = vdwg.mxu0
        %v1399 = vsel %vm1318, %v1315, 0
        %v1402 = vsel %vm1318, %v1142, 0
        %v1405 = vsel %vm1318, %v1147, 0
        %1407 = vmatprep.subr.mxu0 0.0
        %1408 = vmatpush1.xpose.msra.mxu0 %v1402
        %1409 = vmatprep.subr.mxu0 0.0
        %1410 = vmatpush1.xpose.msra.mxu0 %v1405
        %1411 = vmatprep.subr.mxu0 0.0
        %1412 = vmatpush1.xpose.msra.mxu0 0.0
        %1413 = vmatprep.subr.mxu0 0.0
        %1414 = vmatpush1.xpose.msra.mxu0 0.0
        %1415 = vmatprep.subr.mxu0 0.0
        %1416 = vmatpush1.xpose.msra.mxu0 0.0
        %1417 = vmatprep.subr.mxu0 0.0
        %1418 = vmatpush1.xpose.msra.mxu0 0.0
        %1419 = vmatprep.subr.mxu0 0.0
        %1420 = vmatpush1.xpose.msra.mxu0 0.0
        %1421 = vmatprep.subr.mxu0 0.0
        %1422 = vmatpush1.xpose.msra.mxu0 0.0
        %1423 = vmatprep.subr.mxu0 0.0
        %1424 = vmatpush1.xpose.msra.mxu0 0.0
        %1425 = vmatprep.subr.mxu0 0.0
        %1426 = vmatpush1.xpose.msra.mxu0 0.0
        %1427 = vmatprep.subr.mxu0 0.0
        %1428 = vmatpush1.xpose.msra.mxu0 0.0
        %1429 = vmatprep.subr.mxu0 0.0
        %1430 = vmatpush1.xpose.msra.mxu0 0.0
        %1431 = vmatprep.subr.mxu0 0.0
        %1432 = vmatpush1.xpose.msra.mxu0 0.0
        %1433 = vmatprep.subr.mxu0 0.0
        %1434 = vmatpush1.xpose.msra.mxu0 0.0
        %1435 = vmatprep.subr.mxu0 0.0
        %1436 = vmatpush1.xpose.msra.mxu0 0.0
        %1437 = vmatprep.subr.mxu0 0.0
        %1438 = vmatpush1.xpose.msra.mxu0 0.0
        %1439 = vmatprep.subr.mxu0 0.0
        %1440 = vmatpush1.xpose.msra.mxu0 0.0
        %1441 = vmatprep.subr.mxu0 0.0
        %1442 = vmatpush1.xpose.msra.mxu0 0.0
        %1443 = vmatprep.subr.mxu0 0.0
        %1444 = vmatpush1.xpose.msra.mxu0 0.0
        %1445 = vmatprep.subr.mxu0 0.0
        %1446 = vmatpush1.xpose.msra.mxu0 0.0
        %1447 = vmatprep.subr.mxu0 0.0
        %1448 = vmatpush1.xpose.msra.mxu0 0.0
        %1449 = vmatprep.subr.mxu0 0.0
        %1450 = vmatpush1.xpose.msra.mxu0 0.0
        %1451 = vmatprep.subr.mxu0 0.0
        %1452 = vmatpush1.xpose.msra.mxu0 0.0
        %1453 = vmatprep.subr.mxu0 0.0
        %1454 = vmatpush1.xpose.msra.mxu0 0.0
        %1455 = vmatprep.subr.mxu0 0.0
        %1456 = vmatpush1.xpose.msra.mxu0 0.0
        %1457 = vmatprep.subr.mxu0 0.0
        %1458 = vmatpush1.xpose.msra.mxu0 0.0
        %1459 = vmatprep.subr.mxu0 0.0
        %1460 = vmatpush1.xpose.msra.mxu0 0.0
        %1461 = vmatprep.subr.mxu0 0.0
        %1462 = vmatpush1.xpose.msra.mxu0 0.0
        %1463 = vmatprep.subr.mxu0 0.0
        %1464 = vmatpush1.xpose.msra.mxu0 0.0
        %1465 = vmatprep.subr.mxu0 0.0
        %1466 = vmatpush1.xpose.msra.mxu0 0.0
        %1467 = vmatprep.subr.mxu0 0.0
        %1468 = vmatpush1.xpose.msra.mxu0 0.0
        %1469 = vmatprep.subr.mxu0 0.0
        %1470 = vmatpush1.xpose.msra.mxu0 0.0
        %1471 = vmatprep.mubr.f32.mxu0 0.0
        %1472 = vmatmul.mubr.f32.gmra.mrb[0].mxu0 %v1399
        %v1473 = vpop.f32.mrb[0].mxu0
        %v1474 = vadd.f32 0.0, %v1473
        %v1475 = vpop.f32.mrb[0].mxu0
        %1476 = vdwg.mxu0
        %v1478 = vsel %vm1318, %v1316, 0
        %v1481 = vsel %vm1318, %v1152, 0
        %v1484 = vsel %vm1318, %v1157, 0
        %1486 = vmatprep.subr.mxu0 0.0
        %1487 = vmatpush1.xpose.msra.mxu0 %v1481
        %1488 = vmatprep.subr.mxu0 0.0
        %1489 = vmatpush1.xpose.msra.mxu0 %v1484
        %1490 = vmatprep.subr.mxu0 0.0
        %1491 = vmatpush1.xpose.msra.mxu0 0.0
        %1492 = vmatprep.subr.mxu0 0.0
        %1493 = vmatpush1.xpose.msra.mxu0 0.0
        %1494 = vmatprep.subr.mxu0 0.0
        %1495 = vmatpush1.xpose.msra.mxu0 0.0
        %1496 = vmatprep.subr.mxu0 0.0
        %1497 = vmatpush1.xpose.msra.mxu0 0.0
        %1498 = vmatprep.subr.mxu0 0.0
        %1499 = vmatpush1.xpose.msra.mxu0 0.0
        %1500 = vmatprep.subr.mxu0 0.0
        %1501 = vmatpush1.xpose.msra.mxu0 0.0
        %1502 = vmatprep.subr.mxu0 0.0
        %1503 = vmatpush1.xpose.msra.mxu0 0.0
        %1504 = vmatprep.subr.mxu0 0.0
        %1505 = vmatpush1.xpose.msra.mxu0 0.0
        %1506 = vmatprep.subr.mxu0 0.0
        %1507 = vmatpush1.xpose.msra.mxu0 0.0
        %1508 = vmatprep.subr.mxu0 0.0
        %1509 = vmatpush1.xpose.msra.mxu0 0.0
        %1510 = vmatprep.subr.mxu0 0.0
        %1511 = vmatpush1.xpose.msra.mxu0 0.0
        %1512 = vmatprep.subr.mxu0 0.0
        %1513 = vmatpush1.xpose.msra.mxu0 0.0
        %1514 = vmatprep.subr.mxu0 0.0
        %1515 = vmatpush1.xpose.msra.mxu0 0.0
        %1516 = vmatprep.subr.mxu0 0.0
        %1517 = vmatpush1.xpose.msra.mxu0 0.0
        %1518 = vmatprep.subr.mxu0 0.0
        %1519 = vmatpush1.xpose.msra.mxu0 0.0
        %1520 = vmatprep.subr.mxu0 0.0
        %1521 = vmatpush1.xpose.msra.mxu0 0.0
        %1522 = vmatprep.subr.mxu0 0.0
        %1523 = vmatpush1.xpose.msra.mxu0 0.0
        %1524 = vmatprep.subr.mxu0 0.0
        %1525 = vmatpush1.xpose.msra.mxu0 0.0
        %1526 = vmatprep.subr.mxu0 0.0
        %1527 = vmatpush1.xpose.msra.mxu0 0.0
        %1528 = vmatprep.subr.mxu0 0.0
        %1529 = vmatpush1.xpose.msra.mxu0 0.0
        %1530 = vmatprep.subr.mxu0 0.0
        %1531 = vmatpush1.xpose.msra.mxu0 0.0
        %1532 = vmatprep.subr.mxu0 0.0
        %1533 = vmatpush1.xpose.msra.mxu0 0.0
        %1534 = vmatprep.subr.mxu0 0.0
        %1535 = vmatpush1.xpose.msra.mxu0 0.0
        %1536 = vmatprep.subr.mxu0 0.0
        %1537 = vmatpush1.xpose.msra.mxu0 0.0
        %1538 = vmatprep.subr.mxu0 0.0
        %1539 = vmatpush1.xpose.msra.mxu0 0.0
        %1540 = vmatprep.subr.mxu0 0.0
        %1541 = vmatpush1.xpose.msra.mxu0 0.0
        %1542 = vmatprep.subr.mxu0 0.0
        %1543 = vmatpush1.xpose.msra.mxu0 0.0
        %1544 = vmatprep.subr.mxu0 0.0
        %1545 = vmatpush1.xpose.msra.mxu0 0.0
        %1546 = vmatprep.subr.mxu0 0.0
        %1547 = vmatpush1.xpose.msra.mxu0 0.0
        %1548 = vmatprep.subr.mxu0 0.0
        %1549 = vmatpush1.xpose.msra.mxu0 0.0
        %1550 = vmatprep.mubr.f32.mxu0 0.0
        %1551 = vmatmul.mubr.f32.gmra.mrb[0].mxu0 %v1478
        %v1552 = vpop.f32.mrb[0].mxu0
        %v1553 = vadd.f32 0.0, %v1552
        %v1554 = vpop.f32.mrb[0].mxu0
        %1555 = vdwg.mxu0
        %v1557 = vsel %vm1318, %v1317, 0
        %v1560 = vsel %vm1318, %v1162, 0
        %v1563 = vsel %vm1318, %v1167, 0
        %1565 = vmatprep.subr.mxu0 0.0
        %1566 = vmatpush1.xpose.msra.mxu0 %v1560
        %1567 = vmatprep.subr.mxu0 0.0
        %1568 = vmatpush1.xpose.msra.mxu0 %v1563
        %1569 = vmatprep.subr.mxu0 0.0
        %1570 = vmatpush1.xpose.msra.mxu0 0.0
        %1571 = vmatprep.subr.mxu0 0.0
        %1572 = vmatpush1.xpose.msra.mxu0 0.0
        %1573 = vmatprep.subr.mxu0 0.0
        %1574 = vmatpush1.xpose.msra.mxu0 0.0
        %1575 = vmatprep.subr.mxu0 0.0
        %1576 = vmatpush1.xpose.msra.mxu0 0.0
        %1577 = vmatprep.subr.mxu0 0.0
        %1578 = vmatpush1.xpose.msra.mxu0 0.0
        %1579 = vmatprep.subr.mxu0 0.0
        %1580 = vmatpush1.xpose.msra.mxu0 0.0
        %1581 = vmatprep.subr.mxu0 0.0
        %1582 = vmatpush1.xpose.msra.mxu0 0.0
        %1583 = vmatprep.subr.mxu0 0.0
        %1584 = vmatpush1.xpose.msra.mxu0 0.0
        %1585 = vmatprep.subr.mxu0 0.0
        %1586 = vmatpush1.xpose.msra.mxu0 0.0
        %1587 = vmatprep.subr.mxu0 0.0
        %1588 = vmatpush1.xpose.msra.mxu0 0.0
        %1589 = vmatprep.subr.mxu0 0.0
        %1590 = vmatpush1.xpose.msra.mxu0 0.0
        %1591 = vmatprep.subr.mxu0 0.0
        %1592 = vmatpush1.xpose.msra.mxu0 0.0
        %1593 = vmatprep.subr.mxu0 0.0
        %1594 = vmatpush1.xpose.msra.mxu0 0.0
        %1595 = vmatprep.subr.mxu0 0.0
        %1596 = vmatpush1.xpose.msra.mxu0 0.0
        %1597 = vmatprep.subr.mxu0 0.0
        %1598 = vmatpush1.xpose.msra.mxu0 0.0
        %1599 = vmatprep.subr.mxu0 0.0
        %1600 = vmatpush1.xpose.msra.mxu0 0.0
        %1601 = vmatprep.subr.mxu0 0.0
        %1602 = vmatpush1.xpose.msra.mxu0 0.0
        %1603 = vmatprep.subr.mxu0 0.0
        %1604 = vmatpush1.xpose.msra.mxu0 0.0
        %1605 = vmatprep.subr.mxu0 0.0
        %1606 = vmatpush1.xpose.msra.mxu0 0.0
        %1607 = vmatprep.subr.mxu0 0.0
        %1608 = vmatpush1.xpose.msra.mxu0 0.0
        %1609 = vmatprep.subr.mxu0 0.0
        %1610 = vmatpush1.xpose.msra.mxu0 0.0
        %1611 = vmatprep.subr.mxu0 0.0
        %1612 = vmatpush1.xpose.msra.mxu0 0.0
        %1613 = vmatprep.subr.mxu0 0.0
        %1614 = vmatpush1.xpose.msra.mxu0 0.0
        %1615 = vmatprep.subr.mxu0 0.0
        %1616 = vmatpush1.xpose.msra.mxu0 0.0
        %1617 = vmatprep.subr.mxu0 0.0
        %1618 = vmatpush1.xpose.msra.mxu0 0.0
        %1619 = vmatprep.subr.mxu0 0.0
        %1620 = vmatpush1.xpose.msra.mxu0 0.0
        %1621 = vmatprep.subr.mxu0 0.0
        %1622 = vmatpush1.xpose.msra.mxu0 0.0
        %1623 = vmatprep.subr.mxu0 0.0
        %1624 = vmatpush1.xpose.msra.mxu0 0.0
        %1625 = vmatprep.subr.mxu0 0.0
        %1626 = vmatpush1.xpose.msra.mxu0 0.0
        %1627 = vmatprep.subr.mxu0 0.0
        %1628 = vmatpush1.xpose.msra.mxu0 0.0
        %1629 = vmatprep.mubr.f32.mxu0 0.0
        %1630 = vmatmul.mubr.f32.gmra.mrb[0].mxu0 %v1557
        %v1631 = vpop.f32.mrb[0].mxu0
        %v1632 = vadd.f32 0.0, %v1631
        %v1633 = vpop.f32.mrb[0].mxu0
        %1634 = vdwg.mxu0
        %vm1635 = vcmask 130048
        %v1636 = vsel %vm1635, %v1395, -inf
        %1637 = vmax.xlane.f32.xlu0 %v1636
        %v1638 = vpop.xlane.xlu0 %1637
        %v1639 = vsel %vm1635, %v1474, -inf
        %1640 = vmax.xlane.f32.xlu0 %v1639
        %v1641 = vpop.xlane.xlu0 %1640
        %v1642 = vsel %vm1635, %v1553, -inf
        %1643 = vmax.xlane.f32.xlu0 %v1642
        %v1644 = vpop.xlane.xlu0 %1643
        %v1645 = vsel %vm1635, %v1632, -inf
        %1646 = vmax.xlane.f32.xlu0 %v1645
        %v1647 = vpop.xlane.xlu0 %1646
        %v1648 = vsub.f32 %v1395, %v1638
        %v1649 = vsub.f32 %v1474, %v1641
        %v1650 = vsub.f32 %v1553, %v1644
        %v1651 = vsub.f32 %v1632, %v1647
        %v1652 = vmul.f32 %v1648, 1.442695
        %v1653 = vpow.pop %v1652
        %v1654 = vmul.f32 %v1649, 1.442695
        %v1655 = vpow.pop %v1654
        %v1656 = vmul.f32 %v1650, 1.442695
        %v1657 = vpow.pop %v1656
        %v1658 = vmul.f32 %v1651, 1.442695
        %v1659 = vpow.pop %v1658
        %v1660 = vsel %vm1635, %v1653, 0.0
        %1661 = vadd.xlane.f32.xlu0 %v1660
        %v1662 = vpop.xlane.xlu0 %1661
        %v1663 = vsel %vm1635, %v1655, 0.0
        %1664 = vadd.xlane.f32.xlu0 %v1663
        %v1665 = vpop.xlane.xlu0 %1664
        %v1666 = vsel %vm1635, %v1657, 0.0
        %1667 = vadd.xlane.f32.xlu0 %v1666
        %v1668 = vpop.xlane.xlu0 %1667
        %v1669 = vsel %vm1635, %v1659, 0.0
        %1670 = vadd.xlane.f32.xlu0 %v1669
        %v1671 = vpop.xlane.xlu0 %1670
        %v1672 = vrcp.pop %v1662
        %v1673 = vrcp.pop %v1665
        %v1674 = vrcp.pop %v1668
        %v1675 = vrcp.pop %v1671
        %v1676 = vmul.f32 %v1653, %v1672
        %v1677 = vmul.f32 %v1655, %v1673
        %v1678 = vmul.f32 %v1657, %v1674
        %v1679 = vmul.f32 %v1659, %v1675
        %v1681 = vsel %vm1635, %v1676, 0
        %1683 = vmatprep.subr.mxu0 0.0
        %1684 = vmatpush1.msra.mxu0 %v1272
        %1685 = vmatprep.subr.mxu0 0.0
        %1686 = vmatpush1.msra.mxu0 %v1277
        %1687 = vmatprep.subr.mxu0 0.0
        %1688 = vmatpush1.msra.mxu0 0.0
        %1689 = vmatprep.subr.mxu0 0.0
        %1690 = vmatpush1.msra.mxu0 0.0
        %1691 = vmatprep.subr.mxu0 0.0
        %1692 = vmatpush1.msra.mxu0 0.0
        %1693 = vmatprep.subr.mxu0 0.0
        %1694 = vmatpush1.msra.mxu0 0.0
        %1695 = vmatprep.subr.mxu0 0.0
        %1696 = vmatpush1.msra.mxu0 0.0
        %1697 = vmatprep.subr.mxu0 0.0
        %1698 = vmatpush1.msra.mxu0 0.0
        %1699 = vmatprep.subr.mxu0 0.0
        %1700 = vmatpush1.msra.mxu0 0.0
        %1701 = vmatprep.subr.mxu0 0.0
        %1702 = vmatpush1.msra.mxu0 0.0
        %1703 = vmatprep.subr.mxu0 0.0
        %1704 = vmatpush1.msra.mxu0 0.0
        %1705 = vmatprep.subr.mxu0 0.0
        %1706 = vmatpush1.msra.mxu0 0.0
        %1707 = vmatprep.subr.mxu0 0.0
        %1708 = vmatpush1.msra.mxu0 0.0
        %1709 = vmatprep.subr.mxu0 0.0
        %1710 = vmatpush1.msra.mxu0 0.0
        %1711 = vmatprep.subr.mxu0 0.0
        %1712 = vmatpush1.msra.mxu0 0.0
        %1713 = vmatprep.subr.mxu0 0.0
        %1714 = vmatpush1.msra.mxu0 0.0
        %1715 = vmatprep.subr.mxu0 0.0
        %1716 = vmatpush1.msra.mxu0 0.0
        %1717 = vmatprep.subr.mxu0 0.0
        %1718 = vmatpush1.msra.mxu0 0.0
        %1719 = vmatprep.subr.mxu0 0.0
        %1720 = vmatpush1.msra.mxu0 0.0
        %1721 = vmatprep.subr.mxu0 0.0
        %1722 = vmatpush1.msra.mxu0 0.0
        %1723 = vmatprep.subr.mxu0 0.0
        %1724 = vmatpush1.msra.mxu0 0.0
        %1725 = vmatprep.subr.mxu0 0.0
        %1726 = vmatpush1.msra.mxu0 0.0
        %1727 = vmatprep.subr.mxu0 0.0
        %1728 = vmatpush1.msra.mxu0 0.0
        %1729 = vmatprep.subr.mxu0 0.0
        %1730 = vmatpush1.msra.mxu0 0.0
        %1731 = vmatprep.subr.mxu0 0.0
        %1732 = vmatpush1.msra.mxu0 0.0
        %1733 = vmatprep.subr.mxu0 0.0
        %1734 = vmatpush1.msra.mxu0 0.0
        %1735 = vmatprep.subr.mxu0 0.0
        %1736 = vmatpush1.msra.mxu0 0.0
        %1737 = vmatprep.subr.mxu0 0.0
        %1738 = vmatpush1.msra.mxu0 0.0
        %1739 = vmatprep.subr.mxu0 0.0
        %1740 = vmatpush1.msra.mxu0 0.0
        %1741 = vmatprep.subr.mxu0 0.0
        %1742 = vmatpush1.msra.mxu0 0.0
        %1743 = vmatprep.subr.mxu0 0.0
        %1744 = vmatpush1.msra.mxu0 0.0
        %1745 = vmatprep.subr.mxu0 0.0
        %1746 = vmatpush1.msra.mxu0 0.0
        %1747 = vmatprep.mubr.f32.mxu0 0.0
        %1748 = vmatmul.mubr.f32.gmra.mrb[0].mxu0 %v1681
        %v1749 = vpop.f32.mrb[0].mxu0
        %v1750 = vadd.f32 0.0, %v1749
        %v1751 = vpop.f32.mrb[0].mxu0
        %1752 = vdwg.mxu0
        %v1754 = vsel %vm1635, %v1677, 0
        %1756 = vmatprep.subr.mxu0 0.0
        %1757 = vmatpush1.msra.mxu0 %v1282
        %1758 = vmatprep.subr.mxu0 0.0
        %1759 = vmatpush1.msra.mxu0 %v1287
        %1760 = vmatprep.subr.mxu0 0.0
        %1761 = vmatpush1.msra.mxu0 0.0
        %1762 = vmatprep.subr.mxu0 0.0
        %1763 = vmatpush1.msra.mxu0 0.0
        %1764 = vmatprep.subr.mxu0 0.0
        %1765 = vmatpush1.msra.mxu0 0.0
        %1766 = vmatprep.subr.mxu0 0.0
        %1767 = vmatpush1.msra.mxu0 0.0
        %1768 = vmatprep.subr.mxu0 0.0
        %1769 = vmatpush1.msra.mxu0 0.0
        %1770 = vmatprep.subr.mxu0 0.0
        %1771 = vmatpush1.msra.mxu0 0.0
        %1772 = vmatprep.subr.mxu0 0.0
        %1773 = vmatpush1.msra.mxu0 0.0
        %1774 = vmatprep.subr.mxu0 0.0
        %1775 = vmatpush1.msra.mxu0 0.0
        %1776 = vmatprep.subr.mxu0 0.0
        %1777 = vmatpush1.msra.mxu0 0.0
        %1778 = vmatprep.subr.mxu0 0.0
        %1779 = vmatpush1.msra.mxu0 0.0
        %1780 = vmatprep.subr.mxu0 0.0
        %1781 = vmatpush1.msra.mxu0 0.0
        %1782 = vmatprep.subr.mxu0 0.0
        %1783 = vmatpush1.msra.mxu0 0.0
        %1784 = vmatprep.subr.mxu0 0.0
        %1785 = vmatpush1.msra.mxu0 0.0
        %1786 = vmatprep.subr.mxu0 0.0
        %1787 = vmatpush1.msra.mxu0 0.0
        %1788 = vmatprep.subr.mxu0 0.0
        %1789 = vmatpush1.msra.mxu0 0.0
        %1790 = vmatprep.subr.mxu0 0.0
        %1791 = vmatpush1.msra.mxu0 0.0
        %1792 = vmatprep.subr.mxu0 0.0
        %1793 = vmatpush1.msra.mxu0 0.0
        %1794 = vmatprep.subr.mxu0 0.0
        %1795 = vmatpush1.msra.mxu0 0.0
        %1796 = vmatprep.subr.mxu0 0.0
        %1797 = vmatpush1.msra.mxu0 0.0
        %1798 = vmatprep.subr.mxu0 0.0
        %1799 = vmatpush1.msra.mxu0 0.0
        %1800 = vmatprep.subr.mxu0 0.0
        %1801 = vmatpush1.msra.mxu0 0.0
        %1802 = vmatprep.subr.mxu0 0.0
        %1803 = vmatpush1.msra.mxu0 0.0
        %1804 = vmatprep.subr.mxu0 0.0
        %1805 = vmatpush1.msra.mxu0 0.0
        %1806 = vmatprep.subr.mxu0 0.0
        %1807 = vmatpush1.msra.mxu0 0.0
        %1808 = vmatprep.subr.mxu0 0.0
        %1809 = vmatpush1.msra.mxu0 0.0
        %1810 = vmatprep.subr.mxu0 0.0
        %1811 = vmatpush1.msra.mxu0 0.0
        %1812 = vmatprep.subr.mxu0 0.0
        %1813 = vmatpush1.msra.mxu0 0.0
        %1814 = vmatprep.subr.mxu0 0.0
        %1815 = vmatpush1.msra.mxu0 0.0
        %1816 = vmatprep.subr.mxu0 0.0
        %1817 = vmatpush1.msra.mxu0 0.0
        %1818 = vmatprep.subr.mxu0 0.0
        %1819 = vmatpush1.msra.mxu0 0.0
        %1820 = vmatprep.mubr.f32.mxu0 0.0
        %1821 = vmatmul.mubr.f32.gmra.mrb[0].mxu0 %v1754
        %v1822 = vpop.f32.mrb[0].mxu0
        %v1823 = vadd.f32 0.0, %v1822
        %v1824 = vpop.f32.mrb[0].mxu0
        %1825 = vdwg.mxu0
        %v1827 = vsel %vm1635, %v1678, 0
        %1829 = vmatprep.subr.mxu0 0.0
        %1830 = vmatpush1.msra.mxu0 %v1292
        %1831 = vmatprep.subr.mxu0 0.0
        %1832 = vmatpush1.msra.mxu0 %v1297
        %1833 = vmatprep.subr.mxu0 0.0
        %1834 = vmatpush1.msra.mxu0 0.0
        %1835 = vmatprep.subr.mxu0 0.0
        %1836 = vmatpush1.msra.mxu0 0.0
        %1837 = vmatprep.subr.mxu0 0.0
        %1838 = vmatpush1.msra.mxu0 0.0
        %1839 = vmatprep.subr.mxu0 0.0
        %1840 = vmatpush1.msra.mxu0 0.0
        %1841 = vmatprep.subr.mxu0 0.0
        %1842 = vmatpush1.msra.mxu0 0.0
        %1843 = vmatprep.subr.mxu0 0.0
        %1844 = vmatpush1.msra.mxu0 0.0
        %1845 = vmatprep.subr.mxu0 0.0
        %1846 = vmatpush1.msra.mxu0 0.0
        %1847 = vmatprep.subr.mxu0 0.0
        %1848 = vmatpush1.msra.mxu0 0.0
        %1849 = vmatprep.subr.mxu0 0.0
        %1850 = vmatpush1.msra.mxu0 0.0
        %1851 = vmatprep.subr.mxu0 0.0
        %1852 = vmatpush1.msra.mxu0 0.0
        %1853 = vmatprep.subr.mxu0 0.0
        %1854 = vmatpush1.msra.mxu0 0.0
        %1855 = vmatprep.subr.mxu0 0.0
        %1856 = vmatpush1.msra.mxu0 0.0
        %1857 = vmatprep.subr.mxu0 0.0
        %1858 = vmatpush1.msra.mxu0 0.0
        %1859 = vmatprep.subr.mxu0 0.0
        %1860 = vmatpush1.msra.mxu0 0.0
        %1861 = vmatprep.subr.mxu0 0.0
        %1862 = vmatpush1.msra.mxu0 0.0
        %1863 = vmatprep.subr.mxu0 0.0
        %1864 = vmatpush1.msra.mxu0 0.0
        %1865 = vmatprep.subr.mxu0 0.0
        %1866 = vmatpush1.msra.mxu0 0.0
        %1867 = vmatprep.subr.mxu0 0.0
        %1868 = vmatpush1.msra.mxu0 0.0
        %1869 = vmatprep.subr.mxu0 0.0
        %1870 = vmatpush1.msra.mxu0 0.0
        %1871 = vmatprep.subr.mxu0 0.0
        %1872 = vmatpush1.msra.mxu0 0.0
        %1873 = vmatprep.subr.mxu0 0.0
        %1874 = vmatpush1.msra.mxu0 0.0
        %1875 = vmatprep.subr.mxu0 0.0
        %1876 = vmatpush1.msra.mxu0 0.0
        %1877 = vmatprep.subr.mxu0 0.0
        %1878 = vmatpush1.msra.mxu0 0.0
        %1879 = vmatprep.subr.mxu0 0.0
        %1880 = vmatpush1.msra.mxu0 0.0
        %1881 = vmatprep.subr.mxu0 0.0
        %1882 = vmatpush1.msra.mxu0 0.0
        %1883 = vmatprep.subr.mxu0 0.0
        %1884 = vmatpush1.msra.mxu0 0.0
        %1885 = vmatprep.subr.mxu0 0.0
        %1886 = vmatpush1.msra.mxu0 0.0
        %1887 = vmatprep.subr.mxu0 0.0
        %1888 = vmatpush1.msra.mxu0 0.0
        %1889 = vmatprep.subr.mxu0 0.0
        %1890 = vmatpush1.msra.mxu0 0.0
        %1891 = vmatprep.subr.mxu0 0.0
        %1892 = vmatpush1.msra.mxu0 0.0
        %1893 = vmatprep.mubr.f32.mxu0 0.0
        %1894 = vmatmul.mubr.f32.gmra.mrb[0].mxu0 %v1827
        %v1895 = vpop.f32.mrb[0].mxu0
        %v1896 = vadd.f32 0.0, %v1895
        %v1897 = vpop.f32.mrb[0].mxu0
        %1898 = vdwg.mxu0
        %v1900 = vsel %vm1635, %v1679, 0
        %1902 = vmatprep.subr.mxu0 0.0
        %1903 = vmatpush1.msra.mxu0 %v1302
        %1904 = vmatprep.subr.mxu0 0.0
        %1905 = vmatpush1.msra.mxu0 %v1307
        %1906 = vmatprep.subr.mxu0 0.0
        %1907 = vmatpush1.msra.mxu0 0.0
        %1908 = vmatprep.subr.mxu0 0.0
        %1909 = vmatpush1.msra.mxu0 0.0
        %1910 = vmatprep.subr.mxu0 0.0
        %1911 = vmatpush1.msra.mxu0 0.0
        %1912 = vmatprep.subr.mxu0 0.0
        %1913 = vmatpush1.msra.mxu0 0.0
        %1914 = vmatprep.subr.mxu0 0.0
        %1915 = vmatpush1.msra.mxu0 0.0
        %1916 = vmatprep.subr.mxu0 0.0
        %1917 = vmatpush1.msra.mxu0 0.0
        %1918 = vmatprep.subr.mxu0 0.0
        %1919 = vmatpush1.msra.mxu0 0.0
        %1920 = vmatprep.subr.mxu0 0.0
        %1921 = vmatpush1.msra.mxu0 0.0
        %1922 = vmatprep.subr.mxu0 0.0
        %1923 = vmatpush1.msra.mxu0 0.0
        %1924 = vmatprep.subr.mxu0 0.0
        %1925 = vmatpush1.msra.mxu0 0.0
        %1926 = vmatprep.subr.mxu0 0.0
        %1927 = vmatpush1.msra.mxu0 0.0
        %1928 = vmatprep.subr.mxu0 0.0
        %1929 = vmatpush1.msra.mxu0 0.0
        %1930 = vmatprep.subr.mxu0 0.0
        %1931 = vmatpush1.msra.mxu0 0.0
        %1932 = vmatprep.subr.mxu0 0.0
        %1933 = vmatpush1.msra.mxu0 0.0
        %1934 = vmatprep.subr.mxu0 0.0
        %1935 = vmatpush1.msra.mxu0 0.0
        %1936 = vmatprep.subr.mxu0 0.0
        %1937 = vmatpush1.msra.mxu0 0.0
        %1938 = vmatprep.subr.mxu0 0.0
        %1939 = vmatpush1.msra.mxu0 0.0
        %1940 = vmatprep.subr.mxu0 0.0
        %1941 = vmatpush1.msra.mxu0 0.0
        %1942 = vmatprep.subr.mxu0 0.0
        %1943 = vmatpush1.msra.mxu0 0.0
        %1944 = vmatprep.subr.mxu0 0.0
        %1945 = vmatpush1.msra.mxu0 0.0
        %1946 = vmatprep.subr.mxu0 0.0
        %1947 = vmatpush1.msra.mxu0 0.0
        %1948 = vmatprep.subr.mxu0 0.0
        %1949 = vmatpush1.msra.mxu0 0.0
        %1950 = vmatprep.subr.mxu0 0.0
        %1951 = vmatpush1.msra.mxu0 0.0
        %1952 = vmatprep.subr.mxu0 0.0
        %1953 = vmatpush1.msra.mxu0 0.0
        %1954 = vmatprep.subr.mxu0 0.0
        %1955 = vmatpush1.msra.mxu0 0.0
        %1956 = vmatprep.subr.mxu0 0.0
        %1957 = vmatpush1.msra.mxu0 0.0
        %1958 = vmatprep.subr.mxu0 0.0
        %1959 = vmatpush1.msra.mxu0 0.0
        %1960 = vmatprep.subr.mxu0 0.0
        %1961 = vmatpush1.msra.mxu0 0.0
        %1962 = vmatprep.subr.mxu0 0.0
        %1963 = vmatpush1.msra.mxu0 0.0
        %1964 = vmatprep.subr.mxu0 0.0
        %1965 = vmatpush1.msra.mxu0 0.0
        %1966 = vmatprep.mubr.f32.mxu0 0.0
        %1967 = vmatmul.mubr.f32.gmra.mrb[0].mxu0 %v1900
        %v1968 = vpop.f32.mrb[0].mxu0
        %v1969 = vadd.f32 0.0, %v1968
        %v1970 = vpop.f32.mrb[0].mxu0
        %1971 = vdwg.mxu0
        %1972 = vrot.lane.b32.xlu0 %v1314, 120
        %v1973 = vpop.permute.xlu0 %1972
        %1974 = vrot.lane.b32.xlu0 %v1132, 120
        %v1975 = vpop.permute.xlu0 %1974
        %1976 = vrot.lane.b32.xlu0 %v1137, 120
        %v1977 = vpop.permute.xlu0 %1976
        %v1978 = vsel %vm1318, %v1973, 0
        %v1980 = vsel %vm1318, %v1975, 0
        %v1982 = vsel %vm1318, %v1977, 0
        %1984 = vmatprep.subr.mxu0 0.0
        %1985 = vmatpush1.xpose.msra.mxu0 %v1980
        %1986 = vmatprep.subr.mxu0 0.0
        %1987 = vmatpush1.xpose.msra.mxu0 %v1982
        %1988 = vmatprep.subr.mxu0 0.0
        %1989 = vmatpush1.xpose.msra.mxu0 0.0
        %1990 = vmatprep.subr.mxu0 0.0
        %1991 = vmatpush1.xpose.msra.mxu0 0.0
        %1992 = vmatprep.subr.mxu0 0.0
        %1993 = vmatpush1.xpose.msra.mxu0 0.0
        %1994 = vmatprep.subr.mxu0 0.0
        %1995 = vmatpush1.xpose.msra.mxu0 0.0
        %1996 = vmatprep.subr.mxu0 0.0
        %1997 = vmatpush1.xpose.msra.mxu0 0.0
        %1998 = vmatprep.subr.mxu0 0.0
        %1999 = vmatpush1.xpose.msra.mxu0 0.0
        %2000 = vmatprep.subr.mxu0 0.0
        %2001 = vmatpush1.xpose.msra.mxu0 0.0
        %2002 = vmatprep.subr.mxu0 0.0
        %2003 = vmatpush1.xpose.msra.mxu0 0.0
        %2004 = vmatprep.subr.mxu0 0.0
        %2005 = vmatpush1.xpose.msra.mxu0 0.0
        %2006 = vmatprep.subr.mxu0 0.0
        %2007 = vmatpush1.xpose.msra.mxu0 0.0
        %2008 = vmatprep.subr.mxu0 0.0
        %2009 = vmatpush1.xpose.msra.mxu0 0.0
        %2010 = vmatprep.subr.mxu0 0.0
        %2011 = vmatpush1.xpose.msra.mxu0 0.0
        %2012 = vmatprep.subr.mxu0 0.0
        %2013 = vmatpush1.xpose.msra.mxu0 0.0
        %2014 = vmatprep.subr.mxu0 0.0
        %2015 = vmatpush1.xpose.msra.mxu0 0.0
        %2016 = vmatprep.subr.mxu0 0.0
        %2017 = vmatpush1.xpose.msra.mxu0 0.0
        %2018 = vmatprep.subr.mxu0 0.0
        %2019 = vmatpush1.xpose.msra.mxu0 0.0
        %2020 = vmatprep.subr.mxu0 0.0
        %2021 = vmatpush1.xpose.msra.mxu0 0.0
        %2022 = vmatprep.subr.mxu0 0.0
        %2023 = vmatpush1.xpose.msra.mxu0 0.0
        %2024 = vmatprep.subr.mxu0 0.0
        %2025 = vmatpush1.xpose.msra.mxu0 0.0
        %2026 = vmatprep.subr.mxu0 0.0
        %2027 = vmatpush1.xpose.msra.mxu0 0.0
        %2028 = vmatprep.subr.mxu0 0.0
        %2029 = vmatpush1.xpose.msra.mxu0 0.0
        %2030 = vmatprep.subr.mxu0 0.0
        %2031 = vmatpush1.xpose.msra.mxu0 0.0
        %2032 = vmatprep.subr.mxu0 0.0
        %2033 = vmatpush1.xpose.msra.mxu0 0.0
        %2034 = vmatprep.subr.mxu0 0.0
        %2035 = vmatpush1.xpose.msra.mxu0 0.0
        %2036 = vmatprep.subr.mxu0 0.0
        %2037 = vmatpush1.xpose.msra.mxu0 0.0
        %2038 = vmatprep.subr.mxu0 0.0
        %2039 = vmatpush1.xpose.msra.mxu0 0.0
        %2040 = vmatprep.subr.mxu0 0.0
        %2041 = vmatpush1.xpose.msra.mxu0 0.0
        %2042 = vmatprep.subr.mxu0 0.0
        %2043 = vmatpush1.xpose.msra.mxu0 0.0
        %2044 = vmatprep.subr.mxu0 0.0
        %2045 = vmatpush1.xpose.msra.mxu0 0.0
        %2046 = vmatprep.subr.mxu0 0.0
        %2047 = vmatpush1.xpose.msra.mxu0 0.0
        %2048 = vmatprep.mubr.f32.mxu0 0.0
        %2049 = vmatmul.mubr.f32.gmra.mrb[0].mxu0 %v1978
        %v2050 = vpop.f32.mrb[0].mxu0
        %v2051 = vadd.f32 0.0, %v2050
        %v2052 = vpop.f32.mrb[0].mxu0
        %2053 = vdwg.mxu0
        %2054 = vrot.lane.b32.xlu0 %v1315, 120
        %v2055 = vpop.permute.xlu0 %2054
        %2056 = vrot.lane.b32.xlu0 %v1142, 120
        %v2057 = vpop.permute.xlu0 %2056
        %2058 = vrot.lane.b32.xlu0 %v1147, 120
        %v2059 = vpop.permute.xlu0 %2058
        %v2060 = vsel %vm1318, %v2055, 0
        %v2062 = vsel %vm1318, %v2057, 0
        %v2064 = vsel %vm1318, %v2059, 0
        %2066 = vmatprep.subr.mxu0 0.0
        %2067 = vmatpush1.xpose.msra.mxu0 %v2062
        %2068 = vmatprep.subr.mxu0 0.0
        %2069 = vmatpush1.xpose.msra.mxu0 %v2064
        %2070 = vmatprep.subr.mxu0 0.0
        %2071 = vmatpush1.xpose.msra.mxu0 0.0
        %2072 = vmatprep.subr.mxu0 0.0
        %2073 = vmatpush1.xpose.msra.mxu0 0.0
        %2074 = vmatprep.subr.mxu0 0.0
        %2075 = vmatpush1.xpose.msra.mxu0 0.0
        %2076 = vmatprep.subr.mxu0 0.0
        %2077 = vmatpush1.xpose.msra.mxu0 0.0
        %2078 = vmatprep.subr.mxu0 0.0
        %2079 = vmatpush1.xpose.msra.mxu0 0.0
        %2080 = vmatprep.subr.mxu0 0.0
        %2081 = vmatpush1.xpose.msra.mxu0 0.0
        %2082 = vmatprep.subr.mxu0 0.0
        %2083 = vmatpush1.xpose.msra.mxu0 0.0
        %2084 = vmatprep.subr.mxu0 0.0
        %2085 = vmatpush1.xpose.msra.mxu0 0.0
        %2086 = vmatprep.subr.mxu0 0.0
        %2087 = vmatpush1.xpose.msra.mxu0 0.0
        %2088 = vmatprep.subr.mxu0 0.0
        %2089 = vmatpush1.xpose.msra.mxu0 0.0
        %2090 = vmatprep.subr.mxu0 0.0
        %2091 = vmatpush1.xpose.msra.mxu0 0.0
        %2092 = vmatprep.subr.mxu0 0.0
        %2093 = vmatpush1.xpose.msra.mxu0 0.0
        %2094 = vmatprep.subr.mxu0 0.0
        %2095 = vmatpush1.xpose.msra.mxu0 0.0
        %2096 = vmatprep.subr.mxu0 0.0
        %2097 = vmatpush1.xpose.msra.mxu0 0.0
        %2098 = vmatprep.subr.mxu0 0.0
        %2099 = vmatpush1.xpose.msra.mxu0 0.0
        %2100 = vmatprep.subr.mxu0 0.0
        %2101 = vmatpush1.xpose.msra.mxu0 0.0
        %2102 = vmatprep.subr.mxu0 0.0
        %2103 = vmatpush1.xpose.msra.mxu0 0.0
        %2104 = vmatprep.subr.mxu0 0.0
        %2105 = vmatpush1.xpose.msra.mxu0 0.0
        %2106 = vmatprep.subr.mxu0 0.0
        %2107 = vmatpush1.xpose.msra.mxu0 0.0
        %2108 = vmatprep.subr.mxu0 0.0
        %2109 = vmatpush1.xpose.msra.mxu0 0.0
        %2110 = vmatprep.subr.mxu0 0.0
        %2111 = vmatpush1.xpose.msra.mxu0 0.0
        %2112 = vmatprep.subr.mxu0 0.0
        %2113 = vmatpush1.xpose.msra.mxu0 0.0
        %2114 = vmatprep.subr.mxu0 0.0
        %2115 = vmatpush1.xpose.msra.mxu0 0.0
        %2116 = vmatprep.subr.mxu0 0.0
        %2117 = vmatpush1.xpose.msra.mxu0 0.0
        %2118 = vmatprep.subr.mxu0 0.0
        %2119 = vmatpush1.xpose.msra.mxu0 0.0
        %2120 = vmatprep.subr.mxu0 0.0
        %2121 = vmatpush1.xpose.msra.mxu0 0.0
        %2122 = vmatprep.subr.mxu0 0.0
        %2123 = vmatpush1.xpose.msra.mxu0 0.0
        %2124 = vmatprep.subr.mxu0 0.0
        %2125 = vmatpush1.xpose.msra.mxu0 0.0
        %2126 = vmatprep.subr.mxu0 0.0
        %2127 = vmatpush1.xpose.msra.mxu0 0.0
        %2128 = vmatprep.subr.mxu0 0.0
        %2129 = vmatpush1.xpose.msra.mxu0 0.0
        %2130 = vmatprep.mubr.f32.mxu0 0.0
        %2131 = vmatmul.mubr.f32.gmra.mrb[0].mxu0 %v2060
        %v2132 = vpop.f32.mrb[0].mxu0
        %v2133 = vadd.f32 0.0, %v2132
        %v2134 = vpop.f32.mrb[0].mxu0
        %2135 = vdwg.mxu0
        %2136 = vrot.lane.b32.xlu0 %v1316, 120
        %v2137 = vpop.permute.xlu0 %2136
        %2138 = vrot.lane.b32.xlu0 %v1152, 120
        %v2139 = vpop.permute.xlu0 %2138
        %2140 = vrot.lane.b32.xlu0 %v1157, 120
        %v2141 = vpop.permute.xlu0 %2140
        %v2142 = vsel %vm1318, %v2137, 0
        %v2144 = vsel %vm1318, %v2139, 0
        %v2146 = vsel %vm1318, %v2141, 0
        %2148 = vmatprep.subr.mxu0 0.0
        %2149 = vmatpush1.xpose.msra.mxu0 %v2144
        %2150 = vmatprep.subr.mxu0 0.0
        %2151 = vmatpush1.xpose.msra.mxu0 %v2146
        %2152 = vmatprep.subr.mxu0 0.0
        %2153 = vmatpush1.xpose.msra.mxu0 0.0
        %2154 = vmatprep.subr.mxu0 0.0
        %2155 = vmatpush1.xpose.msra.mxu0 0.0
        %2156 = vmatprep.subr.mxu0 0.0
        %2157 = vmatpush1.xpose.msra.mxu0 0.0
        %2158 = vmatprep.subr.mxu0 0.0
        %2159 = vmatpush1.xpose.msra.mxu0 0.0
        %2160 = vmatprep.subr.mxu0 0.0
        %2161 = vmatpush1.xpose.msra.mxu0 0.0
        %2162 = vmatprep.subr.mxu0 0.0
        %2163 = vmatpush1.xpose.msra.mxu0 0.0
        %2164 = vmatprep.subr.mxu0 0.0
        %2165 = vmatpush1.xpose.msra.mxu0 0.0
        %2166 = vmatprep.subr.mxu0 0.0
        %2167 = vmatpush1.xpose.msra.mxu0 0.0
        %2168 = vmatprep.subr.mxu0 0.0
        %2169 = vmatpush1.xpose.msra.mxu0 0.0
        %2170 = vmatprep.subr.mxu0 0.0
        %2171 = vmatpush1.xpose.msra.mxu0 0.0
        %2172 = vmatprep.subr.mxu0 0.0
        %2173 = vmatpush1.xpose.msra.mxu0 0.0
        %2174 = vmatprep.subr.mxu0 0.0
        %2175 = vmatpush1.xpose.msra.mxu0 0.0
        %2176 = vmatprep.subr.mxu0 0.0
        %2177 = vmatpush1.xpose.msra.mxu0 0.0
        %2178 = vmatprep.subr.mxu0 0.0
        %2179 = vmatpush1.xpose.msra.mxu0 0.0
        %2180 = vmatprep.subr.mxu0 0.0
        %2181 = vmatpush1.xpose.msra.mxu0 0.0
        %2182 = vmatprep.subr.mxu0 0.0
        %2183 = vmatpush1.xpose.msra.mxu0 0.0
        %2184 = vmatprep.subr.mxu0 0.0
        %2185 = vmatpush1.xpose.msra.mxu0 0.0
        %2186 = vmatprep.subr.mxu0 0.0
        %2187 = vmatpush1.xpose.msra.mxu0 0.0
        %2188 = vmatprep.subr.mxu0 0.0
        %2189 = vmatpush1.xpose.msra.mxu0 0.0
        %2190 = vmatprep.subr.mxu0 0.0
        %2191 = vmatpush1.xpose.msra.mxu0 0.0
        %2192 = vmatprep.subr.mxu0 0.0
        %2193 = vmatpush1.xpose.msra.mxu0 0.0
        %2194 = vmatprep.subr.mxu0 0.0
        %2195 = vmatpush1.xpose.msra.mxu0 0.0
        %2196 = vmatprep.subr.mxu0 0.0
        %2197 = vmatpush1.xpose.msra.mxu0 0.0
        %2198 = vmatprep.subr.mxu0 0.0
        %2199 = vmatpush1.xpose.msra.mxu0 0.0
        %2200 = vmatprep.subr.mxu0 0.0
        %2201 = vmatpush1.xpose.msra.mxu0 0.0
        %2202 = vmatprep.subr.mxu0 0.0
        %2203 = vmatpush1.xpose.msra.mxu0 0.0
        %2204 = vmatprep.subr.mxu0 0.0
        %2205 = vmatpush1.xpose.msra.mxu0 0.0
        %2206 = vmatprep.subr.mxu0 0.0
        %2207 = vmatpush1.xpose.msra.mxu0 0.0
        %2208 = vmatprep.subr.mxu0 0.0
        %2209 = vmatpush1.xpose.msra.mxu0 0.0
        %2210 = vmatprep.subr.mxu0 0.0
        %2211 = vmatpush1.xpose.msra.mxu0 0.0
        %2212 = vmatprep.mubr.f32.mxu0 0.0
        %2213 = vmatmul.mubr.f32.gmra.mrb[0].mxu0 %v2142
        %v2214 = vpop.f32.mrb[0].mxu0
        %v2215 = vadd.f32 0.0, %v2214
        %v2216 = vpop.f32.mrb[0].mxu0
        %2217 = vdwg.mxu0
        %2218 = vrot.lane.b32.xlu0 %v1317, 120
        %v2219 = vpop.permute.xlu0 %2218
        %2220 = vrot.lane.b32.xlu0 %v1162, 120
        %v2221 = vpop.permute.xlu0 %2220
        %2222 = vrot.lane.b32.xlu0 %v1167, 120
        %v2223 = vpop.permute.xlu0 %2222
        %v2224 = vsel %vm1318, %v2219, 0
        %v2226 = vsel %vm1318, %v2221, 0
        %v2228 = vsel %vm1318, %v2223, 0
        %2230 = vmatprep.subr.mxu0 0.0
        %2231 = vmatpush1.xpose.msra.mxu0 %v2226
        %2232 = vmatprep.subr.mxu0 0.0
        %2233 = vmatpush1.xpose.msra.mxu0 %v2228
        %2234 = vmatprep.subr.mxu0 0.0
        %2235 = vmatpush1.xpose.msra.mxu0 0.0
        %2236 = vmatprep.subr.mxu0 0.0
        %2237 = vmatpush1.xpose.msra.mxu0 0.0
        %2238 = vmatprep.subr.mxu0 0.0
        %2239 = vmatpush1.xpose.msra.mxu0 0.0
        %2240 = vmatprep.subr.mxu0 0.0
        %2241 = vmatpush1.xpose.msra.mxu0 0.0
        %2242 = vmatprep.subr.mxu0 0.0
        %2243 = vmatpush1.xpose.msra.mxu0 0.0
        %2244 = vmatprep.subr.mxu0 0.0
        %2245 = vmatpush1.xpose.msra.mxu0 0.0
        %2246 = vmatprep.subr.mxu0 0.0
        %2247 = vmatpush1.xpose.msra.mxu0 0.0
        %2248 = vmatprep.subr.mxu0 0.0
        %2249 = vmatpush1.xpose.msra.mxu0 0.0
        %2250 = vmatprep.subr.mxu0 0.0
        %2251 = vmatpush1.xpose.msra.mxu0 0.0
        %2252 = vmatprep.subr.mxu0 0.0
        %2253 = vmatpush1.xpose.msra.mxu0 0.0
        %2254 = vmatprep.subr.mxu0 0.0
        %2255 = vmatpush1.xpose.msra.mxu0 0.0
        %2256 = vmatprep.subr.mxu0 0.0
        %2257 = vmatpush1.xpose.msra.mxu0 0.0
        %2258 = vmatprep.subr.mxu0 0.0
        %2259 = vmatpush1.xpose.msra.mxu0 0.0
        %2260 = vmatprep.subr.mxu0 0.0
        %2261 = vmatpush1.xpose.msra.mxu0 0.0
        %2262 = vmatprep.subr.mxu0 0.0
        %2263 = vmatpush1.xpose.msra.mxu0 0.0
        %2264 = vmatprep.subr.mxu0 0.0
        %2265 = vmatpush1.xpose.msra.mxu0 0.0
        %2266 = vmatprep.subr.mxu0 0.0
        %2267 = vmatpush1.xpose.msra.mxu0 0.0
        %2268 = vmatprep.subr.mxu0 0.0
        %2269 = vmatpush1.xpose.msra.mxu0 0.0
        %2270 = vmatprep.subr.mxu0 0.0
        %2271 = vmatpush1.xpose.msra.mxu0 0.0
        %2272 = vmatprep.subr.mxu0 0.0
        %2273 = vmatpush1.xpose.msra.mxu0 0.0
        %2274 = vmatprep.subr.mxu0 0.0
        %2275 = vmatpush1.xpose.msra.mxu0 0.0
        %2276 = vmatprep.subr.mxu0 0.0
        %2277 = vmatpush1.xpose.msra.mxu0 0.0
        %2278 = vmatprep.subr.mxu0 0.0
        %2279 = vmatpush1.xpose.msra.mxu0 0.0
        %2280 = vmatprep.subr.mxu0 0.0
        %2281 = vmatpush1.xpose.msra.mxu0 0.0
        %2282 = vmatprep.subr.mxu0 0.0
        %2283 = vmatpush1.xpose.msra.mxu0 0.0
        %2284 = vmatprep.subr.mxu0 0.0
        %2285 = vmatpush1.xpose.msra.mxu0 0.0
        %2286 = vmatprep.subr.mxu0 0.0
        %2287 = vmatpush1.xpose.msra.mxu0 0.0
        %2288 = vmatprep.subr.mxu0 0.0
        %2289 = vmatpush1.xpose.msra.mxu0 0.0
        %2290 = vmatprep.subr.mxu0 0.0
        %2291 = vmatpush1.xpose.msra.mxu0 0.0
        %2292 = vmatprep.subr.mxu0 0.0
        %2293 = vmatpush1.xpose.msra.mxu0 0.0
        %2294 = vmatprep.mubr.f32.mxu0 0.0
        %2295 = vmatmul.mubr.f32.gmra.mrb[0].mxu0 %v2224
        %v2296 = vpop.f32.mrb[0].mxu0
        %v2297 = vadd.f32 0.0, %v2296
        %v2298 = vpop.f32.mrb[0].mxu0
        %2299 = vdwg.mxu0
        %v2300 = vsel %vm1635, %v2051, -inf
        %2301 = vmax.xlane.f32.xlu0 %v2300
        %v2302 = vpop.xlane.xlu0 %2301
        %v2303 = vsel %vm1635, %v2133, -inf
        %2304 = vmax.xlane.f32.xlu0 %v2303
        %v2305 = vpop.xlane.xlu0 %2304
        %v2306 = vsel %vm1635, %v2215, -inf
        %2307 = vmax.xlane.f32.xlu0 %v2306
        %v2308 = vpop.xlane.xlu0 %2307
        %v2309 = vsel %vm1635, %v2297, -inf
        %2310 = vmax.xlane.f32.xlu0 %v2309
        %v2311 = vpop.xlane.xlu0 %2310
        %v2312 = vsub.f32 %v2051, %v2302
        %v2313 = vsub.f32 %v2133, %v2305
        %v2314 = vsub.f32 %v2215, %v2308
        %v2315 = vsub.f32 %v2297, %v2311
        %v2316 = vmul.f32 %v2312, 1.442695
        %v2317 = vpow.pop %v2316
        %v2318 = vmul.f32 %v2313, 1.442695
        %v2319 = vpow.pop %v2318
        %v2320 = vmul.f32 %v2314, 1.442695
        %v2321 = vpow.pop %v2320
        %v2322 = vmul.f32 %v2315, 1.442695
        %v2323 = vpow.pop %v2322
        %v2324 = vsel %vm1635, %v2317, 0.0
        %2325 = vadd.xlane.f32.xlu0 %v2324
        %v2326 = vpop.xlane.xlu0 %2325
        %v2327 = vsel %vm1635, %v2319, 0.0
        %2328 = vadd.xlane.f32.xlu0 %v2327
        %v2329 = vpop.xlane.xlu0 %2328
        %v2330 = vsel %vm1635, %v2321, 0.0
        %2331 = vadd.xlane.f32.xlu0 %v2330
        %v2332 = vpop.xlane.xlu0 %2331
        %v2333 = vsel %vm1635, %v2323, 0.0
        %2334 = vadd.xlane.f32.xlu0 %v2333
        %v2335 = vpop.xlane.xlu0 %2334
        %v2336 = vrcp.pop %v2326
        %v2337 = vrcp.pop %v2329
        %v2338 = vrcp.pop %v2332
        %v2339 = vrcp.pop %v2335
        %v2340 = vmul.f32 %v2317, %v2336
        %v2341 = vmul.f32 %v2319, %v2337
        %v2342 = vmul.f32 %v2321, %v2338
        %v2343 = vmul.f32 %v2323, %v2339
        %2346 = vrot.lane.b32.xlu0 %v1272, 120
        %v2347 = vpop.permute.xlu0 %2346
        %2348 = vrot.lane.b32.xlu0 %v1277, 120
        %v2349 = vpop.permute.xlu0 %2348
        %v2353 = vsel %vm1635, %v2340, 0
        %2355 = vmatprep.subr.mxu0 0.0
        %2356 = vmatpush1.msra.mxu0 %v2347
        %2357 = vmatprep.subr.mxu0 0.0
        %2358 = vmatpush1.msra.mxu0 %v2349
        %2359 = vmatprep.subr.mxu0 0.0
        %2360 = vmatpush1.msra.mxu0 0.0
        %2361 = vmatprep.subr.mxu0 0.0
        %2362 = vmatpush1.msra.mxu0 0.0
        %2363 = vmatprep.subr.mxu0 0.0
        %2364 = vmatpush1.msra.mxu0 0.0
        %2365 = vmatprep.subr.mxu0 0.0
        %2366 = vmatpush1.msra.mxu0 0.0
        %2367 = vmatprep.subr.mxu0 0.0
        %2368 = vmatpush1.msra.mxu0 0.0
        %2369 = vmatprep.subr.mxu0 0.0
        %2370 = vmatpush1.msra.mxu0 0.0
        %2371 = vmatprep.subr.mxu0 0.0
        %2372 = vmatpush1.msra.mxu0 0.0
        %2373 = vmatprep.subr.mxu0 0.0
        %2374 = vmatpush1.msra.mxu0 0.0
        %2375 = vmatprep.subr.mxu0 0.0
        %2376 = vmatpush1.msra.mxu0 0.0
        %2377 = vmatprep.subr.mxu0 0.0
        %2378 = vmatpush1.msra.mxu0 0.0
        %2379 = vmatprep.subr.mxu0 0.0
        %2380 = vmatpush1.msra.mxu0 0.0
        %2381 = vmatprep.subr.mxu0 0.0
        %2382 = vmatpush1.msra.mxu0 0.0
        %2383 = vmatprep.subr.mxu0 0.0
        %2384 = vmatpush1.msra.mxu0 0.0
        %2385 = vmatprep.subr.mxu0 0.0
        %2386 = vmatpush1.msra.mxu0 0.0
        %2387 = vmatprep.subr.mxu0 0.0
        %2388 = vmatpush1.msra.mxu0 0.0
        %2389 = vmatprep.subr.mxu0 0.0
        %2390 = vmatpush1.msra.mxu0 0.0
        %2391 = vmatprep.subr.mxu0 0.0
        %2392 = vmatpush1.msra.mxu0 0.0
        %2393 = vmatprep.subr.mxu0 0.0
        %2394 = vmatpush1.msra.mxu0 0.0
        %2395 = vmatprep.subr.mxu0 0.0
        %2396 = vmatpush1.msra.mxu0 0.0
        %2397 = vmatprep.subr.mxu0 0.0
        %2398 = vmatpush1.msra.mxu0 0.0
        %2399 = vmatprep.subr.mxu0 0.0
        %2400 = vmatpush1.msra.mxu0 0.0
        %2401 = vmatprep.subr.mxu0 0.0
        %2402 = vmatpush1.msra.mxu0 0.0
        %2403 = vmatprep.subr.mxu0 0.0
        %2404 = vmatpush1.msra.mxu0 0.0
        %2405 = vmatprep.subr.mxu0 0.0
        %2406 = vmatpush1.msra.mxu0 0.0
        %2407 = vmatprep.subr.mxu0 0.0
        %2408 = vmatpush1.msra.mxu0 0.0
        %2409 = vmatprep.subr.mxu0 0.0
        %2410 = vmatpush1.msra.mxu0 0.0
        %2411 = vmatprep.subr.mxu0 0.0
        %2412 = vmatpush1.msra.mxu0 0.0
        %2413 = vmatprep.subr.mxu0 0.0
        %2414 = vmatpush1.msra.mxu0 0.0
        %2415 = vmatprep.subr.mxu0 0.0
        %2416 = vmatpush1.msra.mxu0 0.0
        %2417 = vmatprep.subr.mxu0 0.0
        %2418 = vmatpush1.msra.mxu0 0.0
        %2419 = vmatprep.mubr.f32.mxu0 0.0
        %2420 = vmatmul.mubr.f32.gmra.mrb[0].mxu0 %v2353
        %v2421 = vpop.f32.mrb[0].mxu0
        %v2422 = vadd.f32 0.0, %v2421
        %v2423 = vpop.f32.mrb[0].mxu0
        %2424 = vdwg.mxu0
        %2427 = vrot.lane.b32.xlu0 %v1282, 120
        %v2428 = vpop.permute.xlu0 %2427
        %2429 = vrot.lane.b32.xlu0 %v1287, 120
        %v2430 = vpop.permute.xlu0 %2429
        %v2434 = vsel %vm1635, %v2341, 0
        %2436 = vmatprep.subr.mxu0 0.0
        %2437 = vmatpush1.msra.mxu0 %v2428
        %2438 = vmatprep.subr.mxu0 0.0
        %2439 = vmatpush1.msra.mxu0 %v2430
        %2440 = vmatprep.subr.mxu0 0.0
        %2441 = vmatpush1.msra.mxu0 0.0
        %2442 = vmatprep.subr.mxu0 0.0
        %2443 = vmatpush1.msra.mxu0 0.0
        %2444 = vmatprep.subr.mxu0 0.0
        %2445 = vmatpush1.msra.mxu0 0.0
        %2446 = vmatprep.subr.mxu0 0.0
        %2447 = vmatpush1.msra.mxu0 0.0
        %2448 = vmatprep.subr.mxu0 0.0
        %2449 = vmatpush1.msra.mxu0 0.0
        %2450 = vmatprep.subr.mxu0 0.0
        %2451 = vmatpush1.msra.mxu0 0.0
        %2452 = vmatprep.subr.mxu0 0.0
        %2453 = vmatpush1.msra.mxu0 0.0
        %2454 = vmatprep.subr.mxu0 0.0
        %2455 = vmatpush1.msra.mxu0 0.0
        %2456 = vmatprep.subr.mxu0 0.0
        %2457 = vmatpush1.msra.mxu0 0.0
        %2458 = vmatprep.subr.mxu0 0.0
        %2459 = vmatpush1.msra.mxu0 0.0
        %2460 = vmatprep.subr.mxu0 0.0
        %2461 = vmatpush1.msra.mxu0 0.0
        %2462 = vmatprep.subr.mxu0 0.0
        %2463 = vmatpush1.msra.mxu0 0.0
        %2464 = vmatprep.subr.mxu0 0.0
        %2465 = vmatpush1.msra.mxu0 0.0
        %2466 = vmatprep.subr.mxu0 0.0
        %2467 = vmatpush1.msra.mxu0 0.0
        %2468 = vmatprep.subr.mxu0 0.0
        %2469 = vmatpush1.msra.mxu0 0.0
        %2470 = vmatprep.subr.mxu0 0.0
        %2471 = vmatpush1.msra.mxu0 0.0
        %2472 = vmatprep.subr.mxu0 0.0
        %2473 = vmatpush1.msra.mxu0 0.0
        %2474 = vmatprep.subr.mxu0 0.0
        %2475 = vmatpush1.msra.mxu0 0.0
        %2476 = vmatprep.subr.mxu0 0.0
        %2477 = vmatpush1.msra.mxu0 0.0
        %2478 = vmatprep.subr.mxu0 0.0
        %2479 = vmatpush1.msra.mxu0 0.0
        %2480 = vmatprep.subr.mxu0 0.0
        %2481 = vmatpush1.msra.mxu0 0.0
        %2482 = vmatprep.subr.mxu0 0.0
        %2483 = vmatpush1.msra.mxu0 0.0
        %2484 = vmatprep.subr.mxu0 0.0
        %2485 = vmatpush1.msra.mxu0 0.0
        %2486 = vmatprep.subr.mxu0 0.0
        %2487 = vmatpush1.msra.mxu0 0.0
        %2488 = vmatprep.subr.mxu0 0.0
        %2489 = vmatpush1.msra.mxu0 0.0
        %2490 = vmatprep.subr.mxu0 0.0
        %2491 = vmatpush1.msra.mxu0 0.0
        %2492 = vmatprep.subr.mxu0 0.0
        %2493 = vmatpush1.msra.mxu0 0.0
        %2494 = vmatprep.subr.mxu0 0.0
        %2495 = vmatpush1.msra.mxu0 0.0
        %2496 = vmatprep.subr.mxu0 0.0
        %2497 = vmatpush1.msra.mxu0 0.0
        %2498 = vmatprep.subr.mxu0 0.0
        %2499 = vmatpush1.msra.mxu0 0.0
        %2500 = vmatprep.mubr.f32.mxu0 0.0
        %2501 = vmatmul.mubr.f32.gmra.mrb[0].mxu0 %v2434
        %v2502 = vpop.f32.mrb[0].mxu0
        %v2503 = vadd.f32 0.0, %v2502
        %v2504 = vpop.f32.mrb[0].mxu0
        %2505 = vdwg.mxu0
        %2508 = vrot.lane.b32.xlu0 %v1292, 120
        %v2509 = vpop.permute.xlu0 %2508
        %2510 = vrot.lane.b32.xlu0 %v1297, 120
        %v2511 = vpop.permute.xlu0 %2510
        %v2515 = vsel %vm1635, %v2342, 0
        %2517 = vmatprep.subr.mxu0 0.0
        %2518 = vmatpush1.msra.mxu0 %v2509
        %2519 = vmatprep.subr.mxu0 0.0
        %2520 = vmatpush1.msra.mxu0 %v2511
        %2521 = vmatprep.subr.mxu0 0.0
        %2522 = vmatpush1.msra.mxu0 0.0
        %2523 = vmatprep.subr.mxu0 0.0
        %2524 = vmatpush1.msra.mxu0 0.0
        %2525 = vmatprep.subr.mxu0 0.0
        %2526 = vmatpush1.msra.mxu0 0.0
        %2527 = vmatprep.subr.mxu0 0.0
        %2528 = vmatpush1.msra.mxu0 0.0
        %2529 = vmatprep.subr.mxu0 0.0
        %2530 = vmatpush1.msra.mxu0 0.0
        %2531 = vmatprep.subr.mxu0 0.0
        %2532 = vmatpush1.msra.mxu0 0.0
        %2533 = vmatprep.subr.mxu0 0.0
        %2534 = vmatpush1.msra.mxu0 0.0
        %2535 = vmatprep.subr.mxu0 0.0
        %2536 = vmatpush1.msra.mxu0 0.0
        %2537 = vmatprep.subr.mxu0 0.0
        %2538 = vmatpush1.msra.mxu0 0.0
        %2539 = vmatprep.subr.mxu0 0.0
        %2540 = vmatpush1.msra.mxu0 0.0
        %2541 = vmatprep.subr.mxu0 0.0
        %2542 = vmatpush1.msra.mxu0 0.0
        %2543 = vmatprep.subr.mxu0 0.0
        %2544 = vmatpush1.msra.mxu0 0.0
        %2545 = vmatprep.subr.mxu0 0.0
        %2546 = vmatpush1.msra.mxu0 0.0
        %2547 = vmatprep.subr.mxu0 0.0
        %2548 = vmatpush1.msra.mxu0 0.0
        %2549 = vmatprep.subr.mxu0 0.0
        %2550 = vmatpush1.msra.mxu0 0.0
        %2551 = vmatprep.subr.mxu0 0.0
        %2552 = vmatpush1.msra.mxu0 0.0
        %2553 = vmatprep.subr.mxu0 0.0
        %2554 = vmatpush1.msra.mxu0 0.0
        %2555 = vmatprep.subr.mxu0 0.0
        %2556 = vmatpush1.msra.mxu0 0.0
        %2557 = vmatprep.subr.mxu0 0.0
        %2558 = vmatpush1.msra.mxu0 0.0
        %2559 = vmatprep.subr.mxu0 0.0
        %2560 = vmatpush1.msra.mxu0 0.0
        %2561 = vmatprep.subr.mxu0 0.0
        %2562 = vmatpush1.msra.mxu0 0.0
        %2563 = vmatprep.subr.mxu0 0.0
        %2564 = vmatpush1.msra.mxu0 0.0
        %2565 = vmatprep.subr.mxu0 0.0
        %2566 = vmatpush1.msra.mxu0 0.0
        %2567 = vmatprep.subr.mxu0 0.0
        %2568 = vmatpush1.msra.mxu0 0.0
        %2569 = vmatprep.subr.mxu0 0.0
        %2570 = vmatpush1.msra.mxu0 0.0
        %2571 = vmatprep.subr.mxu0 0.0
        %2572 = vmatpush1.msra.mxu0 0.0
        %2573 = vmatprep.subr.mxu0 0.0
        %2574 = vmatpush1.msra.mxu0 0.0
        %2575 = vmatprep.subr.mxu0 0.0
        %2576 = vmatpush1.msra.mxu0 0.0
        %2577 = vmatprep.subr.mxu0 0.0
        %2578 = vmatpush1.msra.mxu0 0.0
        %2579 = vmatprep.subr.mxu0 0.0
        %2580 = vmatpush1.msra.mxu0 0.0
        %2581 = vmatprep.mubr.f32.mxu0 0.0
        %2582 = vmatmul.mubr.f32.gmra.mrb[0].mxu0 %v2515
        %v2583 = vpop.f32.mrb[0].mxu0
        %v2584 = vadd.f32 0.0, %v2583
        %v2585 = vpop.f32.mrb[0].mxu0
        %2586 = vdwg.mxu0
        %2589 = vrot.lane.b32.xlu0 %v1302, 120
        %v2590 = vpop.permute.xlu0 %2589
        %2591 = vrot.lane.b32.xlu0 %v1307, 120
        %v2592 = vpop.permute.xlu0 %2591
        %v2596 = vsel %vm1635, %v2343, 0
        %2598 = vmatprep.subr.mxu0 0.0
        %2599 = vmatpush1.msra.mxu0 %v2590
        %2600 = vmatprep.subr.mxu0 0.0
        %2601 = vmatpush1.msra.mxu0 %v2592
        %2602 = vmatprep.subr.mxu0 0.0
        %2603 = vmatpush1.msra.mxu0 0.0
        %2604 = vmatprep.subr.mxu0 0.0
        %2605 = vmatpush1.msra.mxu0 0.0
        %2606 = vmatprep.subr.mxu0 0.0
        %2607 = vmatpush1.msra.mxu0 0.0
        %2608 = vmatprep.subr.mxu0 0.0
        %2609 = vmatpush1.msra.mxu0 0.0
        %2610 = vmatprep.subr.mxu0 0.0
        %2611 = vmatpush1.msra.mxu0 0.0
        %2612 = vmatprep.subr.mxu0 0.0
        %2613 = vmatpush1.msra.mxu0 0.0
        %2614 = vmatprep.subr.mxu0 0.0
        %2615 = vmatpush1.msra.mxu0 0.0
        %2616 = vmatprep.subr.mxu0 0.0
        %2617 = vmatpush1.msra.mxu0 0.0
        %2618 = vmatprep.subr.mxu0 0.0
        %2619 = vmatpush1.msra.mxu0 0.0
        %2620 = vmatprep.subr.mxu0 0.0
        %2621 = vmatpush1.msra.mxu0 0.0
        %2622 = vmatprep.subr.mxu0 0.0
        %2623 = vmatpush1.msra.mxu0 0.0
        %2624 = vmatprep.subr.mxu0 0.0
        %2625 = vmatpush1.msra.mxu0 0.0
        %2626 = vmatprep.subr.mxu0 0.0
        %2627 = vmatpush1.msra.mxu0 0.0
        %2628 = vmatprep.subr.mxu0 0.0
        %2629 = vmatpush1.msra.mxu0 0.0
        %2630 = vmatprep.subr.mxu0 0.0
        %2631 = vmatpush1.msra.mxu0 0.0
        %2632 = vmatprep.subr.mxu0 0.0
        %2633 = vmatpush1.msra.mxu0 0.0
        %2634 = vmatprep.subr.mxu0 0.0
        %2635 = vmatpush1.msra.mxu0 0.0
        %2636 = vmatprep.subr.mxu0 0.0
        %2637 = vmatpush1.msra.mxu0 0.0
        %2638 = vmatprep.subr.mxu0 0.0
        %2639 = vmatpush1.msra.mxu0 0.0
        %2640 = vmatprep.subr.mxu0 0.0
        %2641 = vmatpush1.msra.mxu0 0.0
        %2642 = vmatprep.subr.mxu0 0.0
        %2643 = vmatpush1.msra.mxu0 0.0
        %2644 = vmatprep.subr.mxu0 0.0
        %2645 = vmatpush1.msra.mxu0 0.0
        %2646 = vmatprep.subr.mxu0 0.0
        %2647 = vmatpush1.msra.mxu0 0.0
        %2648 = vmatprep.subr.mxu0 0.0
        %2649 = vmatpush1.msra.mxu0 0.0
        %2650 = vmatprep.subr.mxu0 0.0
        %2651 = vmatpush1.msra.mxu0 0.0
        %2652 = vmatprep.subr.mxu0 0.0
        %2653 = vmatpush1.msra.mxu0 0.0
        %2654 = vmatprep.subr.mxu0 0.0
        %2655 = vmatpush1.msra.mxu0 0.0
        %2656 = vmatprep.subr.mxu0 0.0
        %2657 = vmatpush1.msra.mxu0 0.0
        %2658 = vmatprep.subr.mxu0 0.0
        %2659 = vmatpush1.msra.mxu0 0.0
        %2660 = vmatprep.subr.mxu0 0.0
        %2661 = vmatpush1.msra.mxu0 0.0
        %2662 = vmatprep.mubr.f32.mxu0 0.0
        %2663 = vmatmul.mubr.f32.gmra.mrb[0].mxu0 %v2596
        %v2664 = vpop.f32.mrb[0].mxu0
        %v2665 = vadd.f32 0.0, %v2664
        %v2666 = vpop.f32.mrb[0].mxu0
        %2667 = vdwg.mxu0
        %v2669 = vsel %vm1318, %v2422, 0
        %v2672 = vsel %vm1318, %v2503, 0
        %v2675 = vsel %vm1318, %v2584, 0
        %v2678 = vsel %vm1318, %v2665, 0
        %2680 = vmatprep.subr.mxu0 0.0
        %2681 = vmatpush1.msra.mxu0 %v1311
        %2682 = vmatprep.subr.mxu0 0.0
        %2683 = vmatpush1.msra.mxu0 0.0
        %2684 = vmatprep.subr.mxu0 0.0
        %2685 = vmatpush1.msra.mxu0 0.0
        %2686 = vmatprep.subr.mxu0 0.0
        %2687 = vmatpush1.msra.mxu0 0.0
        %2688 = vmatprep.subr.mxu0 0.0
        %2689 = vmatpush1.msra.mxu0 0.0
        %2690 = vmatprep.subr.mxu0 0.0
        %2691 = vmatpush1.msra.mxu0 0.0
        %2692 = vmatprep.subr.mxu0 0.0
        %2693 = vmatpush1.msra.mxu0 0.0
        %2694 = vmatprep.subr.mxu0 0.0
        %2695 = vmatpush1.msra.mxu0 0.0
        %2696 = vmatprep.subr.mxu0 0.0
        %2697 = vmatpush1.msra.mxu0 0.0
        %2698 = vmatprep.subr.mxu0 0.0
        %2699 = vmatpush1.msra.mxu0 0.0
        %2700 = vmatprep.subr.mxu0 0.0
        %2701 = vmatpush1.msra.mxu0 0.0
        %2702 = vmatprep.subr.mxu0 0.0
        %2703 = vmatpush1.msra.mxu0 0.0
        %2704 = vmatprep.subr.mxu0 0.0
        %2705 = vmatpush1.msra.mxu0 0.0
        %2706 = vmatprep.subr.mxu0 0.0
        %2707 = vmatpush1.msra.mxu0 0.0
        %2708 = vmatprep.subr.mxu0 0.0
        %2709 = vmatpush1.msra.mxu0 0.0
        %2710 = vmatprep.subr.mxu0 0.0
        %2711 = vmatpush1.msra.mxu0 0.0
        %2712 = vmatprep.subr.mxu0 0.0
        %2713 = vmatpush1.msra.mxu0 0.0
        %2714 = vmatprep.subr.mxu0 0.0
        %2715 = vmatpush1.msra.mxu0 0.0
        %2716 = vmatprep.subr.mxu0 0.0
        %2717 = vmatpush1.msra.mxu0 0.0
        %2718 = vmatprep.subr.mxu0 0.0
        %2719 = vmatpush1.msra.mxu0 0.0
        %2720 = vmatprep.subr.mxu0 0.0
        %2721 = vmatpush1.msra.mxu0 0.0
        %2722 = vmatprep.subr.mxu0 0.0
        %2723 = vmatpush1.msra.mxu0 0.0
        %2724 = vmatprep.subr.mxu0 0.0
        %2725 = vmatpush1.msra.mxu0 0.0
        %2726 = vmatprep.subr.mxu0 0.0
        %2727 = vmatpush1.msra.mxu0 0.0
        %2728 = vmatprep.subr.mxu0 0.0
        %2729 = vmatpush1.msra.mxu0 0.0
        %2730 = vmatprep.subr.mxu0 0.0
        %2731 = vmatpush1.msra.mxu0 0.0
        %2732 = vmatprep.subr.mxu0 0.0
        %2733 = vmatpush1.msra.mxu0 0.0
        %2734 = vmatprep.subr.mxu0 0.0
        %2735 = vmatpush1.msra.mxu0 0.0
        %2736 = vmatprep.subr.mxu0 0.0
        %2737 = vmatpush1.msra.mxu0 0.0
        %2738 = vmatprep.subr.mxu0 0.0
        %2739 = vmatpush1.msra.mxu0 0.0
        %2740 = vmatprep.subr.mxu0 0.0
        %2741 = vmatpush1.msra.mxu0 0.0
        %2742 = vmatprep.subr.mxu0 0.0
        %2743 = vmatpush1.msra.mxu0 0.0
        %2744 = vmatprep.mubr.f32.mxu0 0.0
        %2745 = vmatmul.mubr.f32.gmra.mrb[0].mxu0 %v2669
        %v2746 = vpop.f32.mrb[0].mxu0
        %v2747 = vadd.f32 0.0, %v2746
        %v2748 = vpop.f32.mrb[0].mxu0
        %2749 = vmatprep.mubr.f32.mxu0 0.0
        %2750 = vmatmul.mubr.f32.gmra.mrb[0].mxu0 %v2672
        %v2751 = vpop.f32.mrb[0].mxu0
        %v2752 = vadd.f32 0.0, %v2751
        %v2753 = vpop.f32.mrb[0].mxu0
        %2754 = vmatprep.mubr.f32.mxu0 0.0
        %2755 = vmatmul.mubr.f32.gmra.mrb[0].mxu0 %v2675
        %v2756 = vpop.f32.mrb[0].mxu0
        %v2757 = vadd.f32 0.0, %v2756
        %v2758 = vpop.f32.mrb[0].mxu0
        %2759 = vmatprep.mubr.f32.mxu0 0.0
        %2760 = vmatmul.mubr.f32.gmra.mrb[0].mxu0 %v2678
        %v2761 = vpop.f32.mrb[0].mxu0
        %v2762 = vadd.f32 0.0, %v2761
        %v2763 = vpop.f32.mrb[0].mxu0
        %2764 = vdwg.mxu0
        %v2766 = vsel %vm1318, %v1750, 0
        %v2769 = vsel %vm1318, %v1823, 0
        %v2772 = vsel %vm1318, %v1896, 0
        %v2775 = vsel %vm1318, %v1969, 0
        %2777 = vmatprep.subr.mxu0 0.0
        %2778 = vmatpush1.msra.mxu0 %v1310
        %2779 = vmatprep.subr.mxu0 0.0
        %2780 = vmatpush1.msra.mxu0 0.0
        %2781 = vmatprep.subr.mxu0 0.0
        %2782 = vmatpush1.msra.mxu0 0.0
        %2783 = vmatprep.subr.mxu0 0.0
        %2784 = vmatpush1.msra.mxu0 0.0
        %2785 = vmatprep.subr.mxu0 0.0
        %2786 = vmatpush1.msra.mxu0 0.0
        %2787 = vmatprep.subr.mxu0 0.0
        %2788 = vmatpush1.msra.mxu0 0.0
        %2789 = vmatprep.subr.mxu0 0.0
        %2790 = vmatpush1.msra.mxu0 0.0
        %2791 = vmatprep.subr.mxu0 0.0
        %2792 = vmatpush1.msra.mxu0 0.0
        %2793 = vmatprep.subr.mxu0 0.0
        %2794 = vmatpush1.msra.mxu0 0.0
        %2795 = vmatprep.subr.mxu0 0.0
        %2796 = vmatpush1.msra.mxu0 0.0
        %2797 = vmatprep.subr.mxu0 0.0
        %2798 = vmatpush1.msra.mxu0 0.0
        %2799 = vmatprep.subr.mxu0 0.0
        %2800 = vmatpush1.msra.mxu0 0.0
        %2801 = vmatprep.subr.mxu0 0.0
        %2802 = vmatpush1.msra.mxu0 0.0
        %2803 = vmatprep.subr.mxu0 0.0
        %2804 = vmatpush1.msra.mxu0 0.0
        %2805 = vmatprep.subr.mxu0 0.0
        %2806 = vmatpush1.msra.mxu0 0.0
        %2807 = vmatprep.subr.mxu0 0.0
        %2808 = vmatpush1.msra.mxu0 0.0
        %2809 = vmatprep.subr.mxu0 0.0
        %2810 = vmatpush1.msra.mxu0 0.0
        %2811 = vmatprep.subr.mxu0 0.0
        %2812 = vmatpush1.msra.mxu0 0.0
        %2813 = vmatprep.subr.mxu0 0.0
        %2814 = vmatpush1.msra.mxu0 0.0
        %2815 = vmatprep.subr.mxu0 0.0
        %2816 = vmatpush1.msra.mxu0 0.0
        %2817 = vmatprep.subr.mxu0 0.0
        %2818 = vmatpush1.msra.mxu0 0.0
        %2819 = vmatprep.subr.mxu0 0.0
        %2820 = vmatpush1.msra.mxu0 0.0
        %2821 = vmatprep.subr.mxu0 0.0
        %2822 = vmatpush1.msra.mxu0 0.0
        %2823 = vmatprep.subr.mxu0 0.0
        %2824 = vmatpush1.msra.mxu0 0.0
        %2825 = vmatprep.subr.mxu0 0.0
        %2826 = vmatpush1.msra.mxu0 0.0
        %2827 = vmatprep.subr.mxu0 0.0
        %2828 = vmatpush1.msra.mxu0 0.0
        %2829 = vmatprep.subr.mxu0 0.0
        %2830 = vmatpush1.msra.mxu0 0.0
        %2831 = vmatprep.subr.mxu0 0.0
        %2832 = vmatpush1.msra.mxu0 0.0
        %2833 = vmatprep.subr.mxu0 0.0
        %2834 = vmatpush1.msra.mxu0 0.0
        %2835 = vmatprep.subr.mxu0 0.0
        %2836 = vmatpush1.msra.mxu0 0.0
        %2837 = vmatprep.subr.mxu0 0.0
        %2838 = vmatpush1.msra.mxu0 0.0
        %2839 = vmatprep.subr.mxu0 0.0
        %2840 = vmatpush1.msra.mxu0 0.0
        %2841 = vmatprep.mubr.f32.mxu0 0.0
        %2842 = vmatmul.mubr.f32.gmra.mrb[0].mxu0 %v2766
        %v2843 = vpop.f32.mrb[0].mxu0
        %v2844 = vadd.f32 %v2747, %v2843
        %v2845 = vpop.f32.mrb[0].mxu0
        %2846 = vmatprep.mubr.f32.mxu0 0.0
        %2847 = vmatmul.mubr.f32.gmra.mrb[0].mxu0 %v2769
        %v2848 = vpop.f32.mrb[0].mxu0
        %v2849 = vadd.f32 %v2752, %v2848
        %v2850 = vpop.f32.mrb[0].mxu0
        %2851 = vmatprep.mubr.f32.mxu0 0.0
        %2852 = vmatmul.mubr.f32.gmra.mrb[0].mxu0 %v2772
        %v2853 = vpop.f32.mrb[0].mxu0
        %v2854 = vadd.f32 %v2757, %v2853
        %v2855 = vpop.f32.mrb[0].mxu0
        %2856 = vmatprep.mubr.f32.mxu0 0.0
        %2857 = vmatmul.mubr.f32.gmra.mrb[0].mxu0 %v2775
        %v2858 = vpop.f32.mrb[0].mxu0
        %v2859 = vadd.f32 %v2762, %v2858
        %v2860 = vpop.f32.mrb[0].mxu0
        %2861 = vdwg.mxu0
        %2862 = vrot.lane.b32.xlu0 %v1314, 112
        %v2863 = vpop.permute.xlu0 %2862
        %2864 = vrot.lane.b32.xlu0 %v1132, 112
        %v2865 = vpop.permute.xlu0 %2864
        %2866 = vrot.lane.b32.xlu0 %v1137, 112
        %v2867 = vpop.permute.xlu0 %2866
        %v2868 = vsel %vm1318, %v2863, 0
        %v2870 = vsel %vm1318, %v2865, 0
        %v2872 = vsel %vm1318, %v2867, 0
        %2874 = vmatprep.subr.mxu0 0.0
        %2875 = vmatpush1.xpose.msra.mxu0 %v2870
        %2876 = vmatprep.subr.mxu0 0.0
        %2877 = vmatpush1.xpose.msra.mxu0 %v2872
        %2878 = vmatprep.subr.mxu0 0.0
        %2879 = vmatpush1.xpose.msra.mxu0 0.0
        %2880 = vmatprep.subr.mxu0 0.0
        %2881 = vmatpush1.xpose.msra.mxu0 0.0
        %2882 = vmatprep.subr.mxu0 0.0
        %2883 = vmatpush1.xpose.msra.mxu0 0.0
        %2884 = vmatprep.subr.mxu0 0.0
        %2885 = vmatpush1.xpose.msra.mxu0 0.0
        %2886 = vmatprep.subr.mxu0 0.0
        %2887 = vmatpush1.xpose.msra.mxu0 0.0
        %2888 = vmatprep.subr.mxu0 0.0
        %2889 = vmatpush1.xpose.msra.mxu0 0.0
        %2890 = vmatprep.subr.mxu0 0.0
        %2891 = vmatpush1.xpose.msra.mxu0 0.0
        %2892 = vmatprep.subr.mxu0 0.0
        %2893 = vmatpush1.xpose.msra.mxu0 0.0
        %2894 = vmatprep.subr.mxu0 0.0
        %2895 = vmatpush1.xpose.msra.mxu0 0.0
        %2896 = vmatprep.subr.mxu0 0.0
        %2897 = vmatpush1.xpose.msra.mxu0 0.0
        %2898 = vmatprep.subr.mxu0 0.0
        %2899 = vmatpush1.xpose.msra.mxu0 0.0
        %2900 = vmatprep.subr.mxu0 0.0
        %2901 = vmatpush1.xpose.msra.mxu0 0.0
        %2902 = vmatprep.subr.mxu0 0.0
        %2903 = vmatpush1.xpose.msra.mxu0 0.0
        %2904 = vmatprep.subr.mxu0 0.0
        %2905 = vmatpush1.xpose.msra.mxu0 0.0
        %2906 = vmatprep.subr.mxu0 0.0
        %2907 = vmatpush1.xpose.msra.mxu0 0.0
        %2908 = vmatprep.subr.mxu0 0.0
        %2909 = vmatpush1.xpose.msra.mxu0 0.0
        %2910 = vmatprep.subr.mxu0 0.0
        %2911 = vmatpush1.xpose.msra.mxu0 0.0
        %2912 = vmatprep.subr.mxu0 0.0
        %2913 = vmatpush1.xpose.msra.mxu0 0.0
        %2914 = vmatprep.subr.mxu0 0.0
        %2915 = vmatpush1.xpose.msra.mxu0 0.0
        %2916 = vmatprep.subr.mxu0 0.0
        %2917 = vmatpush1.xpose.msra.mxu0 0.0
        %2918 = vmatprep.subr.mxu0 0.0
        %2919 = vmatpush1.xpose.msra.mxu0 0.0
        %2920 = vmatprep.subr.mxu0 0.0
        %2921 = vmatpush1.xpose.msra.mxu0 0.0
        %2922 = vmatprep.subr.mxu0 0.0
        %2923 = vmatpush1.xpose.msra.mxu0 0.0
        %2924 = vmatprep.subr.mxu0 0.0
        %2925 = vmatpush1.xpose.msra.mxu0 0.0
        %2926 = vmatprep.subr.mxu0 0.0
        %2927 = vmatpush1.xpose.msra.mxu0 0.0
        %2928 = vmatprep.subr.mxu0 0.0
        %2929 = vmatpush1.xpose.msra.mxu0 0.0
        %2930 = vmatprep.subr.mxu0 0.0
        %2931 = vmatpush1.xpose.msra.mxu0 0.0
        %2932 = vmatprep.subr.mxu0 0.0
        %2933 = vmatpush1.xpose.msra.mxu0 0.0
        %2934 = vmatprep.subr.mxu0 0.0
        %2935 = vmatpush1.xpose.msra.mxu0 0.0
        %2936 = vmatprep.subr.mxu0 0.0
        %2937 = vmatpush1.xpose.msra.mxu0 0.0
        %2938 = vmatprep.mubr.f32.mxu0 0.0
        %2939 = vmatmul.mubr.f32.gmra.mrb[0].mxu0 %v2868
        %v2940 = vpop.f32.mrb[0].mxu0
        %v2941 = vadd.f32 0.0, %v2940
        %v2942 = vpop.f32.mrb[0].mxu0
        %2943 = vdwg.mxu0
        %2944 = vrot.lane.b32.xlu0 %v1315, 112
        %v2945 = vpop.permute.xlu0 %2944
        %2946 = vrot.lane.b32.xlu0 %v1142, 112
        %v2947 = vpop.permute.xlu0 %2946
        %2948 = vrot.lane.b32.xlu0 %v1147, 112
        %v2949 = vpop.permute.xlu0 %2948
        %v2950 = vsel %vm1318, %v2945, 0
        %v2952 = vsel %vm1318, %v2947, 0
        %v2954 = vsel %vm1318, %v2949, 0
        %2956 = vmatprep.subr.mxu0 0.0
        %2957 = vmatpush1.xpose.msra.mxu0 %v2952
        %2958 = vmatprep.subr.mxu0 0.0
        %2959 = vmatpush1.xpose.msra.mxu0 %v2954
        %2960 = vmatprep.subr.mxu0 0.0
        %2961 = vmatpush1.xpose.msra.mxu0 0.0
        %2962 = vmatprep.subr.mxu0 0.0
        %2963 = vmatpush1.xpose.msra.mxu0 0.0
        %2964 = vmatprep.subr.mxu0 0.0
        %2965 = vmatpush1.xpose.msra.mxu0 0.0
        %2966 = vmatprep.subr.mxu0 0.0
        %2967 = vmatpush1.xpose.msra.mxu0 0.0
        %2968 = vmatprep.subr.mxu0 0.0
        %2969 = vmatpush1.xpose.msra.mxu0 0.0
        %2970 = vmatprep.subr.mxu0 0.0
        %2971 = vmatpush1.xpose.msra.mxu0 0.0
        %2972 = vmatprep.subr.mxu0 0.0
        %2973 = vmatpush1.xpose.msra.mxu0 0.0
        %2974 = vmatprep.subr.mxu0 0.0
        %2975 = vmatpush1.xpose.msra.mxu0 0.0
        %2976 = vmatprep.subr.mxu0 0.0
        %2977 = vmatpush1.xpose.msra.mxu0 0.0
        %2978 = vmatprep.subr.mxu0 0.0
        %2979 = vmatpush1.xpose.msra.mxu0 0.0
        %2980 = vmatprep.subr.mxu0 0.0
        %2981 = vmatpush1.xpose.msra.mxu0 0.0
        %2982 = vmatprep.subr.mxu0 0.0
        %2983 = vmatpush1.xpose.msra.mxu0 0.0
        %2984 = vmatprep.subr.mxu0 0.0
        %2985 = vmatpush1.xpose.msra.mxu0 0.0
        %2986 = vmatprep.subr.mxu0 0.0
        %2987 = vmatpush1.xpose.msra.mxu0 0.0
        %2988 = vmatprep.subr.mxu0 0.0
        %2989 = vmatpush1.xpose.msra.mxu0 0.0
        %2990 = vmatprep.subr.mxu0 0.0
        %2991 = vmatpush1.xpose.msra.mxu0 0.0
        %2992 = vmatprep.subr.mxu0 0.0
        %2993 = vmatpush1.xpose.msra.mxu0 0.0
        %2994 = vmatprep.subr.mxu0 0.0
        %2995 = vmatpush1.xpose.msra.mxu0 0.0
        %2996 = vmatprep.subr.mxu0 0.0
        %2997 = vmatpush1.xpose.msra.mxu0 0.0
        %2998 = vmatprep.subr.mxu0 0.0
        %2999 = vmatpush1.xpose.msra.mxu0 0.0
        %3000 = vmatprep.subr.mxu0 0.0
        %3001 = vmatpush1.xpose.msra.mxu0 0.0
        %3002 = vmatprep.subr.mxu0 0.0
        %3003 = vmatpush1.xpose.msra.mxu0 0.0
        %3004 = vmatprep.subr.mxu0 0.0
        %3005 = vmatpush1.xpose.msra.mxu0 0.0
        %3006 = vmatprep.subr.mxu0 0.0
        %3007 = vmatpush1.xpose.msra.mxu0 0.0
        %3008 = vmatprep.subr.mxu0 0.0
        %3009 = vmatpush1.xpose.msra.mxu0 0.0
        %3010 = vmatprep.subr.mxu0 0.0
        %3011 = vmatpush1.xpose.msra.mxu0 0.0
        %3012 = vmatprep.subr.mxu0 0.0
        %3013 = vmatpush1.xpose.msra.mxu0 0.0
        %3014 = vmatprep.subr.mxu0 0.0
        %3015 = vmatpush1.xpose.msra.mxu0 0.0
        %3016 = vmatprep.subr.mxu0 0.0
        %3017 = vmatpush1.xpose.msra.mxu0 0.0
        %3018 = vmatprep.subr.mxu0 0.0
        %3019 = vmatpush1.xpose.msra.mxu0 0.0
        %3020 = vmatprep.mubr.f32.mxu0 0.0
        %3021 = vmatmul.mubr.f32.gmra.mrb[0].mxu0 %v2950
        %v3022 = vpop.f32.mrb[0].mxu0
        %v3023 = vadd.f32 0.0, %v3022
        %v3024 = vpop.f32.mrb[0].mxu0
        %3025 = vdwg.mxu0
        %3026 = vrot.lane.b32.xlu0 %v1316, 112
        %v3027 = vpop.permute.xlu0 %3026
        %3028 = vrot.lane.b32.xlu0 %v1152, 112
        %v3029 = vpop.permute.xlu0 %3028
        %3030 = vrot.lane.b32.xlu0 %v1157, 112
        %v3031 = vpop.permute.xlu0 %3030
        %v3032 = vsel %vm1318, %v3027, 0
        %v3034 = vsel %vm1318, %v3029, 0
        %v3036 = vsel %vm1318, %v3031, 0
        %3038 = vmatprep.subr.mxu0 0.0
        %3039 = vmatpush1.xpose.msra.mxu0 %v3034
        %3040 = vmatprep.subr.mxu0 0.0
        %3041 = vmatpush1.xpose.msra.mxu0 %v3036
        %3042 = vmatprep.subr.mxu0 0.0
        %3043 = vmatpush1.xpose.msra.mxu0 0.0
        %3044 = vmatprep.subr.mxu0 0.0
        %3045 = vmatpush1.xpose.msra.mxu0 0.0
        %3046 = vmatprep.subr.mxu0 0.0
        %3047 = vmatpush1.xpose.msra.mxu0 0.0
        %3048 = vmatprep.subr.mxu0 0.0
        %3049 = vmatpush1.xpose.msra.mxu0 0.0
        %3050 = vmatprep.subr.mxu0 0.0
        %3051 = vmatpush1.xpose.msra.mxu0 0.0
        %3052 = vmatprep.subr.mxu0 0.0
        %3053 = vmatpush1.xpose.msra.mxu0 0.0
        %3054 = vmatprep.subr.mxu0 0.0
        %3055 = vmatpush1.xpose.msra.mxu0 0.0
        %3056 = vmatprep.subr.mxu0 0.0
        %3057 = vmatpush1.xpose.msra.mxu0 0.0
        %3058 = vmatprep.subr.mxu0 0.0
        %3059 = vmatpush1.xpose.msra.mxu0 0.0
        %3060 = vmatprep.subr.mxu0 0.0
        %3061 = vmatpush1.xpose.msra.mxu0 0.0
        %3062 = vmatprep.subr.mxu0 0.0
        %3063 = vmatpush1.xpose.msra.mxu0 0.0
        %3064 = vmatprep.subr.mxu0 0.0
        %3065 = vmatpush1.xpose.msra.mxu0 0.0
        %3066 = vmatprep.subr.mxu0 0.0
        %3067 = vmatpush1.xpose.msra.mxu0 0.0
        %3068 = vmatprep.subr.mxu0 0.0
        %3069 = vmatpush1.xpose.msra.mxu0 0.0
        %3070 = vmatprep.subr.mxu0 0.0
        %3071 = vmatpush1.xpose.msra.mxu0 0.0
        %3072 = vmatprep.subr.mxu0 0.0
        %3073 = vmatpush1.xpose.msra.mxu0 0.0
        %3074 = vmatprep.subr.mxu0 0.0
        %3075 = vmatpush1.xpose.msra.mxu0 0.0
        %3076 = vmatprep.subr.mxu0 0.0
        %3077 = vmatpush1.xpose.msra.mxu0 0.0
        %3078 = vmatprep.subr.mxu0 0.0
        %3079 = vmatpush1.xpose.msra.mxu0 0.0
        %3080 = vmatprep.subr.mxu0 0.0
        %3081 = vmatpush1.xpose.msra.mxu0 0.0
        %3082 = vmatprep.subr.mxu0 0.0
        %3083 = vmatpush1.xpose.msra.mxu0 0.0
        %3084 = vmatprep.subr.mxu0 0.0
        %3085 = vmatpush1.xpose.msra.mxu0 0.0
        %3086 = vmatprep.subr.mxu0 0.0
        %3087 = vmatpush1.xpose.msra.mxu0 0.0
        %3088 = vmatprep.subr.mxu0 0.0
        %3089 = vmatpush1.xpose.msra.mxu0 0.0
        %3090 = vmatprep.subr.mxu0 0.0
        %3091 = vmatpush1.xpose.msra.mxu0 0.0
        %3092 = vmatprep.subr.mxu0 0.0
        %3093 = vmatpush1.xpose.msra.mxu0 0.0
        %3094 = vmatprep.subr.mxu0 0.0
        %3095 = vmatpush1.xpose.msra.mxu0 0.0
        %3096 = vmatprep.subr.mxu0 0.0
        %3097 = vmatpush1.xpose.msra.mxu0 0.0
        %3098 = vmatprep.subr.mxu0 0.0
        %3099 = vmatpush1.xpose.msra.mxu0 0.0
        %3100 = vmatprep.subr.mxu0 0.0
        %3101 = vmatpush1.xpose.msra.mxu0 0.0
        %3102 = vmatprep.mubr.f32.mxu0 0.0
        %3103 = vmatmul.mubr.f32.gmra.mrb[0].mxu0 %v3032
        %v3104 = vpop.f32.mrb[0].mxu0
        %v3105 = vadd.f32 0.0, %v3104
        %v3106 = vpop.f32.mrb[0].mxu0
        %3107 = vdwg.mxu0
        %3108 = vrot.lane.b32.xlu0 %v1317, 112
        %v3109 = vpop.permute.xlu0 %3108
        %3110 = vrot.lane.b32.xlu0 %v1162, 112
        %v3111 = vpop.permute.xlu0 %3110
        %3112 = vrot.lane.b32.xlu0 %v1167, 112
        %v3113 = vpop.permute.xlu0 %3112
        %v3114 = vsel %vm1318, %v3109, 0
        %v3116 = vsel %vm1318, %v3111, 0
        %v3118 = vsel %vm1318, %v3113, 0
        %3120 = vmatprep.subr.mxu0 0.0
        %3121 = vmatpush1.xpose.msra.mxu0 %v3116
        %3122 = vmatprep.subr.mxu0 0.0
        %3123 = vmatpush1.xpose.msra.mxu0 %v3118
        %3124 = vmatprep.subr.mxu0 0.0
        %3125 = vmatpush1.xpose.msra.mxu0 0.0
        %3126 = vmatprep.subr.mxu0 0.0
        %3127 = vmatpush1.xpose.msra.mxu0 0.0
        %3128 = vmatprep.subr.mxu0 0.0
        %3129 = vmatpush1.xpose.msra.mxu0 0.0
        %3130 = vmatprep.subr.mxu0 0.0
        %3131 = vmatpush1.xpose.msra.mxu0 0.0
        %3132 = vmatprep.subr.mxu0 0.0
        %3133 = vmatpush1.xpose.msra.mxu0 0.0
        %3134 = vmatprep.subr.mxu0 0.0
        %3135 = vmatpush1.xpose.msra.mxu0 0.0
        %3136 = vmatprep.subr.mxu0 0.0
        %3137 = vmatpush1.xpose.msra.mxu0 0.0
        %3138 = vmatprep.subr.mxu0 0.0
        %3139 = vmatpush1.xpose.msra.mxu0 0.0
        %3140 = vmatprep.subr.mxu0 0.0
        %3141 = vmatpush1.xpose.msra.mxu0 0.0
        %3142 = vmatprep.subr.mxu0 0.0
        %3143 = vmatpush1.xpose.msra.mxu0 0.0
        %3144 = vmatprep.subr.mxu0 0.0
        %3145 = vmatpush1.xpose.msra.mxu0 0.0
        %3146 = vmatprep.subr.mxu0 0.0
        %3147 = vmatpush1.xpose.msra.mxu0 0.0
        %3148 = vmatprep.subr.mxu0 0.0
        %3149 = vmatpush1.xpose.msra.mxu0 0.0
        %3150 = vmatprep.subr.mxu0 0.0
        %3151 = vmatpush1.xpose.msra.mxu0 0.0
        %3152 = vmatprep.subr.mxu0 0.0
        %3153 = vmatpush1.xpose.msra.mxu0 0.0
        %3154 = vmatprep.subr.mxu0 0.0
        %3155 = vmatpush1.xpose.msra.mxu0 0.0
        %3156 = vmatprep.subr.mxu0 0.0
        %3157 = vmatpush1.xpose.msra.mxu0 0.0
        %3158 = vmatprep.subr.mxu0 0.0
        %3159 = vmatpush1.xpose.msra.mxu0 0.0
        %3160 = vmatprep.subr.mxu0 0.0
        %3161 = vmatpush1.xpose.msra.mxu0 0.0
        %3162 = vmatprep.subr.mxu0 0.0
        %3163 = vmatpush1.xpose.msra.mxu0 0.0
        %3164 = vmatprep.subr.mxu0 0.0
        %3165 = vmatpush1.xpose.msra.mxu0 0.0
        %3166 = vmatprep.subr.mxu0 0.0
        %3167 = vmatpush1.xpose.msra.mxu0 0.0
        %3168 = vmatprep.subr.mxu0 0.0
        %3169 = vmatpush1.xpose.msra.mxu0 0.0
        %3170 = vmatprep.subr.mxu0 0.0
        %3171 = vmatpush1.xpose.msra.mxu0 0.0
        %3172 = vmatprep.subr.mxu0 0.0
        %3173 = vmatpush1.xpose.msra.mxu0 0.0
        %3174 = vmatprep.subr.mxu0 0.0
        %3175 = vmatpush1.xpose.msra.mxu0 0.0
        %3176 = vmatprep.subr.mxu0 0.0
        %3177 = vmatpush1.xpose.msra.mxu0 0.0
        %3178 = vmatprep.subr.mxu0 0.0
        %3179 = vmatpush1.xpose.msra.mxu0 0.0
        %3180 = vmatprep.subr.mxu0 0.0
        %3181 = vmatpush1.xpose.msra.mxu0 0.0
        %3182 = vmatprep.subr.mxu0 0.0
        %3183 = vmatpush1.xpose.msra.mxu0 0.0
        %3184 = vmatprep.mubr.f32.mxu0 0.0
        %3185 = vmatmul.mubr.f32.gmra.mrb[0].mxu0 %v3114
        %v3186 = vpop.f32.mrb[0].mxu0
        %v3187 = vadd.f32 0.0, %v3186
        %v3188 = vpop.f32.mrb[0].mxu0
        %3189 = vdwg.mxu0
        %v3190 = vsel %vm1635, %v2941, -inf
        %3191 = vmax.xlane.f32.xlu0 %v3190
        %v3192 = vpop.xlane.xlu0 %3191
        %v3193 = vsel %vm1635, %v3023, -inf
        %3194 = vmax.xlane.f32.xlu0 %v3193
        %v3195 = vpop.xlane.xlu0 %3194
        %v3196 = vsel %vm1635, %v3105, -inf
        %3197 = vmax.xlane.f32.xlu0 %v3196
        %v3198 = vpop.xlane.xlu0 %3197
        %v3199 = vsel %vm1635, %v3187, -inf
        %3200 = vmax.xlane.f32.xlu0 %v3199
        %v3201 = vpop.xlane.xlu0 %3200
        %v3202 = vsub.f32 %v2941, %v3192
        %v3203 = vsub.f32 %v3023, %v3195
        %v3204 = vsub.f32 %v3105, %v3198
        %v3205 = vsub.f32 %v3187, %v3201
        %v3206 = vmul.f32 %v3202, 1.442695
        %v3207 = vpow.pop %v3206
        %v3208 = vmul.f32 %v3203, 1.442695
        %v3209 = vpow.pop %v3208
        %v3210 = vmul.f32 %v3204, 1.442695
        %v3211 = vpow.pop %v3210
        %v3212 = vmul.f32 %v3205, 1.442695
        %v3213 = vpow.pop %v3212
        %v3214 = vsel %vm1635, %v3207, 0.0
        %3215 = vadd.xlane.f32.xlu0 %v3214
        %v3216 = vpop.xlane.xlu0 %3215
        %v3217 = vsel %vm1635, %v3209, 0.0
        %3218 = vadd.xlane.f32.xlu0 %v3217
        %v3219 = vpop.xlane.xlu0 %3218
        %v3220 = vsel %vm1635, %v3211, 0.0
        %3221 = vadd.xlane.f32.xlu0 %v3220
        %v3222 = vpop.xlane.xlu0 %3221
        %v3223 = vsel %vm1635, %v3213, 0.0
        %3224 = vadd.xlane.f32.xlu0 %v3223
        %v3225 = vpop.xlane.xlu0 %3224
        %v3226 = vrcp.pop %v3216
        %v3227 = vrcp.pop %v3219
        %v3228 = vrcp.pop %v3222
        %v3229 = vrcp.pop %v3225
        %v3230 = vmul.f32 %v3207, %v3226
        %v3231 = vmul.f32 %v3209, %v3227
        %v3232 = vmul.f32 %v3211, %v3228
        %v3233 = vmul.f32 %v3213, %v3229
        %3234 = vrot.lane.b32.xlu0 %v1272, 112
        %v3235 = vpop.permute.xlu0 %3234
        %3236 = vrot.lane.b32.xlu0 %v1277, 112
        %v3237 = vpop.permute.xlu0 %3236
        %v3241 = vsel %vm1635, %v3230, 0
        %3243 = vmatprep.subr.mxu0 0.0
        %3244 = vmatpush1.msra.mxu0 %v3235
        %3245 = vmatprep.subr.mxu0 0.0
        %3246 = vmatpush1.msra.mxu0 %v3237
        %3247 = vmatprep.subr.mxu0 0.0
        %3248 = vmatpush1.msra.mxu0 0.0
        %3249 = vmatprep.subr.mxu0 0.0
        %3250 = vmatpush1.msra.mxu0 0.0
        %3251 = vmatprep.subr.mxu0 0.0
        %3252 = vmatpush1.msra.mxu0 0.0
        %3253 = vmatprep.subr.mxu0 0.0
        %3254 = vmatpush1.msra.mxu0 0.0
        %3255 = vmatprep.subr.mxu0 0.0
        %3256 = vmatpush1.msra.mxu0 0.0
        %3257 = vmatprep.subr.mxu0 0.0
        %3258 = vmatpush1.msra.mxu0 0.0
        %3259 = vmatprep.subr.mxu0 0.0
        %3260 = vmatpush1.msra.mxu0 0.0
        %3261 = vmatprep.subr.mxu0 0.0
        %3262 = vmatpush1.msra.mxu0 0.0
        %3263 = vmatprep.subr.mxu0 0.0
        %3264 = vmatpush1.msra.mxu0 0.0
        %3265 = vmatprep.subr.mxu0 0.0
        %3266 = vmatpush1.msra.mxu0 0.0
        %3267 = vmatprep.subr.mxu0 0.0
        %3268 = vmatpush1.msra.mxu0 0.0
        %3269 = vmatprep.subr.mxu0 0.0
        %3270 = vmatpush1.msra.mxu0 0.0
        %3271 = vmatprep.subr.mxu0 0.0
        %3272 = vmatpush1.msra.mxu0 0.0
        %3273 = vmatprep.subr.mxu0 0.0
        %3274 = vmatpush1.msra.mxu0 0.0
        %3275 = vmatprep.subr.mxu0 0.0
        %3276 = vmatpush1.msra.mxu0 0.0
        %3277 = vmatprep.subr.mxu0 0.0
        %3278 = vmatpush1.msra.mxu0 0.0
        %3279 = vmatprep.subr.mxu0 0.0
        %3280 = vmatpush1.msra.mxu0 0.0
        %3281 = vmatprep.subr.mxu0 0.0
        %3282 = vmatpush1.msra.mxu0 0.0
        %3283 = vmatprep.subr.mxu0 0.0
        %3284 = vmatpush1.msra.mxu0 0.0
        %3285 = vmatprep.subr.mxu0 0.0
        %3286 = vmatpush1.msra.mxu0 0.0
        %3287 = vmatprep.subr.mxu0 0.0
        %3288 = vmatpush1.msra.mxu0 0.0
        %3289 = vmatprep.subr.mxu0 0.0
        %3290 = vmatpush1.msra.mxu0 0.0
        %3291 = vmatprep.subr.mxu0 0.0
        %3292 = vmatpush1.msra.mxu0 0.0
        %3293 = vmatprep.subr.mxu0 0.0
        %3294 = vmatpush1.msra.mxu0 0.0
        %3295 = vmatprep.subr.mxu0 0.0
        %3296 = vmatpush1.msra.mxu0 0.0
        %3297 = vmatprep.subr.mxu0 0.0
        %3298 = vmatpush1.msra.mxu0 0.0
        %3299 = vmatprep.subr.mxu0 0.0
        %3300 = vmatpush1.msra.mxu0 0.0
        %3301 = vmatprep.subr.mxu0 0.0
        %3302 = vmatpush1.msra.mxu0 0.0
        %3303 = vmatprep.subr.mxu0 0.0
        %3304 = vmatpush1.msra.mxu0 0.0
        %3305 = vmatprep.subr.mxu0 0.0
        %3306 = vmatpush1.msra.mxu0 0.0
        %3307 = vmatprep.mubr.f32.mxu0 0.0
        %3308 = vmatmul.mubr.f32.gmra.mrb[0].mxu0 %v3241
        %v3309 = vpop.f32.mrb[0].mxu0
        %v3310 = vadd.f32 0.0, %v3309
        %v3311 = vpop.f32.mrb[0].mxu0
        %3312 = vdwg.mxu0
        %3313 = vrot.lane.b32.xlu0 %v1282, 112
        %v3314 = vpop.permute.xlu0 %3313
        %3315 = vrot.lane.b32.xlu0 %v1287, 112
        %v3316 = vpop.permute.xlu0 %3315
        %v3320 = vsel %vm1635, %v3231, 0
        %3322 = vmatprep.subr.mxu0 0.0
        %3323 = vmatpush1.msra.mxu0 %v3314
        %3324 = vmatprep.subr.mxu0 0.0
        %3325 = vmatpush1.msra.mxu0 %v3316
        %3326 = vmatprep.subr.mxu0 0.0
        %3327 = vmatpush1.msra.mxu0 0.0
        %3328 = vmatprep.subr.mxu0 0.0
        %3329 = vmatpush1.msra.mxu0 0.0
        %3330 = vmatprep.subr.mxu0 0.0
        %3331 = vmatpush1.msra.mxu0 0.0
        %3332 = vmatprep.subr.mxu0 0.0
        %3333 = vmatpush1.msra.mxu0 0.0
        %3334 = vmatprep.subr.mxu0 0.0
        %3335 = vmatpush1.msra.mxu0 0.0
        %3336 = vmatprep.subr.mxu0 0.0
        %3337 = vmatpush1.msra.mxu0 0.0
        %3338 = vmatprep.subr.mxu0 0.0
        %3339 = vmatpush1.msra.mxu0 0.0
        %3340 = vmatprep.subr.mxu0 0.0
        %3341 = vmatpush1.msra.mxu0 0.0
        %3342 = vmatprep.subr.mxu0 0.0
        %3343 = vmatpush1.msra.mxu0 0.0
        %3344 = vmatprep.subr.mxu0 0.0
        %3345 = vmatpush1.msra.mxu0 0.0
        %3346 = vmatprep.subr.mxu0 0.0
        %3347 = vmatpush1.msra.mxu0 0.0
        %3348 = vmatprep.subr.mxu0 0.0
        %3349 = vmatpush1.msra.mxu0 0.0
        %3350 = vmatprep.subr.mxu0 0.0
        %3351 = vmatpush1.msra.mxu0 0.0
        %3352 = vmatprep.subr.mxu0 0.0
        %3353 = vmatpush1.msra.mxu0 0.0
        %3354 = vmatprep.subr.mxu0 0.0
        %3355 = vmatpush1.msra.mxu0 0.0
        %3356 = vmatprep.subr.mxu0 0.0
        %3357 = vmatpush1.msra.mxu0 0.0
        %3358 = vmatprep.subr.mxu0 0.0
        %3359 = vmatpush1.msra.mxu0 0.0
        %3360 = vmatprep.subr.mxu0 0.0
        %3361 = vmatpush1.msra.mxu0 0.0
        %3362 = vmatprep.subr.mxu0 0.0
        %3363 = vmatpush1.msra.mxu0 0.0
        %3364 = vmatprep.subr.mxu0 0.0
        %3365 = vmatpush1.msra.mxu0 0.0
        %3366 = vmatprep.subr.mxu0 0.0
        %3367 = vmatpush1.msra.mxu0 0.0
        %3368 = vmatprep.subr.mxu0 0.0
        %3369 = vmatpush1.msra.mxu0 0.0
        %3370 = vmatprep.subr.mxu0 0.0
        %3371 = vmatpush1.msra.mxu0 0.0
        %3372 = vmatprep.subr.mxu0 0.0
        %3373 = vmatpush1.msra.mxu0 0.0
        %3374 = vmatprep.subr.mxu0 0.0
        %3375 = vmatpush1.msra.mxu0 0.0
        %3376 = vmatprep.subr.mxu0 0.0
        %3377 = vmatpush1.msra.mxu0 0.0
        %3378 = vmatprep.subr.mxu0 0.0
        %3379 = vmatpush1.msra.mxu0 0.0
        %3380 = vmatprep.subr.mxu0 0.0
        %3381 = vmatpush1.msra.mxu0 0.0
        %3382 = vmatprep.subr.mxu0 0.0
        %3383 = vmatpush1.msra.mxu0 0.0
        %3384 = vmatprep.subr.mxu0 0.0
        %3385 = vmatpush1.msra.mxu0 0.0
        %3386 = vmatprep.mubr.f32.mxu0 0.0
        %3387 = vmatmul.mubr.f32.gmra.mrb[0].mxu0 %v3320
        %v3388 = vpop.f32.mrb[0].mxu0
        %v3389 = vadd.f32 0.0, %v3388
        %v3390 = vpop.f32.mrb[0].mxu0
        %3391 = vdwg.mxu0
        %3392 = vrot.lane.b32.xlu0 %v1292, 112
        %v3393 = vpop.permute.xlu0 %3392
        %3394 = vrot.lane.b32.xlu0 %v1297, 112
        %v3395 = vpop.permute.xlu0 %3394
        %v3399 = vsel %vm1635, %v3232, 0
        %3401 = vmatprep.subr.mxu0 0.0
        %3402 = vmatpush1.msra.mxu0 %v3393
        %3403 = vmatprep.subr.mxu0 0.0
        %3404 = vmatpush1.msra.mxu0 %v3395
        %3405 = vmatprep.subr.mxu0 0.0
        %3406 = vmatpush1.msra.mxu0 0.0
        %3407 = vmatprep.subr.mxu0 0.0
        %3408 = vmatpush1.msra.mxu0 0.0
        %3409 = vmatprep.subr.mxu0 0.0
        %3410 = vmatpush1.msra.mxu0 0.0
        %3411 = vmatprep.subr.mxu0 0.0
        %3412 = vmatpush1.msra.mxu0 0.0
        %3413 = vmatprep.subr.mxu0 0.0
        %3414 = vmatpush1.msra.mxu0 0.0
        %3415 = vmatprep.subr.mxu0 0.0
        %3416 = vmatpush1.msra.mxu0 0.0
        %3417 = vmatprep.subr.mxu0 0.0
        %3418 = vmatpush1.msra.mxu0 0.0
        %3419 = vmatprep.subr.mxu0 0.0
        %3420 = vmatpush1.msra.mxu0 0.0
        %3421 = vmatprep.subr.mxu0 0.0
        %3422 = vmatpush1.msra.mxu0 0.0
        %3423 = vmatprep.subr.mxu0 0.0
        %3424 = vmatpush1.msra.mxu0 0.0
        %3425 = vmatprep.subr.mxu0 0.0
        %3426 = vmatpush1.msra.mxu0 0.0
        %3427 = vmatprep.subr.mxu0 0.0
        %3428 = vmatpush1.msra.mxu0 0.0
        %3429 = vmatprep.subr.mxu0 0.0
        %3430 = vmatpush1.msra.mxu0 0.0
        %3431 = vmatprep.subr.mxu0 0.0
        %3432 = vmatpush1.msra.mxu0 0.0
        %3433 = vmatprep.subr.mxu0 0.0
        %3434 = vmatpush1.msra.mxu0 0.0
        %3435 = vmatprep.subr.mxu0 0.0
        %3436 = vmatpush1.msra.mxu0 0.0
        %3437 = vmatprep.subr.mxu0 0.0
        %3438 = vmatpush1.msra.mxu0 0.0
        %3439 = vmatprep.subr.mxu0 0.0
        %3440 = vmatpush1.msra.mxu0 0.0
        %3441 = vmatprep.subr.mxu0 0.0
        %3442 = vmatpush1.msra.mxu0 0.0
        %3443 = vmatprep.subr.mxu0 0.0
        %3444 = vmatpush1.msra.mxu0 0.0
        %3445 = vmatprep.subr.mxu0 0.0
        %3446 = vmatpush1.msra.mxu0 0.0
        %3447 = vmatprep.subr.mxu0 0.0
        %3448 = vmatpush1.msra.mxu0 0.0
        %3449 = vmatprep.subr.mxu0 0.0
        %3450 = vmatpush1.msra.mxu0 0.0
        %3451 = vmatprep.subr.mxu0 0.0
        %3452 = vmatpush1.msra.mxu0 0.0
        %3453 = vmatprep.subr.mxu0 0.0
        %3454 = vmatpush1.msra.mxu0 0.0
        %3455 = vmatprep.subr.mxu0 0.0
        %3456 = vmatpush1.msra.mxu0 0.0
        %3457 = vmatprep.subr.mxu0 0.0
        %3458 = vmatpush1.msra.mxu0 0.0
        %3459 = vmatprep.subr.mxu0 0.0
        %3460 = vmatpush1.msra.mxu0 0.0
        %3461 = vmatprep.subr.mxu0 0.0
        %3462 = vmatpush1.msra.mxu0 0.0
        %3463 = vmatprep.subr.mxu0 0.0
        %3464 = vmatpush1.msra.mxu0 0.0
        %3465 = vmatprep.mubr.f32.mxu0 0.0
        %3466 = vmatmul.mubr.f32.gmra.mrb[0].mxu0 %v3399
        %v3467 = vpop.f32.mrb[0].mxu0
        %v3468 = vadd.f32 0.0, %v3467
        %v3469 = vpop.f32.mrb[0].mxu0
        %3470 = vdwg.mxu0
        %3471 = vrot.lane.b32.xlu0 %v1302, 112
        %v3472 = vpop.permute.xlu0 %3471
        %3473 = vrot.lane.b32.xlu0 %v1307, 112
        %v3474 = vpop.permute.xlu0 %3473
        %v3478 = vsel %vm1635, %v3233, 0
        %3480 = vmatprep.subr.mxu0 0.0
        %3481 = vmatpush1.msra.mxu0 %v3472
        %3482 = vmatprep.subr.mxu0 0.0
        %3483 = vmatpush1.msra.mxu0 %v3474
        %3484 = vmatprep.subr.mxu0 0.0
        %3485 = vmatpush1.msra.mxu0 0.0
        %3486 = vmatprep.subr.mxu0 0.0
        %3487 = vmatpush1.msra.mxu0 0.0
        %3488 = vmatprep.subr.mxu0 0.0
        %3489 = vmatpush1.msra.mxu0 0.0
        %3490 = vmatprep.subr.mxu0 0.0
        %3491 = vmatpush1.msra.mxu0 0.0
        %3492 = vmatprep.subr.mxu0 0.0
        %3493 = vmatpush1.msra.mxu0 0.0
        %3494 = vmatprep.subr.mxu0 0.0
        %3495 = vmatpush1.msra.mxu0 0.0
        %3496 = vmatprep.subr.mxu0 0.0
        %3497 = vmatpush1.msra.mxu0 0.0
        %3498 = vmatprep.subr.mxu0 0.0
        %3499 = vmatpush1.msra.mxu0 0.0
        %3500 = vmatprep.subr.mxu0 0.0
        %3501 = vmatpush1.msra.mxu0 0.0
        %3502 = vmatprep.subr.mxu0 0.0
        %3503 = vmatpush1.msra.mxu0 0.0
        %3504 = vmatprep.subr.mxu0 0.0
        %3505 = vmatpush1.msra.mxu0 0.0
        %3506 = vmatprep.subr.mxu0 0.0
        %3507 = vmatpush1.msra.mxu0 0.0
        %3508 = vmatprep.subr.mxu0 0.0
        %3509 = vmatpush1.msra.mxu0 0.0
        %3510 = vmatprep.subr.mxu0 0.0
        %3511 = vmatpush1.msra.mxu0 0.0
        %3512 = vmatprep.subr.mxu0 0.0
        %3513 = vmatpush1.msra.mxu0 0.0
        %3514 = vmatprep.subr.mxu0 0.0
        %3515 = vmatpush1.msra.mxu0 0.0
        %3516 = vmatprep.subr.mxu0 0.0
        %3517 = vmatpush1.msra.mxu0 0.0
        %3518 = vmatprep.subr.mxu0 0.0
        %3519 = vmatpush1.msra.mxu0 0.0
        %3520 = vmatprep.subr.mxu0 0.0
        %3521 = vmatpush1.msra.mxu0 0.0
        %3522 = vmatprep.subr.mxu0 0.0
        %3523 = vmatpush1.msra.mxu0 0.0
        %3524 = vmatprep.subr.mxu0 0.0
        %3525 = vmatpush1.msra.mxu0 0.0
        %3526 = vmatprep.subr.mxu0 0.0
        %3527 = vmatpush1.msra.mxu0 0.0
        %3528 = vmatprep.subr.mxu0 0.0
        %3529 = vmatpush1.msra.mxu0 0.0
        %3530 = vmatprep.subr.mxu0 0.0
        %3531 = vmatpush1.msra.mxu0 0.0
        %3532 = vmatprep.subr.mxu0 0.0
        %3533 = vmatpush1.msra.mxu0 0.0
        %3534 = vmatprep.subr.mxu0 0.0
        %3535 = vmatpush1.msra.mxu0 0.0
        %3536 = vmatprep.subr.mxu0 0.0
        %3537 = vmatpush1.msra.mxu0 0.0
        %3538 = vmatprep.subr.mxu0 0.0
        %3539 = vmatpush1.msra.mxu0 0.0
        %3540 = vmatprep.subr.mxu0 0.0
        %3541 = vmatpush1.msra.mxu0 0.0
        %3542 = vmatprep.subr.mxu0 0.0
        %3543 = vmatpush1.msra.mxu0 0.0
        %3544 = vmatprep.mubr.f32.mxu0 0.0
        %3545 = vmatmul.mubr.f32.gmra.mrb[0].mxu0 %v3478
        %v3546 = vpop.f32.mrb[0].mxu0
        %v3547 = vadd.f32 0.0, %v3546
        %v3548 = vpop.f32.mrb[0].mxu0
        %3549 = vdwg.mxu0
        %v3551 = vsel %vm1318, %v3310, 0
        %v3554 = vsel %vm1318, %v3389, 0
        %v3557 = vsel %vm1318, %v3468, 0
        %v3560 = vsel %vm1318, %v3547, 0
        %3562 = vmatprep.subr.mxu0 0.0
        %3563 = vmatpush1.msra.mxu0 %v1312
        %3564 = vmatprep.subr.mxu0 0.0
        %3565 = vmatpush1.msra.mxu0 0.0
        %3566 = vmatprep.subr.mxu0 0.0
        %3567 = vmatpush1.msra.mxu0 0.0
        %3568 = vmatprep.subr.mxu0 0.0
        %3569 = vmatpush1.msra.mxu0 0.0
        %3570 = vmatprep.subr.mxu0 0.0
        %3571 = vmatpush1.msra.mxu0 0.0
        %3572 = vmatprep.subr.mxu0 0.0
        %3573 = vmatpush1.msra.mxu0 0.0
        %3574 = vmatprep.subr.mxu0 0.0
        %3575 = vmatpush1.msra.mxu0 0.0
        %3576 = vmatprep.subr.mxu0 0.0
        %3577 = vmatpush1.msra.mxu0 0.0
        %3578 = vmatprep.subr.mxu0 0.0
        %3579 = vmatpush1.msra.mxu0 0.0
        %3580 = vmatprep.subr.mxu0 0.0
        %3581 = vmatpush1.msra.mxu0 0.0
        %3582 = vmatprep.subr.mxu0 0.0
        %3583 = vmatpush1.msra.mxu0 0.0
        %3584 = vmatprep.subr.mxu0 0.0
        %3585 = vmatpush1.msra.mxu0 0.0
        %3586 = vmatprep.subr.mxu0 0.0
        %3587 = vmatpush1.msra.mxu0 0.0
        %3588 = vmatprep.subr.mxu0 0.0
        %3589 = vmatpush1.msra.mxu0 0.0
        %3590 = vmatprep.subr.mxu0 0.0
        %3591 = vmatpush1.msra.mxu0 0.0
        %3592 = vmatprep.subr.mxu0 0.0
        %3593 = vmatpush1.msra.mxu0 0.0
        %3594 = vmatprep.subr.mxu0 0.0
        %3595 = vmatpush1.msra.mxu0 0.0
        %3596 = vmatprep.subr.mxu0 0.0
        %3597 = vmatpush1.msra.mxu0 0.0
        %3598 = vmatprep.subr.mxu0 0.0
        %3599 = vmatpush1.msra.mxu0 0.0
        %3600 = vmatprep.subr.mxu0 0.0
        %3601 = vmatpush1.msra.mxu0 0.0
        %3602 = vmatprep.subr.mxu0 0.0
        %3603 = vmatpush1.msra.mxu0 0.0
        %3604 = vmatprep.subr.mxu0 0.0
        %3605 = vmatpush1.msra.mxu0 0.0
        %3606 = vmatprep.subr.mxu0 0.0
        %3607 = vmatpush1.msra.mxu0 0.0
        %3608 = vmatprep.subr.mxu0 0.0
        %3609 = vmatpush1.msra.mxu0 0.0
        %3610 = vmatprep.subr.mxu0 0.0
        %3611 = vmatpush1.msra.mxu0 0.0
        %3612 = vmatprep.subr.mxu0 0.0
        %3613 = vmatpush1.msra.mxu0 0.0
        %3614 = vmatprep.subr.mxu0 0.0
        %3615 = vmatpush1.msra.mxu0 0.0
        %3616 = vmatprep.subr.mxu0 0.0
        %3617 = vmatpush1.msra.mxu0 0.0
        %3618 = vmatprep.subr.mxu0 0.0
        %3619 = vmatpush1.msra.mxu0 0.0
        %3620 = vmatprep.subr.mxu0 0.0
        %3621 = vmatpush1.msra.mxu0 0.0
        %3622 = vmatprep.subr.mxu0 0.0
        %3623 = vmatpush1.msra.mxu0 0.0
        %3624 = vmatprep.subr.mxu0 0.0
        %3625 = vmatpush1.msra.mxu0 0.0
        %3626 = vmatprep.mubr.f32.mxu0 0.0
        %3627 = vmatmul.mubr.f32.gmra.mrb[0].mxu0 %v3551
        %v3628 = vpop.f32.mrb[0].mxu0
        %v3629 = vadd.f32 0.0, %v3628
        %v3630 = vpop.f32.mrb[0].mxu0
        %3631 = vmatprep.mubr.f32.mxu0 0.0
        %3632 = vmatmul.mubr.f32.gmra.mrb[0].mxu0 %v3554
        %v3633 = vpop.f32.mrb[0].mxu0
        %v3634 = vadd.f32 0.0, %v3633
        %v3635 = vpop.f32.mrb[0].mxu0
        %3636 = vmatprep.mubr.f32.mxu0 0.0
        %3637 = vmatmul.mubr.f32.gmra.mrb[0].mxu0 %v3557
        %v3638 = vpop.f32.mrb[0].mxu0
        %v3639 = vadd.f32 0.0, %v3638
        %v3640 = vpop.f32.mrb[0].mxu0
        %3641 = vmatprep.mubr.f32.mxu0 0.0
        %3642 = vmatmul.mubr.f32.gmra.mrb[0].mxu0 %v3560
        %v3643 = vpop.f32.mrb[0].mxu0
        %v3644 = vadd.f32 0.0, %v3643
        %v3645 = vpop.f32.mrb[0].mxu0
        %3646 = vdwg.mxu0
        %v3647 = vadd.f32 %v2844, %v3629
        %v3648 = vadd.f32 %v2849, %v3634
        %v3649 = vadd.f32 %v2854, %v3639
        %v3650 = vadd.f32 %v2859, %v3644
        %3651 = vrot.lane.b32.xlu0 %v1314, 104
        %v3652 = vpop.permute.xlu0 %3651
        %3653 = vrot.lane.b32.xlu0 %v1132, 104
        %v3654 = vpop.permute.xlu0 %3653
        %3655 = vrot.lane.b32.xlu0 %v1137, 104
        %v3656 = vpop.permute.xlu0 %3655
        %v3657 = vsel %vm1318, %v3652, 0
        %v3659 = vsel %vm1318, %v3654, 0
        %v3661 = vsel %vm1318, %v3656, 0
        %3663 = vmatprep.subr.mxu0 0.0
        %3664 = vmatpush1.xpose.msra.mxu0 %v3659
        %3665 = vmatprep.subr.mxu0 0.0
        %3666 = vmatpush1.xpose.msra.mxu0 %v3661
        %3667 = vmatprep.subr.mxu0 0.0
        %3668 = vmatpush1.xpose.msra.mxu0 0.0
        %3669 = vmatprep.subr.mxu0 0.0
        %3670 = vmatpush1.xpose.msra.mxu0 0.0
        %3671 = vmatprep.subr.mxu0 0.0
        %3672 = vmatpush1.xpose.msra.mxu0 0.0
        %3673 = vmatprep.subr.mxu0 0.0
        %3674 = vmatpush1.xpose.msra.mxu0 0.0
        %3675 = vmatprep.subr.mxu0 0.0
        %3676 = vmatpush1.xpose.msra.mxu0 0.0
        %3677 = vmatprep.subr.mxu0 0.0
        %3678 = vmatpush1.xpose.msra.mxu0 0.0
        %3679 = vmatprep.subr.mxu0 0.0
        %3680 = vmatpush1.xpose.msra.mxu0 0.0
        %3681 = vmatprep.subr.mxu0 0.0
        %3682 = vmatpush1.xpose.msra.mxu0 0.0
        %3683 = vmatprep.subr.mxu0 0.0
        %3684 = vmatpush1.xpose.msra.mxu0 0.0
        %3685 = vmatprep.subr.mxu0 0.0
        %3686 = vmatpush1.xpose.msra.mxu0 0.0
        %3687 = vmatprep.subr.mxu0 0.0
        %3688 = vmatpush1.xpose.msra.mxu0 0.0
        %3689 = vmatprep.subr.mxu0 0.0
        %3690 = vmatpush1.xpose.msra.mxu0 0.0
        %3691 = vmatprep.subr.mxu0 0.0
        %3692 = vmatpush1.xpose.msra.mxu0 0.0
        %3693 = vmatprep.subr.mxu0 0.0
        %3694 = vmatpush1.xpose.msra.mxu0 0.0
        %3695 = vmatprep.subr.mxu0 0.0
        %3696 = vmatpush1.xpose.msra.mxu0 0.0
        %3697 = vmatprep.subr.mxu0 0.0
        %3698 = vmatpush1.xpose.msra.mxu0 0.0
        %3699 = vmatprep.subr.mxu0 0.0
        %3700 = vmatpush1.xpose.msra.mxu0 0.0
        %3701 = vmatprep.subr.mxu0 0.0
        %3702 = vmatpush1.xpose.msra.mxu0 0.0
        %3703 = vmatprep.subr.mxu0 0.0
        %3704 = vmatpush1.xpose.msra.mxu0 0.0
        %3705 = vmatprep.subr.mxu0 0.0
        %3706 = vmatpush1.xpose.msra.mxu0 0.0
        %3707 = vmatprep.subr.mxu0 0.0
        %3708 = vmatpush1.xpose.msra.mxu0 0.0
        %3709 = vmatprep.subr.mxu0 0.0
        %3710 = vmatpush1.xpose.msra.mxu0 0.0
        %3711 = vmatprep.subr.mxu0 0.0
        %3712 = vmatpush1.xpose.msra.mxu0 0.0
        %3713 = vmatprep.subr.mxu0 0.0
        %3714 = vmatpush1.xpose.msra.mxu0 0.0
        %3715 = vmatprep.subr.mxu0 0.0
        %3716 = vmatpush1.xpose.msra.mxu0 0.0
        %3717 = vmatprep.subr.mxu0 0.0
        %3718 = vmatpush1.xpose.msra.mxu0 0.0
        %3719 = vmatprep.subr.mxu0 0.0
        %3720 = vmatpush1.xpose.msra.mxu0 0.0
        %3721 = vmatprep.subr.mxu0 0.0
        %3722 = vmatpush1.xpose.msra.mxu0 0.0
        %3723 = vmatprep.subr.mxu0 0.0
        %3724 = vmatpush1.xpose.msra.mxu0 0.0
        %3725 = vmatprep.subr.mxu0 0.0
        %3726 = vmatpush1.xpose.msra.mxu0 0.0
        %3727 = vmatprep.mubr.f32.mxu0 0.0
        %3728 = vmatmul.mubr.f32.gmra.mrb[0].mxu0 %v3657
        %v3729 = vpop.f32.mrb[0].mxu0
        %v3730 = vadd.f32 0.0, %v3729
        %v3731 = vpop.f32.mrb[0].mxu0
        %3732 = vdwg.mxu0
        %3733 = vrot.lane.b32.xlu0 %v1315, 104
        %v3734 = vpop.permute.xlu0 %3733
        %3735 = vrot.lane.b32.xlu0 %v1142, 104
        %v3736 = vpop.permute.xlu0 %3735
        %3737 = vrot.lane.b32.xlu0 %v1147, 104
        %v3738 = vpop.permute.xlu0 %3737
        %v3739 = vsel %vm1318, %v3734, 0
        %v3741 = vsel %vm1318, %v3736, 0
        %v3743 = vsel %vm1318, %v3738, 0
        %3745 = vmatprep.subr.mxu0 0.0
        %3746 = vmatpush1.xpose.msra.mxu0 %v3741
        %3747 = vmatprep.subr.mxu0 0.0
        %3748 = vmatpush1.xpose.msra.mxu0 %v3743
        %3749 = vmatprep.subr.mxu0 0.0
        %3750 = vmatpush1.xpose.msra.mxu0 0.0
        %3751 = vmatprep.subr.mxu0 0.0
        %3752 = vmatpush1.xpose.msra.mxu0 0.0
        %3753 = vmatprep.subr.mxu0 0.0
        %3754 = vmatpush1.xpose.msra.mxu0 0.0
        %3755 = vmatprep.subr.mxu0 0.0
        %3756 = vmatpush1.xpose.msra.mxu0 0.0
        %3757 = vmatprep.subr.mxu0 0.0
        %3758 = vmatpush1.xpose.msra.mxu0 0.0
        %3759 = vmatprep.subr.mxu0 0.0
        %3760 = vmatpush1.xpose.msra.mxu0 0.0
        %3761 = vmatprep.subr.mxu0 0.0
        %3762 = vmatpush1.xpose.msra.mxu0 0.0
        %3763 = vmatprep.subr.mxu0 0.0
        %3764 = vmatpush1.xpose.msra.mxu0 0.0
        %3765 = vmatprep.subr.mxu0 0.0
        %3766 = vmatpush1.xpose.msra.mxu0 0.0
        %3767 = vmatprep.subr.mxu0 0.0
        %3768 = vmatpush1.xpose.msra.mxu0 0.0
        %3769 = vmatprep.subr.mxu0 0.0
        %3770 = vmatpush1.xpose.msra.mxu0 0.0
        %3771 = vmatprep.subr.mxu0 0.0
        %3772 = vmatpush1.xpose.msra.mxu0 0.0
        %3773 = vmatprep.subr.mxu0 0.0
        %3774 = vmatpush1.xpose.msra.mxu0 0.0
        %3775 = vmatprep.subr.mxu0 0.0
        %3776 = vmatpush1.xpose.msra.mxu0 0.0
        %3777 = vmatprep.subr.mxu0 0.0
        %3778 = vmatpush1.xpose.msra.mxu0 0.0
        %3779 = vmatprep.subr.mxu0 0.0
        %3780 = vmatpush1.xpose.msra.mxu0 0.0
        %3781 = vmatprep.subr.mxu0 0.0
        %3782 = vmatpush1.xpose.msra.mxu0 0.0
        %3783 = vmatprep.subr.mxu0 0.0
        %3784 = vmatpush1.xpose.msra.mxu0 0.0
        %3785 = vmatprep.subr.mxu0 0.0
        %3786 = vmatpush1.xpose.msra.mxu0 0.0
        %3787 = vmatprep.subr.mxu0 0.0
        %3788 = vmatpush1.xpose.msra.mxu0 0.0
        %3789 = vmatprep.subr.mxu0 0.0
        %3790 = vmatpush1.xpose.msra.mxu0 0.0
        %3791 = vmatprep.subr.mxu0 0.0
        %3792 = vmatpush1.xpose.msra.mxu0 0.0
        %3793 = vmatprep.subr.mxu0 0.0
        %3794 = vmatpush1.xpose.msra.mxu0 0.0
        %3795 = vmatprep.subr.mxu0 0.0
        %3796 = vmatpush1.xpose.msra.mxu0 0.0
        %3797 = vmatprep.subr.mxu0 0.0
        %3798 = vmatpush1.xpose.msra.mxu0 0.0
        %3799 = vmatprep.subr.mxu0 0.0
        %3800 = vmatpush1.xpose.msra.mxu0 0.0
        %3801 = vmatprep.subr.mxu0 0.0
        %3802 = vmatpush1.xpose.msra.mxu0 0.0
        %3803 = vmatprep.subr.mxu0 0.0
        %3804 = vmatpush1.xpose.msra.mxu0 0.0
        %3805 = vmatprep.subr.mxu0 0.0
        %3806 = vmatpush1.xpose.msra.mxu0 0.0
        %3807 = vmatprep.subr.mxu0 0.0
        %3808 = vmatpush1.xpose.msra.mxu0 0.0
        %3809 = vmatprep.mubr.f32.mxu0 0.0
        %3810 = vmatmul.mubr.f32.gmra.mrb[0].mxu0 %v3739
        %v3811 = vpop.f32.mrb[0].mxu0
        %v3812 = vadd.f32 0.0, %v3811
        %v3813 = vpop.f32.mrb[0].mxu0
        %3814 = vdwg.mxu0
        %3815 = vrot.lane.b32.xlu0 %v1316, 104
        %v3816 = vpop.permute.xlu0 %3815
        %3817 = vrot.lane.b32.xlu0 %v1152, 104
        %v3818 = vpop.permute.xlu0 %3817
        %3819 = vrot.lane.b32.xlu0 %v1157, 104
        %v3820 = vpop.permute.xlu0 %3819
        %v3821 = vsel %vm1318, %v3816, 0
        %v3823 = vsel %vm1318, %v3818, 0
        %v3825 = vsel %vm1318, %v3820, 0
        %3827 = vmatprep.subr.mxu0 0.0
        %3828 = vmatpush1.xpose.msra.mxu0 %v3823
        %3829 = vmatprep.subr.mxu0 0.0
        %3830 = vmatpush1.xpose.msra.mxu0 %v3825
        %3831 = vmatprep.subr.mxu0 0.0
        %3832 = vmatpush1.xpose.msra.mxu0 0.0
        %3833 = vmatprep.subr.mxu0 0.0
        %3834 = vmatpush1.xpose.msra.mxu0 0.0
        %3835 = vmatprep.subr.mxu0 0.0
        %3836 = vmatpush1.xpose.msra.mxu0 0.0
        %3837 = vmatprep.subr.mxu0 0.0
        %3838 = vmatpush1.xpose.msra.mxu0 0.0
        %3839 = vmatprep.subr.mxu0 0.0
        %3840 = vmatpush1.xpose.msra.mxu0 0.0
        %3841 = vmatprep.subr.mxu0 0.0
        %3842 = vmatpush1.xpose.msra.mxu0 0.0
        %3843 = vmatprep.subr.mxu0 0.0
        %3844 = vmatpush1.xpose.msra.mxu0 0.0
        %3845 = vmatprep.subr.mxu0 0.0
        %3846 = vmatpush1.xpose.msra.mxu0 0.0
        %3847 = vmatprep.subr.mxu0 0.0
        %3848 = vmatpush1.xpose.msra.mxu0 0.0
        %3849 = vmatprep.subr.mxu0 0.0
        %3850 = vmatpush1.xpose.msra.mxu0 0.0
        %3851 = vmatprep.subr.mxu0 0.0
        %3852 = vmatpush1.xpose.msra.mxu0 0.0
        %3853 = vmatprep.subr.mxu0 0.0
        %3854 = vmatpush1.xpose.msra.mxu0 0.0
        %3855 = vmatprep.subr.mxu0 0.0
        %3856 = vmatpush1.xpose.msra.mxu0 0.0
        %3857 = vmatprep.subr.mxu0 0.0
        %3858 = vmatpush1.xpose.msra.mxu0 0.0
        %3859 = vmatprep.subr.mxu0 0.0
        %3860 = vmatpush1.xpose.msra.mxu0 0.0
        %3861 = vmatprep.subr.mxu0 0.0
        %3862 = vmatpush1.xpose.msra.mxu0 0.0
        %3863 = vmatprep.subr.mxu0 0.0
        %3864 = vmatpush1.xpose.msra.mxu0 0.0
        %3865 = vmatprep.subr.mxu0 0.0
        %3866 = vmatpush1.xpose.msra.mxu0 0.0
        %3867 = vmatprep.subr.mxu0 0.0
        %3868 = vmatpush1.xpose.msra.mxu0 0.0
        %3869 = vmatprep.subr.mxu0 0.0
        %3870 = vmatpush1.xpose.msra.mxu0 0.0
        %3871 = vmatprep.subr.mxu0 0.0
        %3872 = vmatpush1.xpose.msra.mxu0 0.0
        %3873 = vmatprep.subr.mxu0 0.0
        %3874 = vmatpush1.xpose.msra.mxu0 0.0
        %3875 = vmatprep.subr.mxu0 0.0
        %3876 = vmatpush1.xpose.msra.mxu0 0.0
        %3877 = vmatprep.subr.mxu0 0.0
        %3878 = vmatpush1.xpose.msra.mxu0 0.0
        %3879 = vmatprep.subr.mxu0 0.0
        %3880 = vmatpush1.xpose.msra.mxu0 0.0
        %3881 = vmatprep.subr.mxu0 0.0
        %3882 = vmatpush1.xpose.msra.mxu0 0.0
        %3883 = vmatprep.subr.mxu0 0.0
        %3884 = vmatpush1.xpose.msra.mxu0 0.0
        %3885 = vmatprep.subr.mxu0 0.0
        %3886 = vmatpush1.xpose.msra.mxu0 0.0
        %3887 = vmatprep.subr.mxu0 0.0
        %3888 = vmatpush1.xpose.msra.mxu0 0.0
        %3889 = vmatprep.subr.mxu0 0.0
        %3890 = vmatpush1.xpose.msra.mxu0 0.0
        %3891 = vmatprep.mubr.f32.mxu0 0.0
        %3892 = vmatmul.mubr.f32.gmra.mrb[0].mxu0 %v3821
        %v3893 = vpop.f32.mrb[0].mxu0
        %v3894 = vadd.f32 0.0, %v3893
        %v3895 = vpop.f32.mrb[0].mxu0
        %3896 = vdwg.mxu0
        %3897 = vrot.lane.b32.xlu0 %v1317, 104
        %v3898 = vpop.permute.xlu0 %3897
        %3899 = vrot.lane.b32.xlu0 %v1162, 104
        %v3900 = vpop.permute.xlu0 %3899
        %3901 = vrot.lane.b32.xlu0 %v1167, 104
        %v3902 = vpop.permute.xlu0 %3901
        %v3903 = vsel %vm1318, %v3898, 0
        %v3905 = vsel %vm1318, %v3900, 0
        %v3907 = vsel %vm1318, %v3902, 0
        %3909 = vmatprep.subr.mxu0 0.0
        %3910 = vmatpush1.xpose.msra.mxu0 %v3905
        %3911 = vmatprep.subr.mxu0 0.0
        %3912 = vmatpush1.xpose.msra.mxu0 %v3907
        %3913 = vmatprep.subr.mxu0 0.0
        %3914 = vmatpush1.xpose.msra.mxu0 0.0
        %3915 = vmatprep.subr.mxu0 0.0
        %3916 = vmatpush1.xpose.msra.mxu0 0.0
        %3917 = vmatprep.subr.mxu0 0.0
        %3918 = vmatpush1.xpose.msra.mxu0 0.0
        %3919 = vmatprep.subr.mxu0 0.0
        %3920 = vmatpush1.xpose.msra.mxu0 0.0
        %3921 = vmatprep.subr.mxu0 0.0
        %3922 = vmatpush1.xpose.msra.mxu0 0.0
        %3923 = vmatprep.subr.mxu0 0.0
        %3924 = vmatpush1.xpose.msra.mxu0 0.0
        %3925 = vmatprep.subr.mxu0 0.0
        %3926 = vmatpush1.xpose.msra.mxu0 0.0
        %3927 = vmatprep.subr.mxu0 0.0
        %3928 = vmatpush1.xpose.msra.mxu0 0.0
        %3929 = vmatprep.subr.mxu0 0.0
        %3930 = vmatpush1.xpose.msra.mxu0 0.0
        %3931 = vmatprep.subr.mxu0 0.0
        %3932 = vmatpush1.xpose.msra.mxu0 0.0
        %3933 = vmatprep.subr.mxu0 0.0
        %3934 = vmatpush1.xpose.msra.mxu0 0.0
        %3935 = vmatprep.subr.mxu0 0.0
        %3936 = vmatpush1.xpose.msra.mxu0 0.0
        %3937 = vmatprep.subr.mxu0 0.0
        %3938 = vmatpush1.xpose.msra.mxu0 0.0
        %3939 = vmatprep.subr.mxu0 0.0
        %3940 = vmatpush1.xpose.msra.mxu0 0.0
        %3941 = vmatprep.subr.mxu0 0.0
        %3942 = vmatpush1.xpose.msra.mxu0 0.0
        %3943 = vmatprep.subr.mxu0 0.0
        %3944 = vmatpush1.xpose.msra.mxu0 0.0
        %3945 = vmatprep.subr.mxu0 0.0
        %3946 = vmatpush1.xpose.msra.mxu0 0.0
        %3947 = vmatprep.subr.mxu0 0.0
        %3948 = vmatpush1.xpose.msra.mxu0 0.0
        %3949 = vmatprep.subr.mxu0 0.0
        %3950 = vmatpush1.xpose.msra.mxu0 0.0
        %3951 = vmatprep.subr.mxu0 0.0
        %3952 = vmatpush1.xpose.msra.mxu0 0.0
        %3953 = vmatprep.subr.mxu0 0.0
        %3954 = vmatpush1.xpose.msra.mxu0 0.0
        %3955 = vmatprep.subr.mxu0 0.0
        %3956 = vmatpush1.xpose.msra.mxu0 0.0
        %3957 = vmatprep.subr.mxu0 0.0
        %3958 = vmatpush1.xpose.msra.mxu0 0.0
        %3959 = vmatprep.subr.mxu0 0.0
        %3960 = vmatpush1.xpose.msra.mxu0 0.0
        %3961 = vmatprep.subr.mxu0 0.0
        %3962 = vmatpush1.xpose.msra.mxu0 0.0
        %3963 = vmatprep.subr.mxu0 0.0
        %3964 = vmatpush1.xpose.msra.mxu0 0.0
        %3965 = vmatprep.subr.mxu0 0.0
        %3966 = vmatpush1.xpose.msra.mxu0 0.0
        %3967 = vmatprep.subr.mxu0 0.0
        %3968 = vmatpush1.xpose.msra.mxu0 0.0
        %3969 = vmatprep.subr.mxu0 0.0
        %3970 = vmatpush1.xpose.msra.mxu0 0.0
        %3971 = vmatprep.subr.mxu0 0.0
        %3972 = vmatpush1.xpose.msra.mxu0 0.0
        %3973 = vmatprep.mubr.f32.mxu0 0.0
        %3974 = vmatmul.mubr.f32.gmra.mrb[0].mxu0 %v3903
        %v3975 = vpop.f32.mrb[0].mxu0
        %v3976 = vadd.f32 0.0, %v3975
        %v3977 = vpop.f32.mrb[0].mxu0
        %3978 = vdwg.mxu0
        %v3979 = vsel %vm1635, %v3730, -inf
        %3980 = vmax.xlane.f32.xlu0 %v3979
        %v3981 = vpop.xlane.xlu0 %3980
        %v3982 = vsel %vm1635, %v3812, -inf
        %3983 = vmax.xlane.f32.xlu0 %v3982
        %v3984 = vpop.xlane.xlu0 %3983
        %v3985 = vsel %vm1635, %v3894, -inf
        %3986 = vmax.xlane.f32.xlu0 %v3985
        %v3987 = vpop.xlane.xlu0 %3986
        %v3988 = vsel %vm1635, %v3976, -inf
        %3989 = vmax.xlane.f32.xlu0 %v3988
        %v3990 = vpop.xlane.xlu0 %3989
        %v3991 = vsub.f32 %v3730, %v3981
        %v3992 = vsub.f32 %v3812, %v3984
        %v3993 = vsub.f32 %v3894, %v3987
        %v3994 = vsub.f32 %v3976, %v3990
        %v3995 = vmul.f32 %v3991, 1.442695
        %v3996 = vpow.pop %v3995
        %v3997 = vmul.f32 %v3992, 1.442695
        %v3998 = vpow.pop %v3997
        %v3999 = vmul.f32 %v3993, 1.442695
        %v4000 = vpow.pop %v3999
        %v4001 = vmul.f32 %v3994, 1.442695
        %v4002 = vpow.pop %v4001
        %v4003 = vsel %vm1635, %v3996, 0.0
        %4004 = vadd.xlane.f32.xlu0 %v4003
        %v4005 = vpop.xlane.xlu0 %4004
        %v4006 = vsel %vm1635, %v3998, 0.0
        %4007 = vadd.xlane.f32.xlu0 %v4006
        %v4008 = vpop.xlane.xlu0 %4007
        %v4009 = vsel %vm1635, %v4000, 0.0
        %4010 = vadd.xlane.f32.xlu0 %v4009
        %v4011 = vpop.xlane.xlu0 %4010
        %v4012 = vsel %vm1635, %v4002, 0.0
        %4013 = vadd.xlane.f32.xlu0 %v4012
        %v4014 = vpop.xlane.xlu0 %4013
        %v4015 = vrcp.pop %v4005
        %v4016 = vrcp.pop %v4008
        %v4017 = vrcp.pop %v4011
        %v4018 = vrcp.pop %v4014
        %v4019 = vmul.f32 %v3996, %v4015
        %v4020 = vmul.f32 %v3998, %v4016
        %v4021 = vmul.f32 %v4000, %v4017
        %v4022 = vmul.f32 %v4002, %v4018
        %4023 = vrot.lane.b32.xlu0 %v1272, 104
        %v4024 = vpop.permute.xlu0 %4023
        %4025 = vrot.lane.b32.xlu0 %v1277, 104
        %v4026 = vpop.permute.xlu0 %4025
        %v4030 = vsel %vm1635, %v4019, 0
        %4032 = vmatprep.subr.mxu0 0.0
        %4033 = vmatpush1.msra.mxu0 %v4024
        %4034 = vmatprep.subr.mxu0 0.0
        %4035 = vmatpush1.msra.mxu0 %v4026
        %4036 = vmatprep.subr.mxu0 0.0
        %4037 = vmatpush1.msra.mxu0 0.0
        %4038 = vmatprep.subr.mxu0 0.0
        %4039 = vmatpush1.msra.mxu0 0.0
        %4040 = vmatprep.subr.mxu0 0.0
        %4041 = vmatpush1.msra.mxu0 0.0
        %4042 = vmatprep.subr.mxu0 0.0
        %4043 = vmatpush1.msra.mxu0 0.0
        %4044 = vmatprep.subr.mxu0 0.0
        %4045 = vmatpush1.msra.mxu0 0.0
        %4046 = vmatprep.subr.mxu0 0.0
        %4047 = vmatpush1.msra.mxu0 0.0
        %4048 = vmatprep.subr.mxu0 0.0
        %4049 = vmatpush1.msra.mxu0 0.0
        %4050 = vmatprep.subr.mxu0 0.0
        %4051 = vmatpush1.msra.mxu0 0.0
        %4052 = vmatprep.subr.mxu0 0.0
        %4053 = vmatpush1.msra.mxu0 0.0
        %4054 = vmatprep.subr.mxu0 0.0
        %4055 = vmatpush1.msra.mxu0 0.0
        %4056 = vmatprep.subr.mxu0 0.0
        %4057 = vmatpush1.msra.mxu0 0.0
        %4058 = vmatprep.subr.mxu0 0.0
        %4059 = vmatpush1.msra.mxu0 0.0
        %4060 = vmatprep.subr.mxu0 0.0
        %4061 = vmatpush1.msra.mxu0 0.0
        %4062 = vmatprep.subr.mxu0 0.0
        %4063 = vmatpush1.msra.mxu0 0.0
        %4064 = vmatprep.subr.mxu0 0.0
        %4065 = vmatpush1.msra.mxu0 0.0
        %4066 = vmatprep.subr.mxu0 0.0
        %4067 = vmatpush1.msra.mxu0 0.0
        %4068 = vmatprep.subr.mxu0 0.0
        %4069 = vmatpush1.msra.mxu0 0.0
        %4070 = vmatprep.subr.mxu0 0.0
        %4071 = vmatpush1.msra.mxu0 0.0
        %4072 = vmatprep.subr.mxu0 0.0
        %4073 = vmatpush1.msra.mxu0 0.0
        %4074 = vmatprep.subr.mxu0 0.0
        %4075 = vmatpush1.msra.mxu0 0.0
        %4076 = vmatprep.subr.mxu0 0.0
        %4077 = vmatpush1.msra.mxu0 0.0
        %4078 = vmatprep.subr.mxu0 0.0
        %4079 = vmatpush1.msra.mxu0 0.0
        %4080 = vmatprep.subr.mxu0 0.0
        %4081 = vmatpush1.msra.mxu0 0.0
        %4082 = vmatprep.subr.mxu0 0.0
        %4083 = vmatpush1.msra.mxu0 0.0
        %4084 = vmatprep.subr.mxu0 0.0
        %4085 = vmatpush1.msra.mxu0 0.0
        %4086 = vmatprep.subr.mxu0 0.0
        %4087 = vmatpush1.msra.mxu0 0.0
        %4088 = vmatprep.subr.mxu0 0.0
        %4089 = vmatpush1.msra.mxu0 0.0
        %4090 = vmatprep.subr.mxu0 0.0
        %4091 = vmatpush1.msra.mxu0 0.0
        %4092 = vmatprep.subr.mxu0 0.0
        %4093 = vmatpush1.msra.mxu0 0.0
        %4094 = vmatprep.subr.mxu0 0.0
        %4095 = vmatpush1.msra.mxu0 0.0
        %4096 = vmatprep.mubr.f32.mxu0 0.0
        %4097 = vmatmul.mubr.f32.gmra.mrb[0].mxu0 %v4030
        %v4098 = vpop.f32.mrb[0].mxu0
        %v4099 = vadd.f32 0.0, %v4098
        %v4100 = vpop.f32.mrb[0].mxu0
        %4101 = vdwg.mxu0
        %4102 = vrot.lane.b32.xlu0 %v1282, 104
        %v4103 = vpop.permute.xlu0 %4102
        %4104 = vrot.lane.b32.xlu0 %v1287, 104
        %v4105 = vpop.permute.xlu0 %4104
        %v4109 = vsel %vm1635, %v4020, 0
        %4111 = vmatprep.subr.mxu0 0.0
        %4112 = vmatpush1.msra.mxu0 %v4103
        %4113 = vmatprep.subr.mxu0 0.0
        %4114 = vmatpush1.msra.mxu0 %v4105
        %4115 = vmatprep.subr.mxu0 0.0
        %4116 = vmatpush1.msra.mxu0 0.0
        %4117 = vmatprep.subr.mxu0 0.0
        %4118 = vmatpush1.msra.mxu0 0.0
        %4119 = vmatprep.subr.mxu0 0.0
        %4120 = vmatpush1.msra.mxu0 0.0
        %4121 = vmatprep.subr.mxu0 0.0
        %4122 = vmatpush1.msra.mxu0 0.0
        %4123 = vmatprep.subr.mxu0 0.0
        %4124 = vmatpush1.msra.mxu0 0.0
        %4125 = vmatprep.subr.mxu0 0.0
        %4126 = vmatpush1.msra.mxu0 0.0
        %4127 = vmatprep.subr.mxu0 0.0
        %4128 = vmatpush1.msra.mxu0 0.0
        %4129 = vmatprep.subr.mxu0 0.0
        %4130 = vmatpush1.msra.mxu0 0.0
        %4131 = vmatprep.subr.mxu0 0.0
        %4132 = vmatpush1.msra.mxu0 0.0
        %4133 = vmatprep.subr.mxu0 0.0
        %4134 = vmatpush1.msra.mxu0 0.0
        %4135 = vmatprep.subr.mxu0 0.0
        %4136 = vmatpush1.msra.mxu0 0.0
        %4137 = vmatprep.subr.mxu0 0.0
        %4138 = vmatpush1.msra.mxu0 0.0
        %4139 = vmatprep.subr.mxu0 0.0
        %4140 = vmatpush1.msra.mxu0 0.0
        %4141 = vmatprep.subr.mxu0 0.0
        %4142 = vmatpush1.msra.mxu0 0.0
        %4143 = vmatprep.subr.mxu0 0.0
        %4144 = vmatpush1.msra.mxu0 0.0
        %4145 = vmatprep.subr.mxu0 0.0
        %4146 = vmatpush1.msra.mxu0 0.0
        %4147 = vmatprep.subr.mxu0 0.0
        %4148 = vmatpush1.msra.mxu0 0.0
        %4149 = vmatprep.subr.mxu0 0.0
        %4150 = vmatpush1.msra.mxu0 0.0
        %4151 = vmatprep.subr.mxu0 0.0
        %4152 = vmatpush1.msra.mxu0 0.0
        %4153 = vmatprep.subr.mxu0 0.0
        %4154 = vmatpush1.msra.mxu0 0.0
        %4155 = vmatprep.subr.mxu0 0.0
        %4156 = vmatpush1.msra.mxu0 0.0
        %4157 = vmatprep.subr.mxu0 0.0
        %4158 = vmatpush1.msra.mxu0 0.0
        %4159 = vmatprep.subr.mxu0 0.0
        %4160 = vmatpush1.msra.mxu0 0.0
        %4161 = vmatprep.subr.mxu0 0.0
        %4162 = vmatpush1.msra.mxu0 0.0
        %4163 = vmatprep.subr.mxu0 0.0
        %4164 = vmatpush1.msra.mxu0 0.0
        %4165 = vmatprep.subr.mxu0 0.0
        %4166 = vmatpush1.msra.mxu0 0.0
        %4167 = vmatprep.subr.mxu0 0.0
        %4168 = vmatpush1.msra.mxu0 0.0
        %4169 = vmatprep.subr.mxu0 0.0
        %4170 = vmatpush1.msra.mxu0 0.0
        %4171 = vmatprep.subr.mxu0 0.0
        %4172 = vmatpush1.msra.mxu0 0.0
        %4173 = vmatprep.subr.mxu0 0.0
        %4174 = vmatpush1.msra.mxu0 0.0
        %4175 = vmatprep.mubr.f32.mxu0 0.0
        %4176 = vmatmul.mubr.f32.gmra.mrb[0].mxu0 %v4109
        %v4177 = vpop.f32.mrb[0].mxu0
        %v4178 = vadd.f32 0.0, %v4177
        %v4179 = vpop.f32.mrb[0].mxu0
        %4180 = vdwg.mxu0
        %4181 = vrot.lane.b32.xlu0 %v1292, 104
        %v4182 = vpop.permute.xlu0 %4181
        %4183 = vrot.lane.b32.xlu0 %v1297, 104
        %v4184 = vpop.permute.xlu0 %4183
        %v4188 = vsel %vm1635, %v4021, 0
        %4190 = vmatprep.subr.mxu0 0.0
        %4191 = vmatpush1.msra.mxu0 %v4182
        %4192 = vmatprep.subr.mxu0 0.0
        %4193 = vmatpush1.msra.mxu0 %v4184
        %4194 = vmatprep.subr.mxu0 0.0
        %4195 = vmatpush1.msra.mxu0 0.0
        %4196 = vmatprep.subr.mxu0 0.0
        %4197 = vmatpush1.msra.mxu0 0.0
        %4198 = vmatprep.subr.mxu0 0.0
        %4199 = vmatpush1.msra.mxu0 0.0
        %4200 = vmatprep.subr.mxu0 0.0
        %4201 = vmatpush1.msra.mxu0 0.0
        %4202 = vmatprep.subr.mxu0 0.0
        %4203 = vmatpush1.msra.mxu0 0.0
        %4204 = vmatprep.subr.mxu0 0.0
        %4205 = vmatpush1.msra.mxu0 0.0
        %4206 = vmatprep.subr.mxu0 0.0
        %4207 = vmatpush1.msra.mxu0 0.0
        %4208 = vmatprep.subr.mxu0 0.0
        %4209 = vmatpush1.msra.mxu0 0.0
        %4210 = vmatprep.subr.mxu0 0.0
        %4211 = vmatpush1.msra.mxu0 0.0
        %4212 = vmatprep.subr.mxu0 0.0
        %4213 = vmatpush1.msra.mxu0 0.0
        %4214 = vmatprep.subr.mxu0 0.0
        %4215 = vmatpush1.msra.mxu0 0.0
        %4216 = vmatprep.subr.mxu0 0.0
        %4217 = vmatpush1.msra.mxu0 0.0
        %4218 = vmatprep.subr.mxu0 0.0
        %4219 = vmatpush1.msra.mxu0 0.0
        %4220 = vmatprep.subr.mxu0 0.0
        %4221 = vmatpush1.msra.mxu0 0.0
        %4222 = vmatprep.subr.mxu0 0.0
        %4223 = vmatpush1.msra.mxu0 0.0
        %4224 = vmatprep.subr.mxu0 0.0
        %4225 = vmatpush1.msra.mxu0 0.0
        %4226 = vmatprep.subr.mxu0 0.0
        %4227 = vmatpush1.msra.mxu0 0.0
        %4228 = vmatprep.subr.mxu0 0.0
        %4229 = vmatpush1.msra.mxu0 0.0
        %4230 = vmatprep.subr.mxu0 0.0
        %4231 = vmatpush1.msra.mxu0 0.0
        %4232 = vmatprep.subr.mxu0 0.0
        %4233 = vmatpush1.msra.mxu0 0.0
        %4234 = vmatprep.subr.mxu0 0.0
        %4235 = vmatpush1.msra.mxu0 0.0
        %4236 = vmatprep.subr.mxu0 0.0
        %4237 = vmatpush1.msra.mxu0 0.0
        %4238 = vmatprep.subr.mxu0 0.0
        %4239 = vmatpush1.msra.mxu0 0.0
        %4240 = vmatprep.subr.mxu0 0.0
        %4241 = vmatpush1.msra.mxu0 0.0
        %4242 = vmatprep.subr.mxu0 0.0
        %4243 = vmatpush1.msra.mxu0 0.0
        %4244 = vmatprep.subr.mxu0 0.0
        %4245 = vmatpush1.msra.mxu0 0.0
        %4246 = vmatprep.subr.mxu0 0.0
        %4247 = vmatpush1.msra.mxu0 0.0
        %4248 = vmatprep.subr.mxu0 0.0
        %4249 = vmatpush1.msra.mxu0 0.0
        %4250 = vmatprep.subr.mxu0 0.0
        %4251 = vmatpush1.msra.mxu0 0.0
        %4252 = vmatprep.subr.mxu0 0.0
        %4253 = vmatpush1.msra.mxu0 0.0
        %4254 = vmatprep.mubr.f32.mxu0 0.0
        %4255 = vmatmul.mubr.f32.gmra.mrb[0].mxu0 %v4188
        %v4256 = vpop.f32.mrb[0].mxu0
        %v4257 = vadd.f32 0.0, %v4256
        %v4258 = vpop.f32.mrb[0].mxu0
        %4259 = vdwg.mxu0
        %4260 = vrot.lane.b32.xlu0 %v1302, 104
        %v4261 = vpop.permute.xlu0 %4260
        %4262 = vrot.lane.b32.xlu0 %v1307, 104
        %v4263 = vpop.permute.xlu0 %4262
        %v4267 = vsel %vm1635, %v4022, 0
        %4269 = vmatprep.subr.mxu0 0.0
        %4270 = vmatpush1.msra.mxu0 %v4261
        %4271 = vmatprep.subr.mxu0 0.0
        %4272 = vmatpush1.msra.mxu0 %v4263
        %4273 = vmatprep.subr.mxu0 0.0
        %4274 = vmatpush1.msra.mxu0 0.0
        %4275 = vmatprep.subr.mxu0 0.0
        %4276 = vmatpush1.msra.mxu0 0.0
        %4277 = vmatprep.subr.mxu0 0.0
        %4278 = vmatpush1.msra.mxu0 0.0
        %4279 = vmatprep.subr.mxu0 0.0
        %4280 = vmatpush1.msra.mxu0 0.0
        %4281 = vmatprep.subr.mxu0 0.0
        %4282 = vmatpush1.msra.mxu0 0.0
        %4283 = vmatprep.subr.mxu0 0.0
        %4284 = vmatpush1.msra.mxu0 0.0
        %4285 = vmatprep.subr.mxu0 0.0
        %4286 = vmatpush1.msra.mxu0 0.0
        %4287 = vmatprep.subr.mxu0 0.0
        %4288 = vmatpush1.msra.mxu0 0.0
        %4289 = vmatprep.subr.mxu0 0.0
        %4290 = vmatpush1.msra.mxu0 0.0
        %4291 = vmatprep.subr.mxu0 0.0
        %4292 = vmatpush1.msra.mxu0 0.0
        %4293 = vmatprep.subr.mxu0 0.0
        %4294 = vmatpush1.msra.mxu0 0.0
        %4295 = vmatprep.subr.mxu0 0.0
        %4296 = vmatpush1.msra.mxu0 0.0
        %4297 = vmatprep.subr.mxu0 0.0
        %4298 = vmatpush1.msra.mxu0 0.0
        %4299 = vmatprep.subr.mxu0 0.0
        %4300 = vmatpush1.msra.mxu0 0.0
        %4301 = vmatprep.subr.mxu0 0.0
        %4302 = vmatpush1.msra.mxu0 0.0
        %4303 = vmatprep.subr.mxu0 0.0
        %4304 = vmatpush1.msra.mxu0 0.0
        %4305 = vmatprep.subr.mxu0 0.0
        %4306 = vmatpush1.msra.mxu0 0.0
        %4307 = vmatprep.subr.mxu0 0.0
        %4308 = vmatpush1.msra.mxu0 0.0
        %4309 = vmatprep.subr.mxu0 0.0
        %4310 = vmatpush1.msra.mxu0 0.0
        %4311 = vmatprep.subr.mxu0 0.0
        %4312 = vmatpush1.msra.mxu0 0.0
        %4313 = vmatprep.subr.mxu0 0.0
        %4314 = vmatpush1.msra.mxu0 0.0
        %4315 = vmatprep.subr.mxu0 0.0
        %4316 = vmatpush1.msra.mxu0 0.0
        %4317 = vmatprep.subr.mxu0 0.0
        %4318 = vmatpush1.msra.mxu0 0.0
        %4319 = vmatprep.subr.mxu0 0.0
        %4320 = vmatpush1.msra.mxu0 0.0
        %4321 = vmatprep.subr.mxu0 0.0
        %4322 = vmatpush1.msra.mxu0 0.0
        %4323 = vmatprep.subr.mxu0 0.0
        %4324 = vmatpush1.msra.mxu0 0.0
        %4325 = vmatprep.subr.mxu0 0.0
        %4326 = vmatpush1.msra.mxu0 0.0
        %4327 = vmatprep.subr.mxu0 0.0
        %4328 = vmatpush1.msra.mxu0 0.0
        %4329 = vmatprep.subr.mxu0 0.0
        %4330 = vmatpush1.msra.mxu0 0.0
        %4331 = vmatprep.subr.mxu0 0.0
        %4332 = vmatpush1.msra.mxu0 0.0
        %4333 = vmatprep.mubr.f32.mxu0 0.0
        %4334 = vmatmul.mubr.f32.gmra.mrb[0].mxu0 %v4267
        %v4335 = vpop.f32.mrb[0].mxu0
        %v4336 = vadd.f32 0.0, %v4335
        %v4337 = vpop.f32.mrb[0].mxu0
        %4338 = vdwg.mxu0
        %v4340 = vsel %vm1318, %v4099, 0
        %v4343 = vsel %vm1318, %v4178, 0
        %v4346 = vsel %vm1318, %v4257, 0
        %v4349 = vsel %vm1318, %v4336, 0
        %4351 = vmatprep.subr.mxu0 0.0
        %4352 = vmatpush1.msra.mxu0 %v1313
        %4353 = vmatprep.subr.mxu0 0.0
        %4354 = vmatpush1.msra.mxu0 0.0
        %4355 = vmatprep.subr.mxu0 0.0
        %4356 = vmatpush1.msra.mxu0 0.0
        %4357 = vmatprep.subr.mxu0 0.0
        %4358 = vmatpush1.msra.mxu0 0.0
        %4359 = vmatprep.subr.mxu0 0.0
        %4360 = vmatpush1.msra.mxu0 0.0
        %4361 = vmatprep.subr.mxu0 0.0
        %4362 = vmatpush1.msra.mxu0 0.0
        %4363 = vmatprep.subr.mxu0 0.0
        %4364 = vmatpush1.msra.mxu0 0.0
        %4365 = vmatprep.subr.mxu0 0.0
        %4366 = vmatpush1.msra.mxu0 0.0
        %4367 = vmatprep.subr.mxu0 0.0
        %4368 = vmatpush1.msra.mxu0 0.0
        %4369 = vmatprep.subr.mxu0 0.0
        %4370 = vmatpush1.msra.mxu0 0.0
        %4371 = vmatprep.subr.mxu0 0.0
        %4372 = vmatpush1.msra.mxu0 0.0
        %4373 = vmatprep.subr.mxu0 0.0
        %4374 = vmatpush1.msra.mxu0 0.0
        %4375 = vmatprep.subr.mxu0 0.0
        %4376 = vmatpush1.msra.mxu0 0.0
        %4377 = vmatprep.subr.mxu0 0.0
        %4378 = vmatpush1.msra.mxu0 0.0
        %4379 = vmatprep.subr.mxu0 0.0
        %4380 = vmatpush1.msra.mxu0 0.0
        %4381 = vmatprep.subr.mxu0 0.0
        %4382 = vmatpush1.msra.mxu0 0.0
        %4383 = vmatprep.subr.mxu0 0.0
        %4384 = vmatpush1.msra.mxu0 0.0
        %4385 = vmatprep.subr.mxu0 0.0
        %4386 = vmatpush1.msra.mxu0 0.0
        %4387 = vmatprep.subr.mxu0 0.0
        %4388 = vmatpush1.msra.mxu0 0.0
        %4389 = vmatprep.subr.mxu0 0.0
        %4390 = vmatpush1.msra.mxu0 0.0
        %4391 = vmatprep.subr.mxu0 0.0
        %4392 = vmatpush1.msra.mxu0 0.0
        %4393 = vmatprep.subr.mxu0 0.0
        %4394 = vmatpush1.msra.mxu0 0.0
        %4395 = vmatprep.subr.mxu0 0.0
        %4396 = vmatpush1.msra.mxu0 0.0
        %4397 = vmatprep.subr.mxu0 0.0
        %4398 = vmatpush1.msra.mxu0 0.0
        %4399 = vmatprep.subr.mxu0 0.0
        %4400 = vmatpush1.msra.mxu0 0.0
        %4401 = vmatprep.subr.mxu0 0.0
        %4402 = vmatpush1.msra.mxu0 0.0
        %4403 = vmatprep.subr.mxu0 0.0
        %4404 = vmatpush1.msra.mxu0 0.0
        %4405 = vmatprep.subr.mxu0 0.0
        %4406 = vmatpush1.msra.mxu0 0.0
        %4407 = vmatprep.subr.mxu0 0.0
        %4408 = vmatpush1.msra.mxu0 0.0
        %4409 = vmatprep.subr.mxu0 0.0
        %4410 = vmatpush1.msra.mxu0 0.0
        %4411 = vmatprep.subr.mxu0 0.0
        %4412 = vmatpush1.msra.mxu0 0.0
        %4413 = vmatprep.subr.mxu0 0.0
        %4414 = vmatpush1.msra.mxu0 0.0
        %4415 = vmatprep.mubr.f32.mxu0 0.0
        %4416 = vmatmul.mubr.f32.gmra.mrb[0].mxu0 %v4340
        %v4417 = vpop.f32.mrb[0].mxu0
        %v4418 = vadd.f32 0.0, %v4417
        %v4419 = vpop.f32.mrb[0].mxu0
        %4420 = vmatprep.mubr.f32.mxu0 0.0
        %4421 = vmatmul.mubr.f32.gmra.mrb[0].mxu0 %v4343
        %v4422 = vpop.f32.mrb[0].mxu0
        %v4423 = vadd.f32 0.0, %v4422
        %v4424 = vpop.f32.mrb[0].mxu0
        %4425 = vmatprep.mubr.f32.mxu0 0.0
        %4426 = vmatmul.mubr.f32.gmra.mrb[0].mxu0 %v4346
        %v4427 = vpop.f32.mrb[0].mxu0
        %v4428 = vadd.f32 0.0, %v4427
        %v4429 = vpop.f32.mrb[0].mxu0
        %4430 = vmatprep.mubr.f32.mxu0 0.0
        %4431 = vmatmul.mubr.f32.gmra.mrb[0].mxu0 %v4349
        %v4432 = vpop.f32.mrb[0].mxu0
        %v4433 = vadd.f32 0.0, %v4432
        %v4434 = vpop.f32.mrb[0].mxu0
        %4435 = vdwg.mxu0
        %v4436 = vadd.f32 %v3647, %v4418
        %v4437 = vadd.f32 %v3648, %v4423
        %v4438 = vadd.f32 %v3649, %v4428
        %v4439 = vadd.f32 %v3650, %v4433
        %v4440 = vld [vmem:[%s12] sm:$0x1]
        %v4442 = vlaneseq
        %v4443 = vshrl.u32 %v4442, 7
        %v4444 = vsub.s32 0, %v4443
        %v4445 = vrot.slane %v4440, %v4444
        %v4447 = vadd.f32 %v4436, %v4445
        %v4448 = vadd.f32 %v4437, %v4445
        %v4449 = vadd.f32 %v4438, %v4445
        %v4450 = vadd.f32 %v4439, %v4445
        %4451 = vst.msk [vmem:[%s581] sm:$0xff] %vm608, %v4447
        %4452 = vst.msk [vmem:[%s581 + $0x8] sm:$0xff] %vm608, %v4448
        %4453 = vst.msk [vmem:[%s581 + $0x10] sm:$0xff] %vm608, %v4449
        %4454 = vst.msk [vmem:[%s581 + $0x18] sm:$0xff] %vm608, %v4450
        %s4455 = sand.u32 %s331, 1
        %s4456 = scalar_lea.sflag [#allocation4], %s4455
        %s4457 = sand.u32 %s331, 1
        %s4458 = smul.addr %s4457, 32
        %s4459 = scalar_lea.vmem [#allocation13], %s4458
        // Predicated region
        $region97: #{tpu_custom_call.1} parent=71 // pred_check
          %p4460 = pneg %p341
        $region98: #{tpu_custom_call.1} parent=71 // pred_check_branch
          %4462 = sbr.rel (%p4460) target = $region100
        $region99: #{tpu_custom_call.1} parent=71 // pred_region
          %s4463 = smul.u32 4, %s35
          %s4465 = ssub.s32 512, 512
          %4466 = vsyncadd %s4456, %s4465
          %s4467 = smul.addr %s4463, 128
          %s4468 = scalar_lea.hbm %s13, %s4467
          %s4469 = sshll.u32 %s4459, 4
          %s4470 = int_to_ptr.vmem [resolvable:$true] %s4469
          %4475 = dma.vmem_to_hbm [thread:$0]  %s4470, 512, %s4468, %s4456, 128, 128, 8
        $region100: #{tpu_custom_call.1} parent=71 // pred_fallthru
          _
      $region72: #{tpu_custom_call.1} parent=5 // pred_fallthru
        _
      %p4476 = scmp.le.s32.totalorder 2, %s30
      // Predicated region
      $region101: #{tpu_custom_call.1} parent=5 // pred_check
        %p4477 = pneg %p4476
      $region102: #{tpu_custom_call.1} parent=5 // pred_check_branch
        %4479 = sbr.rel (%p4477) target = $region104
      $region103: #{tpu_custom_call.1} parent=5 // pred_region
        %s4480 = ssub.s32 %s30, 2
        // Predicated region
        $region105: #{tpu_custom_call.1} parent=103 // pred_check
          %p4481 = pneg %p347
        $region106: #{tpu_custom_call.1} parent=103 // pred_check_branch
          %4483 = sbr.rel (%p4481) target = $region108
        $region107: #{tpu_custom_call.1} parent=103 // pred_region
          %s4484 = sand.u32 %s332, 1
          %s4485 = scalar_lea.sflag [#allocation4], %s4484
          %s4486 = sand.u32 %s332, 1
          %s4487 = smul.addr %s4486, 32
          %s4488 = scalar_lea.vmem [#allocation13], %s4487
          %4489 = dma.done %s4485, 512
        $region108: #{tpu_custom_call.1} parent=103 // pred_fallthru
          _
      $region104: #{tpu_custom_call.1} parent=5 // pred_fallthru
        _
    $region6: #{tpu_custom_call.1} parent=1 // loop_footer
      %s34 = sadd.s32 1, %s30
    $region7: #{tpu_custom_call.1} parent=1 // loop_footer_branch
      %29 = sbr.rel target = $region3
    $region8: #{tpu_custom_call.1} parent=1 // loop_exit
      _
    %4490 = vsyncpa [#allocation3], 1
    %s4491 = scalar_lea.sflag [#allocation3], 1
    %4492 = vsyncpa %s4491, 1
    %4493 = vsyncpa [#allocation6], 1
    %s4494 = scalar_lea.sflag [#allocation6], 1
    %4495 = vsyncpa %s4494, 1
    %4496 = vsyncpa [#allocation9], 1
    %4497 = vsyncpa [#allocation12], 1
    %4498 = vsyncpa [#allocation4], 1
    %s4499 = scalar_lea.sflag [#allocation4], 1
    %4500 = vsyncpa %s4499, 1

</llo_original>
